<compile_context>
chip_gen: v5e
topology: v5e:2x2
jax: 0.10.0
libtpu: 0.0.40
codegen_flags: <defaults>
</compile_context>

<pallas_src>
import jax
import jax.numpy as jnp
from jax.experimental import pallas as pl
from jax.experimental.pallas import tpu as pltpu

K = 5          # conv kernel size
C1 = 16        # conv1 out channels
C2 = 32        # conv2 out channels
H1 = 64        # fc1 hidden size
N_CHUNKS = 4   # fc1 weight streamed over this many T-chunks (grid axis)


def _sinkhole_kernel(taps_ref, ws1_ref, bs1_ref, w2f_ref, b2_ref,
                     w3_ref, b3_ref, w4_ref, b4_ref, out_ref,
                     pp_ref, fcin_ref, acc_ref):
    """Fused conv1+pool -> conv2 -> fc1 -> fc2 forward, fc1 weight streamed.

    taps_ref: (T*B, 6)            row r = t*B + b, col m holds x_pad[b, 2t + m]
    ws1_ref : (6, 2*C1)           [even-stream taps | odd-stream taps]
    bs1_ref : (1, 2*C1)
    w2f_ref : (K*C1, C2)          conv2 im2col weight,  b2_ref: (1, C2)
    w3_ref  : (1, TC*C2, H1) bf16 current fc1 chunk,    b3_ref: (1, H1)
    w4_ref  : (H1, 1)             b4_ref: (1, 1)
    out_ref : (B, 1)
    pp_ref  : VMEM (T+4, B, C1)   zero-haloed pooled conv1 activations
    fcin_ref: VMEM (N_CHUNKS, B, TC*C2)   relayouted fc1 operand, (t,c) col order
    acc_ref : VMEM (B, H1)        fc1 accumulator (f32)
    """
    j = pl.program_id(0)
    nsteps = pl.num_programs(0)
    TB = taps_ref.shape[0]
    B = out_ref.shape[0]
    T = TB // B
    TC = T // N_CHUNKS

    @pl.when(j == 0)
    def _conv_stage():
        # conv1 (even & odd output streams) + bias + relu: ONE MXU matmul
        z = jnp.dot(taps_ref[...], ws1_ref[...],
                    preferred_element_type=jnp.float32)
        z = jnp.maximum(z + bs1_ref[...], 0.0)            # (T*B, 2*C1)
        # MaxPool1d(2) == max of the even / odd conv streams
        pooled = jnp.maximum(z[:, :C1], z[:, C1:])         # (T*B, C1)

        # zero halo (padding=2) for conv2; all slices leading-dim aligned
        pp_ref[0:2] = jnp.zeros((2, B, C1), jnp.float32)
        pp_ref[T + 2:T + 4] = jnp.zeros((2, B, C1), jnp.float32)
        pp_ref[2:T + 2] = pooled.reshape(T, B, C1)

        # conv2: im2col (lane-concat of 5 aligned shifted views) + ONE matmul
        cols = jnp.concatenate(
            [pp_ref[k:k + T].reshape(TB, C1) for k in range(K)], axis=1)
        act = jnp.dot(cols, w2f_ref[...], preferred_element_type=jnp.float32)
        act = jnp.maximum(act + b2_ref[...], 0.0)          # (T*B, C2)

        # relayout (T*B, C2) t-major rows -> (N_CHUNKS, B, TC*C2) fc1 operand,
        # column order (t, c) matching the prepacked fc1 weight chunks
        act3 = act.reshape(T, B, C2)
        for c in range(N_CHUNKS):
            chunk = jnp.concatenate(
                [act3[c * TC + t] for t in range(TC)], axis=1)   # (B, TC*C2)
            fcin_ref[c] = chunk

        acc_ref[...] = jnp.zeros_like(acc_ref)

    # fc1 partial contraction for this weight chunk: bf16 x bf16, f32 accumulate
    acc_ref[...] += jnp.dot(fcin_ref[j].astype(jnp.bfloat16), w3_ref[0],
                            preferred_element_type=jnp.float32)

    @pl.when(j == nsteps - 1)
    def _epilogue():
        out1 = jnp.maximum(acc_ref[...] + b3_ref[...], 0.0)       # (B, H1)
        z2 = jnp.dot(out1, w4_ref[...],
                     preferred_element_type=jnp.float32) + b4_ref[...]
        out_ref[...] = 1.0 / (1.0 + jnp.exp(-z2))                 # sigmoid


def _const_spec(shape):
    n = len(shape)
    return pl.BlockSpec(shape, lambda j, _n=n: (0,) * _n)


def prepare_params(params, n_chunks=N_CHUNKS):
    """One-time conversion of PyTorch-convention parameters to kernel layouts."""
    w1 = jnp.transpose(params["conv1_w"][:, 0, :], (1, 0))        # (K, C1)
    zrow = jnp.zeros((1, C1), jnp.float32)
    ws1 = jnp.concatenate(
        [jnp.concatenate([w1, zrow], axis=0),    # even stream uses taps 0..4
         jnp.concatenate([zrow, w1], axis=0)],   # odd  stream uses taps 1..5
        axis=1)                                                    # (6, 2*C1)
    bs1 = jnp.concatenate([params["conv1_b"], params["conv1_b"]]).reshape(1, 2 * C1)
    # conv2 im2col weight: w2f[k*C1 + c1, c2] = conv2_w[c2, c1, k]
    w2f = jnp.transpose(params["conv2_w"], (2, 1, 0)).reshape(K * C1, C2)
    b2 = params["conv2_b"].reshape(1, C2)
    T = params["fc1_w"].shape[1] // C2
    assert T % n_chunks == 0
    # torch flatten order of (B, C2, T) is (c, t); kernel wants w3[t*C2+c, h],
    # split into n_chunks row-blocks and stored bf16 (halves the dominant DMA).
    w3 = jnp.transpose(params["fc1_w"].reshape(H1, C2, T), (2, 1, 0))   # (T, C2, H1)
    w3 = w3.reshape(n_chunks, (T // n_chunks) * C2, H1).astype(jnp.bfloat16)
    b3 = params["fc1_b"].reshape(1, H1)
    w4 = jnp.transpose(params["fc2_w"], (1, 0))                    # (H1, 1)
    b4 = params["fc2_b"].reshape(1, 1)
    return {"ws1": ws1, "bs1": bs1, "w2f": w2f, "b2": b2,
            "w3": w3, "b3": b3, "w4": w4, "b4": b4}


@jax.jit
def sinkhole_forward(x, kp):
    B, L = x.shape
    T = L // 2
    TC = T // N_CHUNKS

    # tiny per-call prologue (fused by XLA): pad + conv1 im2col, t-major rows
    xp = jnp.pad(x, ((0, 0), (2, 2)))                               # (B, L+4)
    pos = 2 * jnp.arange(T)[:, None] + jnp.arange(K + 1)[None, :]   # (T, 6)
    taps = jnp.transpose(xp[:, pos], (1, 0, 2)).reshape(T * B, K + 1)

    flops = 2 * (T * B * (K + 1) * (2 * C1)     # conv1 (even+odd streams)
                 + T * B * (K * C1) * C2        # conv2 im2col matmul
                 + B * (T * C2) * H1            # fc1
                 + B * H1)                      # fc2
    bytes_accessed = (taps.size * 4 + B * 4
                      + sum(int(v.size) * v.dtype.itemsize for v in kp.values()))
    cost = pl.CostEstimate(flops=int(flops), transcendentals=int(B),
                           bytes_accessed=int(bytes_accessed))

    out = pl.pallas_call(
        _sinkhole_kernel,
        out_shape=jax.ShapeDtypeStruct((B, 1), jnp.float32),
        grid=(N_CHUNKS,),
        in_specs=[_const_spec(taps.shape),
                  _const_spec(kp["ws1"].shape), _const_spec(kp["bs1"].shape),
                  _const_spec(kp["w2f"].shape), _const_spec(kp["b2"].shape),
                  pl.BlockSpec((1, TC * C2, H1), lambda j: (j, 0, 0)),
                  _const_spec(kp["b3"].shape),
                  _const_spec(kp["w4"].shape), _const_spec(kp["b4"].shape)],
        out_specs=_const_spec((B, 1)),
        scratch_shapes=[pltpu.VMEM((T + 4, B, C1), jnp.float32),
                        pltpu.VMEM((N_CHUNKS, B, TC * C2), jnp.float32),
                        pltpu.VMEM((B, H1), jnp.float32)],
        compiler_params=pltpu.CompilerParams(
            dimension_semantics=("arbitrary",)),   # fc1-chunk axis is a reduction
        cost_estimate=cost,
    )(taps, kp["ws1"], kp["bs1"], kp["w2f"], kp["b2"],
      kp["w3"], kp["b3"], kp["w4"], kp["b4"])
    return out


def init_params(key, input_length):
    """Deterministic synthetic parameters with PyTorch-convention shapes."""
    ks = jax.random.split(key, 8)
    T = input_length // 2

    def u(k, shape, fan_in):
        bound = 1.0 / jnp.sqrt(jnp.float32(fan_in))
        return jax.random.uniform(k, shape, jnp.float32, -bound, bound)

    return {
        "conv1_w": u(ks[0], (C1, 1, K), 1 * K),
        "conv1_b": u(ks[1], (C1,), 1 * K),
        "conv2_w": u(ks[2], (C2, C1, K), C1 * K),
        "conv2_b": u(ks[3], (C2,), C1 * K),
        "fc1_w": u(ks[4], (H1, T * C2), T * C2),
        "fc1_b": u(ks[5], (H1,), T * C2),
        "fc2_w": u(ks[6], (1, H1), H1),
        "fc2_b": u(ks[7], (1,), H1),
    }


def torch_reference(x, p):
    """Pure-JAX replica of SinkholeCNN.forward (NCW, PyTorch semantics)."""
    B, L = x.shape
    dn = ("NCH", "OIH", "NCH")
    hp = jax.lax.Precision.HIGHEST
    h = jax.lax.conv_general_dilated(x[:, None, :], p["conv1_w"], (1,), [(2, 2)],
                                     dimension_numbers=dn, precision=hp)
    h = jnp.maximum(h + p["conv1_b"][None, :, None], 0.0)
    h = jnp.max(h.reshape(B, C1, L // 2, 2), axis=-1)               # MaxPool1d(2)
    h = jax.lax.conv_general_dilated(h, p["conv2_w"], (1,), [(2, 2)],
                                     dimension_numbers=dn, precision=hp)
    h = jnp.maximum(h + p["conv2_b"][None, :, None], 0.0)
    f = h.reshape(B, -1)                                            # (c, t) order
    z = jnp.maximum(jnp.dot(f, p["fc1_w"].T, precision=hp) + p["fc1_b"], 0.0)
    return jax.nn.sigmoid(jnp.dot(z, p["fc2_w"].T, precision=hp) + p["fc2_b"])


if __name__ == "__main__":
    INPUT_LENGTH = 128   # module default; drives fc1 input size
    BATCH = 8

    key = jax.random.PRNGKey(0)
    pkey, xkey = jax.random.split(key)
    params = init_params(pkey, INPUT_LENGTH)
    x = jax.random.normal(xkey, (BATCH, INPUT_LENGTH), jnp.float32)

    kparams = prepare_params(params)        # one-time, off the forward path

    out = jax.block_until_ready(sinkhole_forward(x, kparams))
    ref = jax.block_until_ready(torch_reference(x, params))

    assert out.shape == (BATCH, 1), out.shape
    assert bool(jnp.allclose(out, ref, atol=1e-3, rtol=1e-3)), (out, ref)
    print("KERNEL_OK")
</pallas_src>

<mosaic_0001>
module attributes {stable_mosaic.version = 11 : i64} {
  func.func @_sinkhole_kernel(%arg0: i32, %arg1: memref<512x6xf32, #tpu.memory_space<vmem>>, %arg2: memref<6x32xf32, #tpu.memory_space<vmem>>, %arg3: memref<1x32xf32, #tpu.memory_space<vmem>>, %arg4: memref<80x32xf32, #tpu.memory_space<vmem>>, %arg5: memref<1x32xf32, #tpu.memory_space<vmem>>, %arg6: memref<1x512x64xbf16, #tpu.memory_space<vmem>>, %arg7: memref<1x64xf32, #tpu.memory_space<vmem>>, %arg8: memref<64x1xf32, #tpu.memory_space<vmem>>, %arg9: memref<1x1xf32, #tpu.memory_space<vmem>>, %arg10: memref<8x1xf32, #tpu.memory_space<vmem>>, %arg11: memref<68x8x16xf32, #tpu.memory_space<vmem>>, %arg12: memref<4x8x512xf32, #tpu.memory_space<vmem>>, %arg13: memref<8x64xf32, #tpu.memory_space<vmem>>) attributes {dimension_semantics = [#tpu.dimension_semantics<arbitrary>], iteration_bounds = array<i64: 4>, scalar_prefetch = 0 : i64, scratch_operands = 3 : i64, tpu.core_type = #tpu.core_type<tc>, window_params = [{pipeline_mode = #tpu.pipeline_mode<synchronous>, transform_indices = @transform_0, window_bounds = array<i64: 512, 6>}, {pipeline_mode = #tpu.pipeline_mode<synchronous>, transform_indices = @transform_1, window_bounds = array<i64: 6, 32>}, {pipeline_mode = #tpu.pipeline_mode<synchronous>, transform_indices = @transform_2, window_bounds = array<i64: 1, 32>}, {pipeline_mode = #tpu.pipeline_mode<synchronous>, transform_indices = @transform_3, window_bounds = array<i64: 80, 32>}, {pipeline_mode = #tpu.pipeline_mode<synchronous>, transform_indices = @transform_4, window_bounds = array<i64: 1, 32>}, {transform_indices = @transform_5, window_bounds = array<i64: 1, 512, 64>}, {pipeline_mode = #tpu.pipeline_mode<synchronous>, transform_indices = @transform_6, window_bounds = array<i64: 1, 64>}, {pipeline_mode = #tpu.pipeline_mode<synchronous>, transform_indices = @transform_7, window_bounds = array<i64: 64, 1>}, {pipeline_mode = #tpu.pipeline_mode<synchronous>, transform_indices = @transform_8, window_bounds = array<i64: 1, 1>}, {pipeline_mode = #tpu.pipeline_mode<synchronous>, transform_indices = @transform_9, window_bounds = array<i64: 8, 1>}]} {
    %c0_i32 = arith.constant 0 : i32
    %0 = arith.cmpi eq, %arg0, %c0_i32 : i32
    %1 = arith.extui %0 : i1 to i32
    %c0_i32_0 = arith.constant 0 : i32
    %2 = arith.cmpi ne, %1, %c0_i32_0 : i32
    scf.if %2 {
      %c0_10 = arith.constant 0 : index
      %c0_11 = arith.constant 0 : index
      %16 = vector.load %arg1[%c0_10, %c0_11] : memref<512x6xf32, #tpu.memory_space<vmem>>, vector<512x6xf32>
      %c0_12 = arith.constant 0 : index
      %c0_13 = arith.constant 0 : index
      %17 = vector.load %arg2[%c0_12, %c0_13] : memref<6x32xf32, #tpu.memory_space<vmem>>, vector<6x32xf32>
      %cst_14 = arith.constant dense<0.000000e+00> : vector<512x32xf32>
      %18 = tpu.matmul %16, %17, %cst_14 {dimension_numbers = #tpu.dot_dimension_numbers<[1], [0], [0], [1], [0, 0, 1, 1], [], []>} : vector<512x6xf32>, vector<6x32xf32>, vector<512x32xf32> -> vector<512x32xf32>
      %c0_15 = arith.constant 0 : index
      %c0_16 = arith.constant 0 : index
      %19 = vector.load %arg3[%c0_15, %c0_16] : memref<1x32xf32, #tpu.memory_space<vmem>>, vector<1x32xf32>
      %20 = vector.broadcast %19 : vector<1x32xf32> to vector<512x32xf32>
      %21 = arith.addf %18, %20 : vector<512x32xf32>
      %cst_17 = arith.constant 0.000000e+00 : f32
      %22 = vector.broadcast %cst_17 : f32 to vector<512x32xf32>
      %23 = arith.maximumf %21, %22 : vector<512x32xf32>
      %24 = vector.extract_strided_slice %23 {offsets = [0, 0], sizes = [512, 16], strides = [1, 1]} : vector<512x32xf32> to vector<512x16xf32>
      %25 = vector.extract_strided_slice %23 {offsets = [0, 16], sizes = [512, 16], strides = [1, 1]} : vector<512x32xf32> to vector<512x16xf32>
      %26 = arith.maximumf %24, %25 : vector<512x16xf32>
      %cst_18 = arith.constant 0.000000e+00 : f32
      %27 = vector.broadcast %cst_18 : f32 to vector<2x8x16xf32>
      %c0_19 = arith.constant 0 : index
      %c0_20 = arith.constant 0 : index
      %c0_21 = arith.constant 0 : index
      %28 = vector.load %arg11[%c0_19, %c0_20, %c0_21] : memref<68x8x16xf32, #tpu.memory_space<vmem>>, vector<2x8x16xf32>
      tpu.vector_store %arg11[%c0_19, %c0_20, %c0_21], %27 {strides = array<i32>} : memref<68x8x16xf32, #tpu.memory_space<vmem>>, vector<2x8x16xf32>,
      %cst_22 = arith.constant 0.000000e+00 : f32
      %29 = vector.broadcast %cst_22 : f32 to vector<2x8x16xf32>
      %c66 = arith.constant 66 : index
      %c0_23 = arith.constant 0 : index
      %c0_24 = arith.constant 0 : index
      %30 = vector.load %arg11[%c66, %c0_23, %c0_24] : memref<68x8x16xf32, #tpu.memory_space<vmem>>, vector<2x8x16xf32>
      tpu.vector_store %arg11[%c66, %c0_23, %c0_24], %29 {strides = array<i32>} : memref<68x8x16xf32, #tpu.memory_space<vmem>>, vector<2x8x16xf32>,
      %31 = vector.shape_cast %26 : vector<512x16xf32> to vector<64x8x16xf32>
      %c2 = arith.constant 2 : index
      %c0_25 = arith.constant 0 : index
      %c0_26 = arith.constant 0 : index
      %32 = vector.load %arg11[%c2, %c0_25, %c0_26] : memref<68x8x16xf32, #tpu.memory_space<vmem>>, vector<64x8x16xf32>
      tpu.vector_store %arg11[%c2, %c0_25, %c0_26], %31 {strides = array<i32>} : memref<68x8x16xf32, #tpu.memory_space<vmem>>, vector<64x8x16xf32>,
      %c0_27 = arith.constant 0 : index
      %c0_28 = arith.constant 0 : index
      %c0_29 = arith.constant 0 : index
      %33 = vector.load %arg11[%c0_27, %c0_28, %c0_29] : memref<68x8x16xf32, #tpu.memory_space<vmem>>, vector<64x8x16xf32>
      %34 = vector.shape_cast %33 : vector<64x8x16xf32> to vector<512x16xf32>
      %c1 = arith.constant 1 : index
      %c0_30 = arith.constant 0 : index
      %c0_31 = arith.constant 0 : index
      %35 = vector.load %arg11[%c1, %c0_30, %c0_31] : memref<68x8x16xf32, #tpu.memory_space<vmem>>, vector<64x8x16xf32>
      %36 = vector.shape_cast %35 : vector<64x8x16xf32> to vector<512x16xf32>
      %c2_32 = arith.constant 2 : index
      %c0_33 = arith.constant 0 : index
      %c0_34 = arith.constant 0 : index
      %37 = vector.load %arg11[%c2_32, %c0_33, %c0_34] : memref<68x8x16xf32, #tpu.memory_space<vmem>>, vector<64x8x16xf32>
      %38 = vector.shape_cast %37 : vector<64x8x16xf32> to vector<512x16xf32>
      %c3 = arith.constant 3 : index
      %c0_35 = arith.constant 0 : index
      %c0_36 = arith.constant 0 : index
      %39 = vector.load %arg11[%c3, %c0_35, %c0_36] : memref<68x8x16xf32, #tpu.memory_space<vmem>>, vector<64x8x16xf32>
      %40 = vector.shape_cast %39 : vector<64x8x16xf32> to vector<512x16xf32>
      %c4 = arith.constant 4 : index
      %c0_37 = arith.constant 0 : index
      %c0_38 = arith.constant 0 : index
      %41 = vector.load %arg11[%c4, %c0_37, %c0_38] : memref<68x8x16xf32, #tpu.memory_space<vmem>>, vector<64x8x16xf32>
      %42 = vector.shape_cast %41 : vector<64x8x16xf32> to vector<512x16xf32>
      %43 = tpu.concatenate %34, %36, %38, %40, %42 in 1 : vector<512x16xf32>, vector<512x16xf32>, vector<512x16xf32>, vector<512x16xf32>, vector<512x16xf32> -> vector<512x80xf32>
      %c0_39 = arith.constant 0 : index
      %c0_40 = arith.constant 0 : index
      %44 = vector.load %arg4[%c0_39, %c0_40] : memref<80x32xf32, #tpu.memory_space<vmem>>, vector<80x32xf32>
      %cst_41 = arith.constant dense<0.000000e+00> : vector<512x32xf32>
      %45 = tpu.matmul %43, %44, %cst_41 {dimension_numbers = #tpu.dot_dimension_numbers<[1], [0], [0], [1], [0, 0, 1, 1], [], []>} : vector<512x80xf32>, vector<80x32xf32>, vector<512x32xf32> -> vector<512x32xf32>
      %c0_42 = arith.constant 0 : index
      %c0_43 = arith.constant 0 : index
      %46 = vector.load %arg5[%c0_42, %c0_43] : memref<1x32xf32, #tpu.memory_space<vmem>>, vector<1x32xf32>
      %47 = vector.broadcast %46 : vector<1x32xf32> to vector<512x32xf32>
      %48 = arith.addf %45, %47 : vector<512x32xf32>
      %cst_44 = arith.constant 0.000000e+00 : f32
      %49 = vector.broadcast %cst_44 : f32 to vector<512x32xf32>
      %50 = arith.maximumf %48, %49 : vector<512x32xf32>
      %51 = vector.shape_cast %50 : vector<512x32xf32> to vector<64x8x32xf32>
      %52 = vector.extract_strided_slice %51 {offsets = [0, 0, 0], sizes = [1, 8, 32], strides = [1, 1, 1]} : vector<64x8x32xf32> to vector<1x8x32xf32>
      %53 = vector.shape_cast %52 : vector<1x8x32xf32> to vector<8x32xf32>
      %54 = vector.extract_strided_slice %51 {offsets = [1, 0, 0], sizes = [1, 8, 32], strides = [1, 1, 1]} : vector<64x8x32xf32> to vector<1x8x32xf32>
      %55 = vector.shape_cast %54 : vector<1x8x32xf32> to vector<8x32xf32>
      %56 = vector.extract_strided_slice %51 {offsets = [2, 0, 0], sizes = [1, 8, 32], strides = [1, 1, 1]} : vector<64x8x32xf32> to vector<1x8x32xf32>
      %57 = vector.shape_cast %56 : vector<1x8x32xf32> to vector<8x32xf32>
      %58 = vector.extract_strided_slice %51 {offsets = [3, 0, 0], sizes = [1, 8, 32], strides = [1, 1, 1]} : vector<64x8x32xf32> to vector<1x8x32xf32>
      %59 = vector.shape_cast %58 : vector<1x8x32xf32> to vector<8x32xf32>
      %60 = vector.extract_strided_slice %51 {offsets = [4, 0, 0], sizes = [1, 8, 32], strides = [1, 1, 1]} : vector<64x8x32xf32> to vector<1x8x32xf32>
      %61 = vector.shape_cast %60 : vector<1x8x32xf32> to vector<8x32xf32>
      %62 = vector.extract_strided_slice %51 {offsets = [5, 0, 0], sizes = [1, 8, 32], strides = [1, 1, 1]} : vector<64x8x32xf32> to vector<1x8x32xf32>
      %63 = vector.shape_cast %62 : vector<1x8x32xf32> to vector<8x32xf32>
      %64 = vector.extract_strided_slice %51 {offsets = [6, 0, 0], sizes = [1, 8, 32], strides = [1, 1, 1]} : vector<64x8x32xf32> to vector<1x8x32xf32>
      %65 = vector.shape_cast %64 : vector<1x8x32xf32> to vector<8x32xf32>
      %66 = vector.extract_strided_slice %51 {offsets = [7, 0, 0], sizes = [1, 8, 32], strides = [1, 1, 1]} : vector<64x8x32xf32> to vector<1x8x32xf32>
      %67 = vector.shape_cast %66 : vector<1x8x32xf32> to vector<8x32xf32>
      %68 = vector.extract_strided_slice %51 {offsets = [8, 0, 0], sizes = [1, 8, 32], strides = [1, 1, 1]} : vector<64x8x32xf32> to vector<1x8x32xf32>
      %69 = vector.shape_cast %68 : vector<1x8x32xf32> to vector<8x32xf32>
      %70 = vector.extract_strided_slice %51 {offsets = [9, 0, 0], sizes = [1, 8, 32], strides = [1, 1, 1]} : vector<64x8x32xf32> to vector<1x8x32xf32>
      %71 = vector.shape_cast %70 : vector<1x8x32xf32> to vector<8x32xf32>
      %72 = vector.extract_strided_slice %51 {offsets = [10, 0, 0], sizes = [1, 8, 32], strides = [1, 1, 1]} : vector<64x8x32xf32> to vector<1x8x32xf32>
      %73 = vector.shape_cast %72 : vector<1x8x32xf32> to vector<8x32xf32>
      %74 = vector.extract_strided_slice %51 {offsets = [11, 0, 0], sizes = [1, 8, 32], strides = [1, 1, 1]} : vector<64x8x32xf32> to vector<1x8x32xf32>
      %75 = vector.shape_cast %74 : vector<1x8x32xf32> to vector<8x32xf32>
      %76 = vector.extract_strided_slice %51 {offsets = [12, 0, 0], sizes = [1, 8, 32], strides = [1, 1, 1]} : vector<64x8x32xf32> to vector<1x8x32xf32>
      %77 = vector.shape_cast %76 : vector<1x8x32xf32> to vector<8x32xf32>
      %78 = vector.extract_strided_slice %51 {offsets = [13, 0, 0], sizes = [1, 8, 32], strides = [1, 1, 1]} : vector<64x8x32xf32> to vector<1x8x32xf32>
      %79 = vector.shape_cast %78 : vector<1x8x32xf32> to vector<8x32xf32>
      %80 = vector.extract_strided_slice %51 {offsets = [14, 0, 0], sizes = [1, 8, 32], strides = [1, 1, 1]} : vector<64x8x32xf32> to vector<1x8x32xf32>
      %81 = vector.shape_cast %80 : vector<1x8x32xf32> to vector<8x32xf32>
      %82 = vector.extract_strided_slice %51 {offsets = [15, 0, 0], sizes = [1, 8, 32], strides = [1, 1, 1]} : vector<64x8x32xf32> to vector<1x8x32xf32>
      %83 = vector.shape_cast %82 : vector<1x8x32xf32> to vector<8x32xf32>
      %84 = tpu.concatenate %53, %55, %57, %59, %61, %63, %65, %67, %69, %71, %73, %75, %77, %79, %81, %83 in 1 : vector<8x32xf32>, vector<8x32xf32>, vector<8x32xf32>, vector<8x32xf32>, vector<8x32xf32>, vector<8x32xf32>, vector<8x32xf32>, vector<8x32xf32>, vector<8x32xf32>, vector<8x32xf32>, vector<8x32xf32>, vector<8x32xf32>, vector<8x32xf32>, vector<8x32xf32>, vector<8x32xf32>, vector<8x32xf32> -> vector<8x512xf32>
      %c0_45 = arith.constant 0 : index
      %c0_46 = arith.constant 0 : index
      %c0_47 = arith.constant 0 : index
      %85 = vector.load %arg12[%c0_45, %c0_46, %c0_47] : memref<4x8x512xf32, #tpu.memory_space<vmem>>, vector<1x8x512xf32>
      %86 = vector.shape_cast %85 : vector<1x8x512xf32> to vector<8x512xf32>
      %87 = vector.shape_cast %84 : vector<8x512xf32> to vector<1x8x512xf32>
      tpu.vector_store %arg12[%c0_45, %c0_46, %c0_47], %87 {strides = array<i32>} : memref<4x8x512xf32, #tpu.memory_space<vmem>>, vector<1x8x512xf32>,
      %88 = vector.extract_strided_slice %51 {offsets = [16, 0, 0], sizes = [1, 8, 32], strides = [1, 1, 1]} : vector<64x8x32xf32> to vector<1x8x32xf32>
      %89 = vector.shape_cast %88 : vector<1x8x32xf32> to vector<8x32xf32>
      %90 = vector.extract_strided_slice %51 {offsets = [17, 0, 0], sizes = [1, 8, 32], strides = [1, 1, 1]} : vector<64x8x32xf32> to vector<1x8x32xf32>
      %91 = vector.shape_cast %90 : vector<1x8x32xf32> to vector<8x32xf32>
      %92 = vector.extract_strided_slice %51 {offsets = [18, 0, 0], sizes = [1, 8, 32], strides = [1, 1, 1]} : vector<64x8x32xf32> to vector<1x8x32xf32>
      %93 = vector.shape_cast %92 : vector<1x8x32xf32> to vector<8x32xf32>
      %94 = vector.extract_strided_slice %51 {offsets = [19, 0, 0], sizes = [1, 8, 32], strides = [1, 1, 1]} : vector<64x8x32xf32> to vector<1x8x32xf32>
      %95 = vector.shape_cast %94 : vector<1x8x32xf32> to vector<8x32xf32>
      %96 = vector.extract_strided_slice %51 {offsets = [20, 0, 0], sizes = [1, 8, 32], strides = [1, 1, 1]} : vector<64x8x32xf32> to vector<1x8x32xf32>
      %97 = vector.shape_cast %96 : vector<1x8x32xf32> to vector<8x32xf32>
      %98 = vector.extract_strided_slice %51 {offsets = [21, 0, 0], sizes = [1, 8, 32], strides = [1, 1, 1]} : vector<64x8x32xf32> to vector<1x8x32xf32>
      %99 = vector.shape_cast %98 : vector<1x8x32xf32> to vector<8x32xf32>
      %100 = vector.extract_strided_slice %51 {offsets = [22, 0, 0], sizes = [1, 8, 32], strides = [1, 1, 1]} : vector<64x8x32xf32> to vector<1x8x32xf32>
      %101 = vector.shape_cast %100 : vector<1x8x32xf32> to vector<8x32xf32>
      %102 = vector.extract_strided_slice %51 {offsets = [23, 0, 0], sizes = [1, 8, 32], strides = [1, 1, 1]} : vector<64x8x32xf32> to vector<1x8x32xf32>
      %103 = vector.shape_cast %102 : vector<1x8x32xf32> to vector<8x32xf32>
      %104 = vector.extract_strided_slice %51 {offsets = [24, 0, 0], sizes = [1, 8, 32], strides = [1, 1, 1]} : vector<64x8x32xf32> to vector<1x8x32xf32>
      %105 = vector.shape_cast %104 : vector<1x8x32xf32> to vector<8x32xf32>
      %106 = vector.extract_strided_slice %51 {offsets = [25, 0, 0], sizes = [1, 8, 32], strides = [1, 1, 1]} : vector<64x8x32xf32> to vector<1x8x32xf32>
      %107 = vector.shape_cast %106 : vector<1x8x32xf32> to vector<8x32xf32>
      %108 = vector.extract_strided_slice %51 {offsets = [26, 0, 0], sizes = [1, 8, 32], strides = [1, 1, 1]} : vector<64x8x32xf32> to vector<1x8x32xf32>
      %109 = vector.shape_cast %108 : vector<1x8x32xf32> to vector<8x32xf32>
      %110 = vector.extract_strided_slice %51 {offsets = [27, 0, 0], sizes = [1, 8, 32], strides = [1, 1, 1]} : vector<64x8x32xf32> to vector<1x8x32xf32>
      %111 = vector.shape_cast %110 : vector<1x8x32xf32> to vector<8x32xf32>
      %112 = vector.extract_strided_slice %51 {offsets = [28, 0, 0], sizes = [1, 8, 32], strides = [1, 1, 1]} : vector<64x8x32xf32> to vector<1x8x32xf32>
      %113 = vector.shape_cast %112 : vector<1x8x32xf32> to vector<8x32xf32>
      %114 = vector.extract_strided_slice %51 {offsets = [29, 0, 0], sizes = [1, 8, 32], strides = [1, 1, 1]} : vector<64x8x32xf32> to vector<1x8x32xf32>
      %115 = vector.shape_cast %114 : vector<1x8x32xf32> to vector<8x32xf32>
      %116 = vector.extract_strided_slice %51 {offsets = [30, 0, 0], sizes = [1, 8, 32], strides = [1, 1, 1]} : vector<64x8x32xf32> to vector<1x8x32xf32>
      %117 = vector.shape_cast %116 : vector<1x8x32xf32> to vector<8x32xf32>
      %118 = vector.extract_strided_slice %51 {offsets = [31, 0, 0], sizes = [1, 8, 32], strides = [1, 1, 1]} : vector<64x8x32xf32> to vector<1x8x32xf32>
      %119 = vector.shape_cast %118 : vector<1x8x32xf32> to vector<8x32xf32>
      %120 = tpu.concatenate %89, %91, %93, %95, %97, %99, %101, %103, %105, %107, %109, %111, %113, %115, %117, %119 in 1 : vector<8x32xf32>, vector<8x32xf32>, vector<8x32xf32>, vector<8x32xf32>, vector<8x32xf32>, vector<8x32xf32>, vector<8x32xf32>, vector<8x32xf32>, vector<8x32xf32>, vector<8x32xf32>, vector<8x32xf32>, vector<8x32xf32>, vector<8x32xf32>, vector<8x32xf32>, vector<8x32xf32>, vector<8x32xf32> -> vector<8x512xf32>
      %c1_48 = arith.constant 1 : index
      %c0_49 = arith.constant 0 : index
      %c0_50 = arith.constant 0 : index
      %121 = vector.load %arg12[%c1_48, %c0_49, %c0_50] : memref<4x8x512xf32, #tpu.memory_space<vmem>>, vector<1x8x512xf32>
      %122 = vector.shape_cast %121 : vector<1x8x512xf32> to vector<8x512xf32>
      %123 = vector.shape_cast %120 : vector<8x512xf32> to vector<1x8x512xf32>
      tpu.vector_store %arg12[%c1_48, %c0_49, %c0_50], %123 {strides = array<i32>} : memref<4x8x512xf32, #tpu.memory_space<vmem>>, vector<1x8x512xf32>,
      %124 = vector.extract_strided_slice %51 {offsets = [32, 0, 0], sizes = [1, 8, 32], strides = [1, 1, 1]} : vector<64x8x32xf32> to vector<1x8x32xf32>
      %125 = vector.shape_cast %124 : vector<1x8x32xf32> to vector<8x32xf32>
      %126 = vector.extract_strided_slice %51 {offsets = [33, 0, 0], sizes = [1, 8, 32], strides = [1, 1, 1]} : vector<64x8x32xf32> to vector<1x8x32xf32>
      %127 = vector.shape_cast %126 : vector<1x8x32xf32> to vector<8x32xf32>
      %128 = vector.extract_strided_slice %51 {offsets = [34, 0, 0], sizes = [1, 8, 32], strides = [1, 1, 1]} : vector<64x8x32xf32> to vector<1x8x32xf32>
      %129 = vector.shape_cast %128 : vector<1x8x32xf32> to vector<8x32xf32>
      %130 = vector.extract_strided_slice %51 {offsets = [35, 0, 0], sizes = [1, 8, 32], strides = [1, 1, 1]} : vector<64x8x32xf32> to vector<1x8x32xf32>
      %131 = vector.shape_cast %130 : vector<1x8x32xf32> to vector<8x32xf32>
      %132 = vector.extract_strided_slice %51 {offsets = [36, 0, 0], sizes = [1, 8, 32], strides = [1, 1, 1]} : vector<64x8x32xf32> to vector<1x8x32xf32>
      %133 = vector.shape_cast %132 : vector<1x8x32xf32> to vector<8x32xf32>
      %134 = vector.extract_strided_slice %51 {offsets = [37, 0, 0], sizes = [1, 8, 32], strides = [1, 1, 1]} : vector<64x8x32xf32> to vector<1x8x32xf32>
      %135 = vector.shape_cast %134 : vector<1x8x32xf32> to vector<8x32xf32>
      %136 = vector.extract_strided_slice %51 {offsets = [38, 0, 0], sizes = [1, 8, 32], strides = [1, 1, 1]} : vector<64x8x32xf32> to vector<1x8x32xf32>
      %137 = vector.shape_cast %136 : vector<1x8x32xf32> to vector<8x32xf32>
      %138 = vector.extract_strided_slice %51 {offsets = [39, 0, 0], sizes = [1, 8, 32], strides = [1, 1, 1]} : vector<64x8x32xf32> to vector<1x8x32xf32>
      %139 = vector.shape_cast %138 : vector<1x8x32xf32> to vector<8x32xf32>
      %140 = vector.extract_strided_slice %51 {offsets = [40, 0, 0], sizes = [1, 8, 32], strides = [1, 1, 1]} : vector<64x8x32xf32> to vector<1x8x32xf32>
      %141 = vector.shape_cast %140 : vector<1x8x32xf32> to vector<8x32xf32>
      %142 = vector.extract_strided_slice %51 {offsets = [41, 0, 0], sizes = [1, 8, 32], strides = [1, 1, 1]} : vector<64x8x32xf32> to vector<1x8x32xf32>
      %143 = vector.shape_cast %142 : vector<1x8x32xf32> to vector<8x32xf32>
      %144 = vector.extract_strided_slice %51 {offsets = [42, 0, 0], sizes = [1, 8, 32], strides = [1, 1, 1]} : vector<64x8x32xf32> to vector<1x8x32xf32>
      %145 = vector.shape_cast %144 : vector<1x8x32xf32> to vector<8x32xf32>
      %146 = vector.extract_strided_slice %51 {offsets = [43, 0, 0], sizes = [1, 8, 32], strides = [1, 1, 1]} : vector<64x8x32xf32> to vector<1x8x32xf32>
      %147 = vector.shape_cast %146 : vector<1x8x32xf32> to vector<8x32xf32>
      %148 = vector.extract_strided_slice %51 {offsets = [44, 0, 0], sizes = [1, 8, 32], strides = [1, 1, 1]} : vector<64x8x32xf32> to vector<1x8x32xf32>
      %149 = vector.shape_cast %148 : vector<1x8x32xf32> to vector<8x32xf32>
      %150 = vector.extract_strided_slice %51 {offsets = [45, 0, 0], sizes = [1, 8, 32], strides = [1, 1, 1]} : vector<64x8x32xf32> to vector<1x8x32xf32>
      %151 = vector.shape_cast %150 : vector<1x8x32xf32> to vector<8x32xf32>
      %152 = vector.extract_strided_slice %51 {offsets = [46, 0, 0], sizes = [1, 8, 32], strides = [1, 1, 1]} : vector<64x8x32xf32> to vector<1x8x32xf32>
      %153 = vector.shape_cast %152 : vector<1x8x32xf32> to vector<8x32xf32>
      %154 = vector.extract_strided_slice %51 {offsets = [47, 0, 0], sizes = [1, 8, 32], strides = [1, 1, 1]} : vector<64x8x32xf32> to vector<1x8x32xf32>
      %155 = vector.shape_cast %154 : vector<1x8x32xf32> to vector<8x32xf32>
      %156 = tpu.concatenate %125, %127, %129, %131, %133, %135, %137, %139, %141, %143, %145, %147, %149, %151, %153, %155 in 1 : vector<8x32xf32>, vector<8x32xf32>, vector<8x32xf32>, vector<8x32xf32>, vector<8x32xf32>, vector<8x32xf32>, vector<8x32xf32>, vector<8x32xf32>, vector<8x32xf32>, vector<8x32xf32>, vector<8x32xf32>, vector<8x32xf32>, vector<8x32xf32>, vector<8x32xf32>, vector<8x32xf32>, vector<8x32xf32> -> vector<8x512xf32>
      %c2_51 = arith.constant 2 : index
      %c0_52 = arith.constant 0 : index
      %c0_53 = arith.constant 0 : index
      %157 = vector.load %arg12[%c2_51, %c0_52, %c0_53] : memref<4x8x512xf32, #tpu.memory_space<vmem>>, vector<1x8x512xf32>
      %158 = vector.shape_cast %157 : vector<1x8x512xf32> to vector<8x512xf32>
      %159 = vector.shape_cast %156 : vector<8x512xf32> to vector<1x8x512xf32>
      tpu.vector_store %arg12[%c2_51, %c0_52, %c0_53], %159 {strides = array<i32>} : memref<4x8x512xf32, #tpu.memory_space<vmem>>, vector<1x8x512xf32>,
      %160 = vector.extract_strided_slice %51 {offsets = [48, 0, 0], sizes = [1, 8, 32], strides = [1, 1, 1]} : vector<64x8x32xf32> to vector<1x8x32xf32>
      %161 = vector.shape_cast %160 : vector<1x8x32xf32> to vector<8x32xf32>
      %162 = vector.extract_strided_slice %51 {offsets = [49, 0, 0], sizes = [1, 8, 32], strides = [1, 1, 1]} : vector<64x8x32xf32> to vector<1x8x32xf32>
      %163 = vector.shape_cast %162 : vector<1x8x32xf32> to vector<8x32xf32>
      %164 = vector.extract_strided_slice %51 {offsets = [50, 0, 0], sizes = [1, 8, 32], strides = [1, 1, 1]} : vector<64x8x32xf32> to vector<1x8x32xf32>
      %165 = vector.shape_cast %164 : vector<1x8x32xf32> to vector<8x32xf32>
      %166 = vector.extract_strided_slice %51 {offsets = [51, 0, 0], sizes = [1, 8, 32], strides = [1, 1, 1]} : vector<64x8x32xf32> to vector<1x8x32xf32>
      %167 = vector.shape_cast %166 : vector<1x8x32xf32> to vector<8x32xf32>
      %168 = vector.extract_strided_slice %51 {offsets = [52, 0, 0], sizes = [1, 8, 32], strides = [1, 1, 1]} : vector<64x8x32xf32> to vector<1x8x32xf32>
      %169 = vector.shape_cast %168 : vector<1x8x32xf32> to vector<8x32xf32>
      %170 = vector.extract_strided_slice %51 {offsets = [53, 0, 0], sizes = [1, 8, 32], strides = [1, 1, 1]} : vector<64x8x32xf32> to vector<1x8x32xf32>
      %171 = vector.shape_cast %170 : vector<1x8x32xf32> to vector<8x32xf32>
      %172 = vector.extract_strided_slice %51 {offsets = [54, 0, 0], sizes = [1, 8, 32], strides = [1, 1, 1]} : vector<64x8x32xf32> to vector<1x8x32xf32>
      %173 = vector.shape_cast %172 : vector<1x8x32xf32> to vector<8x32xf32>
      %174 = vector.extract_strided_slice %51 {offsets = [55, 0, 0], sizes = [1, 8, 32], strides = [1, 1, 1]} : vector<64x8x32xf32> to vector<1x8x32xf32>
      %175 = vector.shape_cast %174 : vector<1x8x32xf32> to vector<8x32xf32>
      %176 = vector.extract_strided_slice %51 {offsets = [56, 0, 0], sizes = [1, 8, 32], strides = [1, 1, 1]} : vector<64x8x32xf32> to vector<1x8x32xf32>
      %177 = vector.shape_cast %176 : vector<1x8x32xf32> to vector<8x32xf32>
      %178 = vector.extract_strided_slice %51 {offsets = [57, 0, 0], sizes = [1, 8, 32], strides = [1, 1, 1]} : vector<64x8x32xf32> to vector<1x8x32xf32>
      %179 = vector.shape_cast %178 : vector<1x8x32xf32> to vector<8x32xf32>
      %180 = vector.extract_strided_slice %51 {offsets = [58, 0, 0], sizes = [1, 8, 32], strides = [1, 1, 1]} : vector<64x8x32xf32> to vector<1x8x32xf32>
      %181 = vector.shape_cast %180 : vector<1x8x32xf32> to vector<8x32xf32>
      %182 = vector.extract_strided_slice %51 {offsets = [59, 0, 0], sizes = [1, 8, 32], strides = [1, 1, 1]} : vector<64x8x32xf32> to vector<1x8x32xf32>
      %183 = vector.shape_cast %182 : vector<1x8x32xf32> to vector<8x32xf32>
      %184 = vector.extract_strided_slice %51 {offsets = [60, 0, 0], sizes = [1, 8, 32], strides = [1, 1, 1]} : vector<64x8x32xf32> to vector<1x8x32xf32>
      %185 = vector.shape_cast %184 : vector<1x8x32xf32> to vector<8x32xf32>
      %186 = vector.extract_strided_slice %51 {offsets = [61, 0, 0], sizes = [1, 8, 32], strides = [1, 1, 1]} : vector<64x8x32xf32> to vector<1x8x32xf32>
      %187 = vector.shape_cast %186 : vector<1x8x32xf32> to vector<8x32xf32>
      %188 = vector.extract_strided_slice %51 {offsets = [62, 0, 0], sizes = [1, 8, 32], strides = [1, 1, 1]} : vector<64x8x32xf32> to vector<1x8x32xf32>
      %189 = vector.shape_cast %188 : vector<1x8x32xf32> to vector<8x32xf32>
      %190 = vector.extract_strided_slice %51 {offsets = [63, 0, 0], sizes = [1, 8, 32], strides = [1, 1, 1]} : vector<64x8x32xf32> to vector<1x8x32xf32>
      %191 = vector.shape_cast %190 : vector<1x8x32xf32> to vector<8x32xf32>
      %192 = tpu.concatenate %161, %163, %165, %167, %169, %171, %173, %175, %177, %179, %181, %183, %185, %187, %189, %191 in 1 : vector<8x32xf32>, vector<8x32xf32>, vector<8x32xf32>, vector<8x32xf32>, vector<8x32xf32>, vector<8x32xf32>, vector<8x32xf32>, vector<8x32xf32>, vector<8x32xf32>, vector<8x32xf32>, vector<8x32xf32>, vector<8x32xf32>, vector<8x32xf32>, vector<8x32xf32>, vector<8x32xf32>, vector<8x32xf32> -> vector<8x512xf32>
      %c3_54 = arith.constant 3 : index
      %c0_55 = arith.constant 0 : index
      %c0_56 = arith.constant 0 : index
      %193 = vector.load %arg12[%c3_54, %c0_55, %c0_56] : memref<4x8x512xf32, #tpu.memory_space<vmem>>, vector<1x8x512xf32>
      %194 = vector.shape_cast %193 : vector<1x8x512xf32> to vector<8x512xf32>
      %195 = vector.shape_cast %192 : vector<8x512xf32> to vector<1x8x512xf32>
      tpu.vector_store %arg12[%c3_54, %c0_55, %c0_56], %195 {strides = array<i32>} : memref<4x8x512xf32, #tpu.memory_space<vmem>>, vector<1x8x512xf32>,
      %cst_57 = arith.constant 0.000000e+00 : f32
      %196 = vector.broadcast %cst_57 : f32 to vector<8x64xf32>
      %c0_58 = arith.constant 0 : index
      %c0_59 = arith.constant 0 : index
      %197 = vector.load %arg13[%c0_58, %c0_59] : memref<8x64xf32, #tpu.memory_space<vmem>>, vector<8x64xf32>
      tpu.vector_store %arg13[%c0_58, %c0_59], %196 {strides = array<i32>} : memref<8x64xf32, #tpu.memory_space<vmem>>, vector<8x64xf32>,
    } else {
    }
    %c0 = arith.constant 0 : index
    %c0_1 = arith.constant 0 : index
    %3 = vector.load %arg13[%c0, %c0_1] : memref<8x64xf32, #tpu.memory_space<vmem>>, vector<8x64xf32>
    %4 = arith.index_cast %arg0 : i32 to index
    %c0_2 = arith.constant 0 : index
    %c0_3 = arith.constant 0 : index
    %5 = vector.load %arg12[%4, %c0_2, %c0_3] : memref<4x8x512xf32, #tpu.memory_space<vmem>>, vector<1x8x512xf32>
    %6 = vector.shape_cast %5 : vector<1x8x512xf32> to vector<8x512xf32>
    %7 = arith.truncf %6 : vector<8x512xf32> to vector<8x512xbf16>
    %c0_4 = arith.constant 0 : index
    %c0_5 = arith.constant 0 : index
    %c0_6 = arith.constant 0 : index
    %8 = vector.load %arg6[%c0_4, %c0_5, %c0_6] : memref<1x512x64xbf16, #tpu.memory_space<vmem>>, vector<1x512x64xbf16>
    %9 = vector.shape_cast %8 : vector<1x512x64xbf16> to vector<512x64xbf16>
    %cst = arith.constant dense<0.000000e+00> : vector<8x64xf32>
    %10 = tpu.matmul %7, %9, %cst {dimension_numbers = #tpu.dot_dimension_numbers<[1], [0], [0], [1], [0, 0, 1, 1], [], []>} : vector<8x512xbf16>, vector<512x64xbf16>, vector<8x64xf32> -> vector<8x64xf32>
    %11 = arith.addf %3, %10 : vector<8x64xf32>
    %c0_7 = arith.constant 0 : index
    %c0_8 = arith.constant 0 : index
    %12 = vector.load %arg13[%c0_7, %c0_8] : memref<8x64xf32, #tpu.memory_space<vmem>>, vector<8x64xf32>
    tpu.vector_store %arg13[%c0_7, %c0_8], %11 {strides = array<i32>} : memref<8x64xf32, #tpu.memory_space<vmem>>, vector<8x64xf32>,
    %c3_i32 = arith.constant 3 : i32
    %13 = arith.cmpi eq, %arg0, %c3_i32 : i32
    %14 = arith.extui %13 : i1 to i32
    %c0_i32_9 = arith.constant 0 : i32
    %15 = arith.cmpi ne, %14, %c0_i32_9 : i32
    scf.if %15 {
      %c0_10 = arith.constant 0 : index
      %c0_11 = arith.constant 0 : index
      %16 = vector.load %arg13[%c0_10, %c0_11] : memref<8x64xf32, #tpu.memory_space<vmem>>, vector<8x64xf32>
      %c0_12 = arith.constant 0 : index
      %c0_13 = arith.constant 0 : index
      %17 = vector.load %arg7[%c0_12, %c0_13] : memref<1x64xf32, #tpu.memory_space<vmem>>, vector<1x64xf32>
      %18 = vector.broadcast %17 : vector<1x64xf32> to vector<8x64xf32>
      %19 = arith.addf %16, %18 : vector<8x64xf32>
      %cst_14 = arith.constant 0.000000e+00 : f32
      %20 = vector.broadcast %cst_14 : f32 to vector<8x64xf32>
      %21 = arith.maximumf %19, %20 : vector<8x64xf32>
      %c0_15 = arith.constant 0 : index
      %c0_16 = arith.constant 0 : index
      %22 = vector.load %arg8[%c0_15, %c0_16] : memref<64x1xf32, #tpu.memory_space<vmem>>, vector<64x1xf32>
      %cst_17 = arith.constant dense<0.000000e+00> : vector<8x1xf32>
      %23 = tpu.matmul %21, %22, %cst_17 {dimension_numbers = #tpu.dot_dimension_numbers<[1], [0], [0], [1], [0, 0, 1, 1], [], []>} : vector<8x64xf32>, vector<64x1xf32>, vector<8x1xf32> -> vector<8x1xf32>
      %c0_18 = arith.constant 0 : index
      %c0_19 = arith.constant 0 : index
      %24 = vector.load %arg9[%c0_18, %c0_19] : memref<1x1xf32, #tpu.memory_space<vmem>>, vector<1x1xf32>
      %25 = vector.broadcast %24 : vector<1x1xf32> to vector<8x1xf32>
      %26 = arith.addf %23, %25 : vector<8x1xf32>
      %cst_20 = arith.constant 0.000000e+00 : f32
      %27 = vector.broadcast %cst_20 : f32 to vector<8x1xf32>
      %28 = arith.subf %27, %26 : vector<8x1xf32>
      %29 = math.exp %28 : vector<8x1xf32>
      %cst_21 = arith.constant 1.000000e+00 : f32
      %30 = vector.broadcast %cst_21 : f32 to vector<8x1xf32>
      %31 = arith.addf %30, %29 : vector<8x1xf32>
      %cst_22 = arith.constant 1.000000e+00 : f32
      %32 = vector.broadcast %cst_22 : f32 to vector<8x1xf32>
      %33 = arith.divf %32, %31 : vector<8x1xf32>
      %c0_23 = arith.constant 0 : index
      %c0_24 = arith.constant 0 : index
      %34 = vector.load %arg10[%c0_23, %c0_24] : memref<8x1xf32, #tpu.memory_space<vmem>>, vector<8x1xf32>
      tpu.vector_store %arg10[%c0_23, %c0_24], %33 {strides = array<i32>} : memref<8x1xf32, #tpu.memory_space<vmem>>, vector<8x1xf32>,
    } else {
    }
    return
  }
  func.func @transform_0(%arg0: i32) -> (i32, i32) {
    %c0_i32 = arith.constant 0 : i32
    %c0_i32_0 = arith.constant 0 : i32
    %c0_i32_1 = arith.constant 0 : i32
    return %c0_i32, %c0_i32_0 : i32, i32
  }
  func.func @transform_1(%arg0: i32) -> (i32, i32) {
    %c0_i32 = arith.constant 0 : i32
    %c0_i32_0 = arith.constant 0 : i32
    %c0_i32_1 = arith.constant 0 : i32
    return %c0_i32, %c0_i32_0 : i32, i32
  }
  func.func @transform_2(%arg0: i32) -> (i32, i32) {
    %c0_i32 = arith.constant 0 : i32
    %c0_i32_0 = arith.constant 0 : i32
    %c0_i32_1 = arith.constant 0 : i32
    return %c0_i32, %c0_i32_0 : i32, i32
  }
  func.func @transform_3(%arg0: i32) -> (i32, i32) {
    %c0_i32 = arith.constant 0 : i32
    %c0_i32_0 = arith.constant 0 : i32
    %c0_i32_1 = arith.constant 0 : i32
    return %c0_i32, %c0_i32_0 : i32, i32
  }
  func.func @transform_4(%arg0: i32) -> (i32, i32) {
    %c0_i32 = arith.constant 0 : i32
    %c0_i32_0 = arith.constant 0 : i32
    %c0_i32_1 = arith.constant 0 : i32
    return %c0_i32, %c0_i32_0 : i32, i32
  }
  func.func @transform_5(%arg0: i32) -> (i32, i32, i32) {
    %c0_i32 = arith.constant 0 : i32
    %c0_i32_0 = arith.constant 0 : i32
    %c0_i32_1 = arith.constant 0 : i32
    return %arg0, %c0_i32, %c0_i32_0 : i32, i32, i32
  }
  func.func @transform_6(%arg0: i32) -> (i32, i32) {
    %c0_i32 = arith.constant 0 : i32
    %c0_i32_0 = arith.constant 0 : i32
    %c0_i32_1 = arith.constant 0 : i32
    return %c0_i32, %c0_i32_0 : i32, i32
  }
  func.func @transform_7(%arg0: i32) -> (i32, i32) {
    %c0_i32 = arith.constant 0 : i32
    %c0_i32_0 = arith.constant 0 : i32
    %c0_i32_1 = arith.constant 0 : i32
    return %c0_i32, %c0_i32_0 : i32, i32
  }
  func.func @transform_8(%arg0: i32) -> (i32, i32) {
    %c0_i32 = arith.constant 0 : i32
    %c0_i32_0 = arith.constant 0 : i32
    %c0_i32_1 = arith.constant 0 : i32
    return %c0_i32, %c0_i32_0 : i32, i32
  }
  func.func @transform_9(%arg0: i32) -> (i32, i32) {
    %c0_i32 = arith.constant 0 : i32
    %c0_i32_0 = arith.constant 0 : i32
    %c0_i32_1 = arith.constant 0 : i32
    return %c0_i32, %c0_i32_0 : i32, i32
  }
}

</mosaic_0001>

<llo_original>
// kernel: sinkhole_forward.1
$region0: #{sinkhole_forward.1}
  #allocation0 [shape = 'u32[]', space=smem, size = 0x4, offset = 0x4, fixed_abs, tag = 'smem constant byte address 0x4 - core index']
  #allocation1 [shape = 'u32[72,128]{1,0:T(1,128)}', space=vmem, size = 0x9000, scoped, tag = 'internal scratch']
  #allocation2 [shape = 'f32[68,8,16]{2,1,0:T(8,128)}', space=vmem, size = 0x44000, scoped, tag = 'scratch operand']
  #allocation3 [shape = 'f32[4,8,512]{2,1,0:T(8,128)}', space=vmem, size = 0x10000, scoped, tag = 'scratch operand']
  #allocation4 [shape = 'f32[8,64]{1,0:T(8,128)}', space=vmem, size = 0x1000, scoped, tag = 'scratch operand']
  #allocation5 [shape = 'f32[1,1]{1,0:T(1,128)S(1)}', space=vmem, size = 0x200, scoped, tag = 'scoped memory for sinkhole_forward.1']
  %s0 = inlined_call_operand.vmem [shape: f32[512,6], index: 0, kind: input, shape index: {}]
  %s1 = inlined_call_operand.vmem [shape: f32[6,32], index: 1, kind: input, shape index: {}]
  %s2 = inlined_call_operand.vmem [shape: f32[1,32], index: 2, kind: input, shape index: {}]
  %s3 = inlined_call_operand.vmem [shape: f32[80,32], index: 3, kind: input, shape index: {}]
  %s4 = inlined_call_operand.vmem [shape: f32[1,32], index: 4, kind: input, shape index: {}]
  %s5 = inlined_call_operand.vmem [shape: bf16[4,512,64], index: 5, kind: input, shape index: {}]
  %s6 = inlined_call_operand.vmem [shape: f32[1,64], index: 6, kind: input, shape index: {}]
  %s7 = inlined_call_operand.vmem [shape: f32[64,1], index: 7, kind: input, shape index: {}]
  %s8 = inlined_call_operand.<no memory space> [shape: f32[1,1], index: 8, kind: input, shape index: {}]
  %s9 = inlined_call_operand.vmem [shape: f32[8,1], index: 9, kind: output, shape index: {}]
  %s10 = sld [smem:[#allocation0]]
  $region77: #{sinkhole_forward.1} parent=0
    _
  %s12 = ssub.s32 1, %s10
  %s13 = scalar_select 0, %s12, %s10
  %v14 = vstv %s8
  %15 = vst [vmem:[#allocation5] sm:$0x1] %v14
  loop: start=0, step=1, limit=6
  $region2: #{sinkhole_forward.1} parent=0 // loop_pre_header
    _
  $region3: #{sinkhole_forward.1} parent=0 // loop_header
    %s17 = sphi 0, %s21
    %p18 = scmp.ge.s32.totalorder %s17, 6
    %s25 = sphi 0, %s25
    %s27 = sphi 0, %s25
    %s28 = sphi 0, %s27
    %s42 = sphi 0, %s28
    %s46 = sphi 0, %s46
    %s48 = sphi 0, %s46
    %s49 = sphi 0, %s48
    %s63 = sphi 0, %s49
    %s67 = sphi 0, %s67
    %s69 = sphi 0, %s67
    %s70 = sphi 0, %s69
    %s84 = sphi 0, %s70
    %s88 = sphi 0, %s88
    %s90 = sphi 0, %s88
    %s91 = sphi 0, %s90
    %s105 = sphi 0, %s91
    %s109 = sphi 0, %s109
    %s111 = sphi 0, %s109
    %s112 = sphi 0, %s111
    %s126 = sphi 0, %s112
    %s132 = sphi 0, %s134
    %s135 = sphi 0, %s132
    %s136 = sphi 0, %s135
    %s152 = sphi 0, %s136
    %s156 = sphi 0, %s156
    %s158 = sphi 0, %s156
    %s159 = sphi 0, %s158
    %s173 = sphi 0, %s159
    %s177 = sphi 0, %s177
    %s179 = sphi 0, %s177
    %s180 = sphi 0, %s179
    %s194 = sphi 0, %s180
    %s198 = sphi 0, %s198
    %s200 = sphi 0, %s198
    %s201 = sphi 0, %s200
    %s215 = sphi 0, %s201
    %s219 = sphi 0, %s219
    %s221 = sphi 0, %s219
    %s222 = sphi 0, %s221
    %s236 = sphi 0, %s222
  $region4: #{sinkhole_forward.1} parent=0 // loop_header_branch
    %20 = sbr.rel (%p18) target = $region8
  $region5: #{sinkhole_forward.1} parent=0 // loop_body
    %s22 = ssub.s32 %s17, 1
    %s23 = ssub.s32 %s17, 2
    %s24 = sadd.s32 %s17, 1
    %s26 = sadd.s32 %s25, 1
    %p29 = scmp.eq.s32.totalorder %s17, 3
    %p30 = scmp.ne.s32.totalorder %s25, %s27
    %p31 = scmp.eq.s32.totalorder %s17, 0
    %p32 = por %p30, %p31
    %p33 = scmp.ne.s32.totalorder %s25, %s27
    %p34 = scmp.eq.s32.totalorder %s22, 3
    %p35 = por %p33, %p34
    %p36 = scmp.ne.s32.totalorder %s27, %s28
    %p37 = scmp.eq.s32.totalorder %s22, 0
    %p38 = por %p36, %p37
    %p39 = scmp.ne.s32.totalorder %s27, %s28
    %p40 = scmp.eq.s32.totalorder %s23, 3
    %p41 = por %p39, %p40
    %p43 = scmp.ne.s32.totalorder %s28, %s42
    %p44 = scmp.eq.s32.totalorder %s23, 0
    %p45 = por %p43, %p44
    %s47 = sadd.s32 %s46, 1
    %p50 = scmp.eq.s32.totalorder %s17, 3
    %p51 = scmp.ne.s32.totalorder %s46, %s48
    %p52 = scmp.eq.s32.totalorder %s17, 0
    %p53 = por %p51, %p52
    %p54 = scmp.ne.s32.totalorder %s46, %s48
    %p55 = scmp.eq.s32.totalorder %s22, 3
    %p56 = por %p54, %p55
    %p57 = scmp.ne.s32.totalorder %s48, %s49
    %p58 = scmp.eq.s32.totalorder %s22, 0
    %p59 = por %p57, %p58
    %p60 = scmp.ne.s32.totalorder %s48, %s49
    %p61 = scmp.eq.s32.totalorder %s23, 3
    %p62 = por %p60, %p61
    %p64 = scmp.ne.s32.totalorder %s49, %s63
    %p65 = scmp.eq.s32.totalorder %s23, 0
    %p66 = por %p64, %p65
    %s68 = sadd.s32 %s67, 1
    %p71 = scmp.eq.s32.totalorder %s17, 3
    %p72 = scmp.ne.s32.totalorder %s67, %s69
    %p73 = scmp.eq.s32.totalorder %s17, 0
    %p74 = por %p72, %p73
    %p75 = scmp.ne.s32.totalorder %s67, %s69
    %p76 = scmp.eq.s32.totalorder %s22, 3
    %p77 = por %p75, %p76
    %p78 = scmp.ne.s32.totalorder %s69, %s70
    %p79 = scmp.eq.s32.totalorder %s22, 0
    %p80 = por %p78, %p79
    %p81 = scmp.ne.s32.totalorder %s69, %s70
    %p82 = scmp.eq.s32.totalorder %s23, 3
    %p83 = por %p81, %p82
    %p85 = scmp.ne.s32.totalorder %s70, %s84
    %p86 = scmp.eq.s32.totalorder %s23, 0
    %p87 = por %p85, %p86
    %s89 = sadd.s32 %s88, 1
    %p92 = scmp.eq.s32.totalorder %s17, 3
    %p93 = scmp.ne.s32.totalorder %s88, %s90
    %p94 = scmp.eq.s32.totalorder %s17, 0
    %p95 = por %p93, %p94
    %p96 = scmp.ne.s32.totalorder %s88, %s90
    %p97 = scmp.eq.s32.totalorder %s22, 3
    %p98 = por %p96, %p97
    %p99 = scmp.ne.s32.totalorder %s90, %s91
    %p100 = scmp.eq.s32.totalorder %s22, 0
    %p101 = por %p99, %p100
    %p102 = scmp.ne.s32.totalorder %s90, %s91
    %p103 = scmp.eq.s32.totalorder %s23, 3
    %p104 = por %p102, %p103
    %p106 = scmp.ne.s32.totalorder %s91, %s105
    %p107 = scmp.eq.s32.totalorder %s23, 0
    %p108 = por %p106, %p107
    %s110 = sadd.s32 %s109, 1
    %p113 = scmp.eq.s32.totalorder %s17, 3
    %p114 = scmp.ne.s32.totalorder %s109, %s111
    %p115 = scmp.eq.s32.totalorder %s17, 0
    %p116 = por %p114, %p115
    %p117 = scmp.ne.s32.totalorder %s109, %s111
    %p118 = scmp.eq.s32.totalorder %s22, 3
    %p119 = por %p117, %p118
    %p120 = scmp.ne.s32.totalorder %s111, %s112
    %p121 = scmp.eq.s32.totalorder %s22, 0
    %p122 = por %p120, %p121
    %p123 = scmp.ne.s32.totalorder %s111, %s112
    %p124 = scmp.eq.s32.totalorder %s23, 3
    %p125 = por %p123, %p124
    %p127 = scmp.ne.s32.totalorder %s112, %s126
    %p128 = scmp.eq.s32.totalorder %s23, 0
    %p129 = por %p127, %p128
    %s130 = ssub.s32 %s17, %s24
    %p131 = scmp.eq.s32.totalorder %s130, 0
    %s133 = sadd.s32 %s132, 1
    %s134 = scalar_select %p131, %s132, %s133
    %p137 = pneg %p131
    %p138 = scmp.eq.s32.totalorder %s17, 3
    %p139 = por %p137, %p138
    %p140 = scmp.ne.s32.totalorder %s132, %s135
    %p141 = scmp.eq.s32.totalorder %s17, 0
    %p142 = por %p140, %p141
    %p143 = scmp.ne.s32.totalorder %s132, %s135
    %p144 = scmp.eq.s32.totalorder %s22, 3
    %p145 = por %p143, %p144
    %p146 = scmp.ne.s32.totalorder %s135, %s136
    %p147 = scmp.eq.s32.totalorder %s22, 0
    %p148 = por %p146, %p147
    %p149 = scmp.ne.s32.totalorder %s135, %s136
    %p150 = scmp.eq.s32.totalorder %s23, 3
    %p151 = por %p149, %p150
    %p153 = scmp.ne.s32.totalorder %s136, %s152
    %p154 = scmp.eq.s32.totalorder %s23, 0
    %p155 = por %p153, %p154
    %s157 = sadd.s32 %s156, 1
    %p160 = scmp.eq.s32.totalorder %s17, 3
    %p161 = scmp.ne.s32.totalorder %s156, %s158
    %p162 = scmp.eq.s32.totalorder %s17, 0
    %p163 = por %p161, %p162
    %p164 = scmp.ne.s32.totalorder %s156, %s158
    %p165 = scmp.eq.s32.totalorder %s22, 3
    %p166 = por %p164, %p165
    %p167 = scmp.ne.s32.totalorder %s158, %s159
    %p168 = scmp.eq.s32.totalorder %s22, 0
    %p169 = por %p167, %p168
    %p170 = scmp.ne.s32.totalorder %s158, %s159
    %p171 = scmp.eq.s32.totalorder %s23, 3
    %p172 = por %p170, %p171
    %p174 = scmp.ne.s32.totalorder %s159, %s173
    %p175 = scmp.eq.s32.totalorder %s23, 0
    %p176 = por %p174, %p175
    %s178 = sadd.s32 %s177, 1
    %p181 = scmp.eq.s32.totalorder %s17, 3
    %p182 = scmp.ne.s32.totalorder %s177, %s179
    %p183 = scmp.eq.s32.totalorder %s17, 0
    %p184 = por %p182, %p183
    %p185 = scmp.ne.s32.totalorder %s177, %s179
    %p186 = scmp.eq.s32.totalorder %s22, 3
    %p187 = por %p185, %p186
    %p188 = scmp.ne.s32.totalorder %s179, %s180
    %p189 = scmp.eq.s32.totalorder %s22, 0
    %p190 = por %p188, %p189
    %p191 = scmp.ne.s32.totalorder %s179, %s180
    %p192 = scmp.eq.s32.totalorder %s23, 3
    %p193 = por %p191, %p192
    %p195 = scmp.ne.s32.totalorder %s180, %s194
    %p196 = scmp.eq.s32.totalorder %s23, 0
    %p197 = por %p195, %p196
    %s199 = sadd.s32 %s198, 1
    %p202 = scmp.eq.s32.totalorder %s17, 3
    %p203 = scmp.ne.s32.totalorder %s198, %s200
    %p204 = scmp.eq.s32.totalorder %s17, 0
    %p205 = por %p203, %p204
    %p206 = scmp.ne.s32.totalorder %s198, %s200
    %p207 = scmp.eq.s32.totalorder %s22, 3
    %p208 = por %p206, %p207
    %p209 = scmp.ne.s32.totalorder %s200, %s201
    %p210 = scmp.eq.s32.totalorder %s22, 0
    %p211 = por %p209, %p210
    %p212 = scmp.ne.s32.totalorder %s200, %s201
    %p213 = scmp.eq.s32.totalorder %s23, 3
    %p214 = por %p212, %p213
    %p216 = scmp.ne.s32.totalorder %s201, %s215
    %p217 = scmp.eq.s32.totalorder %s23, 0
    %p218 = por %p216, %p217
    %s220 = sadd.s32 %s219, 1
    %p223 = scmp.eq.s32.totalorder %s17, 3
    %p224 = scmp.ne.s32.totalorder %s219, %s221
    %p225 = scmp.eq.s32.totalorder %s17, 0
    %p226 = por %p224, %p225
    %p227 = scmp.ne.s32.totalorder %s219, %s221
    %p228 = scmp.eq.s32.totalorder %s22, 3
    %p229 = por %p227, %p228
    %p230 = scmp.ne.s32.totalorder %s221, %s222
    %p231 = scmp.eq.s32.totalorder %s22, 0
    %p232 = por %p230, %p231
    %p233 = scmp.ne.s32.totalorder %s221, %s222
    %p234 = scmp.eq.s32.totalorder %s23, 3
    %p235 = por %p233, %p234
    %p237 = scmp.ne.s32.totalorder %s222, %s236
    %p238 = scmp.eq.s32.totalorder %s23, 0
    %p239 = por %p237, %p238
    %p240 = scmp.le.s32.totalorder 1, %s17
    %p241 = scmp.lt.s32.totalorder %s17, 5
    %p242 = pnand %p240, %p241
    %p243 = pneg %p242
    // Predicated region
    $region9: #{sinkhole_forward.1} parent=5 // pred_check
      _
    $region10: #{sinkhole_forward.1} parent=5 // pred_check_branch
      %245 = sbr.rel (%p242) target = $region12
    $region11: #{sinkhole_forward.1} parent=5 // pred_region
      %s246 = ssub.s32 %s17, 1
      // Predicated region
      $region13: #{sinkhole_forward.1} parent=11 // pred_check
        %p247 = pneg %p38
      $region14: #{sinkhole_forward.1} parent=11 // pred_check_branch
        %249 = sbr.rel (%p247) target = $region16
      $region15: #{sinkhole_forward.1} parent=11 // pred_region
        _
      $region16: #{sinkhole_forward.1} parent=11 // pred_fallthru
        _
      // Predicated region
      $region17: #{sinkhole_forward.1} parent=11 // pred_check
        %p250 = pneg %p59
      $region18: #{sinkhole_forward.1} parent=11 // pred_check_branch
        %252 = sbr.rel (%p250) target = $region20
      $region19: #{sinkhole_forward.1} parent=11 // pred_region
        _
      $region20: #{sinkhole_forward.1} parent=11 // pred_fallthru
        _
      // Predicated region
      $region21: #{sinkhole_forward.1} parent=11 // pred_check
        %p253 = pneg %p80
      $region22: #{sinkhole_forward.1} parent=11 // pred_check_branch
        %255 = sbr.rel (%p253) target = $region24
      $region23: #{sinkhole_forward.1} parent=11 // pred_region
        _
      $region24: #{sinkhole_forward.1} parent=11 // pred_fallthru
        _
      // Predicated region
      $region25: #{sinkhole_forward.1} parent=11 // pred_check
        %p256 = pneg %p101
      $region26: #{sinkhole_forward.1} parent=11 // pred_check_branch
        %258 = sbr.rel (%p256) target = $region28
      $region27: #{sinkhole_forward.1} parent=11 // pred_region
        _
      $region28: #{sinkhole_forward.1} parent=11 // pred_fallthru
        _
      // Predicated region
      $region29: #{sinkhole_forward.1} parent=11 // pred_check
        %p259 = pneg %p122
      $region30: #{sinkhole_forward.1} parent=11 // pred_check_branch
        %261 = sbr.rel (%p259) target = $region32
      $region31: #{sinkhole_forward.1} parent=11 // pred_region
        _
      $region32: #{sinkhole_forward.1} parent=11 // pred_fallthru
        _
      // Predicated region
      $region33: #{sinkhole_forward.1} parent=11 // pred_check
        %p262 = pneg %p169
      $region34: #{sinkhole_forward.1} parent=11 // pred_check_branch
        %264 = sbr.rel (%p262) target = $region36
      $region35: #{sinkhole_forward.1} parent=11 // pred_region
        _
      $region36: #{sinkhole_forward.1} parent=11 // pred_fallthru
        _
      // Predicated region
      $region37: #{sinkhole_forward.1} parent=11 // pred_check
        %p265 = pneg %p190
      $region38: #{sinkhole_forward.1} parent=11 // pred_check_branch
        %267 = sbr.rel (%p265) target = $region40
      $region39: #{sinkhole_forward.1} parent=11 // pred_region
        _
      $region40: #{sinkhole_forward.1} parent=11 // pred_fallthru
        _
      // Predicated region
      $region41: #{sinkhole_forward.1} parent=11 // pred_check
        %p268 = pneg %p211
      $region42: #{sinkhole_forward.1} parent=11 // pred_check_branch
        %270 = sbr.rel (%p268) target = $region44
      $region43: #{sinkhole_forward.1} parent=11 // pred_region
        _
      $region44: #{sinkhole_forward.1} parent=11 // pred_fallthru
        _
    $region12: #{sinkhole_forward.1} parent=5 // pred_fallthru
      _
    %p271 = scmp.lt.s32.totalorder %s17, 4
    // Predicated region
    $region45: #{sinkhole_forward.1} parent=5 // pred_check
      %p272 = pneg %p271
    $region46: #{sinkhole_forward.1} parent=5 // pred_check_branch
      %274 = sbr.rel (%p272) target = $region48
    $region47: #{sinkhole_forward.1} parent=5 // pred_region
      // Predicated region
      $region49: #{sinkhole_forward.1} parent=47 // pred_check
        %p275 = pneg %p142
      $region50: #{sinkhole_forward.1} parent=47 // pred_check_branch
        %277 = sbr.rel (%p275) target = $region52
      $region51: #{sinkhole_forward.1} parent=47 // pred_region
        %p278 = scmp.lt.s32.totalorder %s17, 3
        %s279 = scalar_select %p278, %s17, 3
        %s280 = smul.addr %s279, 64
        %s281 = smul.addr %s280, 4
        %s282 = scalar_lea.vmem %s5, %s281
      $region52: #{sinkhole_forward.1} parent=47 // pred_fallthru
        _
    $region48: #{sinkhole_forward.1} parent=5 // pred_fallthru
      _
    %p283 = scmp.le.s32.totalorder 1, %s17
    %p284 = scmp.lt.s32.totalorder %s17, 5
    %p285 = pnand %p283, %p284
    %p286 = pneg %p285
    // Predicated region
    $region53: #{sinkhole_forward.1} parent=5 // pred_check
      _
    $region54: #{sinkhole_forward.1} parent=5 // pred_check_branch
      %288 = sbr.rel (%p285) target = $region56
    $region55: #{sinkhole_forward.1} parent=5 // pred_region
      %s289 = ssub.s32 %s17, 1
      %p290 = pneg %p38
      %p291 = pneg %p35
      %p292 = pneg %p59
      %p293 = pneg %p56
      %p294 = pneg %p80
      %p295 = pneg %p77
      %p296 = pneg %p101
      %p297 = pneg %p98
      %p298 = pneg %p122
      %p299 = pneg %p119
      %p300 = scmp.lt.s32.totalorder %s22, 3
      %s301 = scalar_select %p300, %s22, 3
      %s302 = smul.addr %s301, 64
      %s303 = smul.addr %s302, 4
      %s304 = scalar_lea.vmem %s5, %s303
      %p305 = pneg %p148
      %p306 = pneg %p145
      %p307 = pneg %p169
      %p308 = pneg %p166
      %p309 = pneg %p190
      %p310 = pneg %p187
      %p311 = pneg %p211
      %p312 = pneg %p208
      %p313 = pneg %p232
      %p314 = pneg %p229
      %p315 = scmp.lt.s32.totalorder %s22, 3
      %s316 = scalar_select %p315, %s22, 3
      %s317 = smul.addr %s316, 64
      %s318 = smul.addr %s317, 4
      %s319 = scalar_lea.vmem %s5, %s318
      %p320 = scmp.eq.s32.totalorder %s22, 0
      // Predicated region
      $region57: #{sinkhole_forward.1} parent=55 // pred_check
        %p321 = pneg %p320
      $region58: #{sinkhole_forward.1} parent=55 // pred_check_branch
        %323 = sbr.rel (%p321) target = $region60
      $region59: #{sinkhole_forward.1} parent=55 // pred_region
        %v324 = vld [vmem:[%s0] sm:$0xff]
        %v325 = vld [vmem:[%s0 + $0x8] sm:$0xff]
        %v326 = vld [vmem:[%s0 + $0x10] sm:$0xff]
        %v327 = vld [vmem:[%s0 + $0x18] sm:$0xff]
        %v328 = vld [vmem:[%s0 + $0x20] sm:$0xff]
        %v329 = vld [vmem:[%s0 + $0x28] sm:$0xff]
        %v330 = vld [vmem:[%s0 + $0x30] sm:$0xff]
        %v331 = vld [vmem:[%s0 + $0x38] sm:$0xff]
        %v332 = vld [vmem:[%s0 + $0x40] sm:$0xff]
        %v333 = vld [vmem:[%s0 + $0x48] sm:$0xff]
        %v334 = vld [vmem:[%s0 + $0x50] sm:$0xff]
        %v335 = vld [vmem:[%s0 + $0x58] sm:$0xff]
        %v336 = vld [vmem:[%s0 + $0x60] sm:$0xff]
        %v337 = vld [vmem:[%s0 + $0x68] sm:$0xff]
        %v338 = vld [vmem:[%s0 + $0x70] sm:$0xff]
        %v339 = vld [vmem:[%s0 + $0x78] sm:$0xff]
        %v340 = vld [vmem:[%s0 + $0x80] sm:$0xff]
        %v341 = vld [vmem:[%s0 + $0x88] sm:$0xff]
        %v342 = vld [vmem:[%s0 + $0x90] sm:$0xff]
        %v343 = vld [vmem:[%s0 + $0x98] sm:$0xff]
        %v344 = vld [vmem:[%s0 + $0xa0] sm:$0xff]
        %v345 = vld [vmem:[%s0 + $0xa8] sm:$0xff]
        %v346 = vld [vmem:[%s0 + $0xb0] sm:$0xff]
        %v347 = vld [vmem:[%s0 + $0xb8] sm:$0xff]
        %v348 = vld [vmem:[%s0 + $0xc0] sm:$0xff]
        %v349 = vld [vmem:[%s0 + $0xc8] sm:$0xff]
        %v350 = vld [vmem:[%s0 + $0xd0] sm:$0xff]
        %v351 = vld [vmem:[%s0 + $0xd8] sm:$0xff]
        %v352 = vld [vmem:[%s0 + $0xe0] sm:$0xff]
        %v353 = vld [vmem:[%s0 + $0xe8] sm:$0xff]
        %v354 = vld [vmem:[%s0 + $0xf0] sm:$0xff]
        %v355 = vld [vmem:[%s0 + $0xf8] sm:$0xff]
        %v356 = vld [vmem:[%s0 + $0x100] sm:$0xff]
        %v357 = vld [vmem:[%s0 + $0x108] sm:$0xff]
        %v358 = vld [vmem:[%s0 + $0x110] sm:$0xff]
        %v359 = vld [vmem:[%s0 + $0x118] sm:$0xff]
        %v360 = vld [vmem:[%s0 + $0x120] sm:$0xff]
        %v361 = vld [vmem:[%s0 + $0x128] sm:$0xff]
        %v362 = vld [vmem:[%s0 + $0x130] sm:$0xff]
        %v363 = vld [vmem:[%s0 + $0x138] sm:$0xff]
        %v364 = vld [vmem:[%s0 + $0x140] sm:$0xff]
        %v365 = vld [vmem:[%s0 + $0x148] sm:$0xff]
        %v366 = vld [vmem:[%s0 + $0x150] sm:$0xff]
        %v367 = vld [vmem:[%s0 + $0x158] sm:$0xff]
        %v368 = vld [vmem:[%s0 + $0x160] sm:$0xff]
        %v369 = vld [vmem:[%s0 + $0x168] sm:$0xff]
        %v370 = vld [vmem:[%s0 + $0x170] sm:$0xff]
        %v371 = vld [vmem:[%s0 + $0x178] sm:$0xff]
        %v372 = vld [vmem:[%s0 + $0x180] sm:$0xff]
        %v373 = vld [vmem:[%s0 + $0x188] sm:$0xff]
        %v374 = vld [vmem:[%s0 + $0x190] sm:$0xff]
        %v375 = vld [vmem:[%s0 + $0x198] sm:$0xff]
        %v376 = vld [vmem:[%s0 + $0x1a0] sm:$0xff]
        %v377 = vld [vmem:[%s0 + $0x1a8] sm:$0xff]
        %v378 = vld [vmem:[%s0 + $0x1b0] sm:$0xff]
        %v379 = vld [vmem:[%s0 + $0x1b8] sm:$0xff]
        %v380 = vld [vmem:[%s0 + $0x1c0] sm:$0xff]
        %v381 = vld [vmem:[%s0 + $0x1c8] sm:$0xff]
        %v382 = vld [vmem:[%s0 + $0x1d0] sm:$0xff]
        %v383 = vld [vmem:[%s0 + $0x1d8] sm:$0xff]
        %v384 = vld [vmem:[%s0 + $0x1e0] sm:$0xff]
        %v385 = vld [vmem:[%s0 + $0x1e8] sm:$0xff]
        %v386 = vld [vmem:[%s0 + $0x1f0] sm:$0xff]
        %v387 = vld [vmem:[%s0 + $0x1f8] sm:$0xff]
        %v388 = vld [vmem:[%s1] sm:$0x3f]
        %v389 = vld [vmem:[%s2] sm:$0x1]
        %v391 = vperm.slane %v389, 0
        %vm393 = vcmask 48128
        %v395 = vsel %vm393, %v324, 0
        %v398 = vsel %vm393, %v325, 0
        %v401 = vsel %vm393, %v326, 0
        %v404 = vsel %vm393, %v327, 0
        %v407 = vsel %vm393, %v328, 0
        %v410 = vsel %vm393, %v329, 0
        %v413 = vsel %vm393, %v330, 0
        %v416 = vsel %vm393, %v331, 0
        %v419 = vsel %vm393, %v332, 0
        %v422 = vsel %vm393, %v333, 0
        %v425 = vsel %vm393, %v334, 0
        %v428 = vsel %vm393, %v335, 0
        %v431 = vsel %vm393, %v336, 0
        %v434 = vsel %vm393, %v337, 0
        %v437 = vsel %vm393, %v338, 0
        %v440 = vsel %vm393, %v339, 0
        %v443 = vsel %vm393, %v340, 0
        %v446 = vsel %vm393, %v341, 0
        %v449 = vsel %vm393, %v342, 0
        %v452 = vsel %vm393, %v343, 0
        %v455 = vsel %vm393, %v344, 0
        %v458 = vsel %vm393, %v345, 0
        %v461 = vsel %vm393, %v346, 0
        %v464 = vsel %vm393, %v347, 0
        %v467 = vsel %vm393, %v348, 0
        %v470 = vsel %vm393, %v349, 0
        %v473 = vsel %vm393, %v350, 0
        %v476 = vsel %vm393, %v351, 0
        %v479 = vsel %vm393, %v352, 0
        %v482 = vsel %vm393, %v353, 0
        %v485 = vsel %vm393, %v354, 0
        %v488 = vsel %vm393, %v355, 0
        %v491 = vsel %vm393, %v356, 0
        %v494 = vsel %vm393, %v357, 0
        %v497 = vsel %vm393, %v358, 0
        %v500 = vsel %vm393, %v359, 0
        %v503 = vsel %vm393, %v360, 0
        %v506 = vsel %vm393, %v361, 0
        %v509 = vsel %vm393, %v362, 0
        %v512 = vsel %vm393, %v363, 0
        %v515 = vsel %vm393, %v364, 0
        %v518 = vsel %vm393, %v365, 0
        %v521 = vsel %vm393, %v366, 0
        %v524 = vsel %vm393, %v367, 0
        %v527 = vsel %vm393, %v368, 0
        %v530 = vsel %vm393, %v369, 0
        %v533 = vsel %vm393, %v370, 0
        %v536 = vsel %vm393, %v371, 0
        %v539 = vsel %vm393, %v372, 0
        %v542 = vsel %vm393, %v373, 0
        %v545 = vsel %vm393, %v374, 0
        %v548 = vsel %vm393, %v375, 0
        %v551 = vsel %vm393, %v376, 0
        %v554 = vsel %vm393, %v377, 0
        %v557 = vsel %vm393, %v378, 0
        %v560 = vsel %vm393, %v379, 0
        %v563 = vsel %vm393, %v380, 0
        %v566 = vsel %vm393, %v381, 0
        %v569 = vsel %vm393, %v382, 0
        %v572 = vsel %vm393, %v383, 0
        %v575 = vsel %vm393, %v384, 0
        %v578 = vsel %vm393, %v385, 0
        %v581 = vsel %vm393, %v386, 0
        %v584 = vsel %vm393, %v387, 0
        %vm586 = vcmask 1045504
        %v588 = vsel %vm586, %v388, 0
        %590 = vmatpush.msra.mxu0 0.0
        %591 = vmatpush.msra.mxu0 0.0
        %592 = vmatpush.msra.mxu0 0.0
        %593 = vmatpush.msra.mxu0 0.0
        %594 = vmatpush.msra.mxu0 0.0
        %595 = vmatpush.msra.mxu0 0.0
        %596 = vmatpush.msra.mxu0 0.0
        %597 = vmatpush.msra.mxu0 0.0
        %598 = vmatpush.msra.mxu0 0.0
        %599 = vmatpush.msra.mxu0 0.0
        %600 = vmatpush.msra.mxu0 0.0
        %601 = vmatpush.msra.mxu0 0.0
        %602 = vmatpush.msra.mxu0 0.0
        %603 = vmatpush.msra.mxu0 0.0
        %604 = vmatpush.msra.mxu0 0.0
        %605 = vmatpush.msra.mxu0 %v588
        %606 = vmatmul.f32.gmra.mxu0 %v395
        %v607 = vpop.f32.mrf.mxu0
        %v608 = vadd.f32 %v391, %v607
        %609 = vmatmul.f32.gmra.mxu0 %v398
        %v610 = vpop.f32.mrf.mxu0
        %v611 = vadd.f32 %v391, %v610
        %612 = vmatmul.f32.gmra.mxu0 %v401
        %v613 = vpop.f32.mrf.mxu0
        %v614 = vadd.f32 %v391, %v613
        %615 = vmatmul.f32.gmra.mxu0 %v404
        %v616 = vpop.f32.mrf.mxu0
        %v617 = vadd.f32 %v391, %v616
        %618 = vmatmul.f32.gmra.mxu0 %v407
        %v619 = vpop.f32.mrf.mxu0
        %v620 = vadd.f32 %v391, %v619
        %621 = vmatmul.f32.gmra.mxu0 %v410
        %v622 = vpop.f32.mrf.mxu0
        %v623 = vadd.f32 %v391, %v622
        %624 = vmatmul.f32.gmra.mxu0 %v413
        %v625 = vpop.f32.mrf.mxu0
        %v626 = vadd.f32 %v391, %v625
        %627 = vmatmul.f32.gmra.mxu0 %v416
        %v628 = vpop.f32.mrf.mxu0
        %v629 = vadd.f32 %v391, %v628
        %630 = vmatmul.f32.gmra.mxu0 %v419
        %v631 = vpop.f32.mrf.mxu0
        %v632 = vadd.f32 %v391, %v631
        %633 = vmatmul.f32.gmra.mxu0 %v422
        %v634 = vpop.f32.mrf.mxu0
        %v635 = vadd.f32 %v391, %v634
        %636 = vmatmul.f32.gmra.mxu0 %v425
        %v637 = vpop.f32.mrf.mxu0
        %v638 = vadd.f32 %v391, %v637
        %639 = vmatmul.f32.gmra.mxu0 %v428
        %v640 = vpop.f32.mrf.mxu0
        %v641 = vadd.f32 %v391, %v640
        %642 = vmatmul.f32.gmra.mxu0 %v431
        %v643 = vpop.f32.mrf.mxu0
        %v644 = vadd.f32 %v391, %v643
        %645 = vmatmul.f32.gmra.mxu0 %v434
        %v646 = vpop.f32.mrf.mxu0
        %v647 = vadd.f32 %v391, %v646
        %648 = vmatmul.f32.gmra.mxu0 %v437
        %v649 = vpop.f32.mrf.mxu0
        %v650 = vadd.f32 %v391, %v649
        %651 = vmatmul.f32.gmra.mxu0 %v440
        %v652 = vpop.f32.mrf.mxu0
        %v653 = vadd.f32 %v391, %v652
        %654 = vmatmul.f32.gmra.mxu0 %v443
        %v655 = vpop.f32.mrf.mxu0
        %v656 = vadd.f32 %v391, %v655
        %657 = vmatmul.f32.gmra.mxu0 %v446
        %v658 = vpop.f32.mrf.mxu0
        %v659 = vadd.f32 %v391, %v658
        %660 = vmatmul.f32.gmra.mxu0 %v449
        %v661 = vpop.f32.mrf.mxu0
        %v662 = vadd.f32 %v391, %v661
        %663 = vmatmul.f32.gmra.mxu0 %v452
        %v664 = vpop.f32.mrf.mxu0
        %v665 = vadd.f32 %v391, %v664
        %666 = vmatmul.f32.gmra.mxu0 %v455
        %v667 = vpop.f32.mrf.mxu0
        %v668 = vadd.f32 %v391, %v667
        %669 = vmatmul.f32.gmra.mxu0 %v458
        %v670 = vpop.f32.mrf.mxu0
        %v671 = vadd.f32 %v391, %v670
        %672 = vmatmul.f32.gmra.mxu0 %v461
        %v673 = vpop.f32.mrf.mxu0
        %v674 = vadd.f32 %v391, %v673
        %675 = vmatmul.f32.gmra.mxu0 %v464
        %v676 = vpop.f32.mrf.mxu0
        %v677 = vadd.f32 %v391, %v676
        %678 = vmatmul.f32.gmra.mxu0 %v467
        %v679 = vpop.f32.mrf.mxu0
        %v680 = vadd.f32 %v391, %v679
        %681 = vmatmul.f32.gmra.mxu0 %v470
        %v682 = vpop.f32.mrf.mxu0
        %v683 = vadd.f32 %v391, %v682
        %684 = vmatmul.f32.gmra.mxu0 %v473
        %v685 = vpop.f32.mrf.mxu0
        %v686 = vadd.f32 %v391, %v685
        %687 = vmatmul.f32.gmra.mxu0 %v476
        %v688 = vpop.f32.mrf.mxu0
        %v689 = vadd.f32 %v391, %v688
        %690 = vmatmul.f32.gmra.mxu0 %v479
        %v691 = vpop.f32.mrf.mxu0
        %v692 = vadd.f32 %v391, %v691
        %693 = vmatmul.f32.gmra.mxu0 %v482
        %v694 = vpop.f32.mrf.mxu0
        %v695 = vadd.f32 %v391, %v694
        %696 = vmatmul.f32.gmra.mxu0 %v485
        %v697 = vpop.f32.mrf.mxu0
        %v698 = vadd.f32 %v391, %v697
        %699 = vmatmul.f32.gmra.mxu0 %v488
        %v700 = vpop.f32.mrf.mxu0
        %v701 = vadd.f32 %v391, %v700
        %702 = vmatmul.f32.gmra.mxu0 %v491
        %v703 = vpop.f32.mrf.mxu0
        %v704 = vadd.f32 %v391, %v703
        %705 = vmatmul.f32.gmra.mxu0 %v494
        %v706 = vpop.f32.mrf.mxu0
        %v707 = vadd.f32 %v391, %v706
        %708 = vmatmul.f32.gmra.mxu0 %v497
        %v709 = vpop.f32.mrf.mxu0
        %v710 = vadd.f32 %v391, %v709
        %711 = vmatmul.f32.gmra.mxu0 %v500
        %v712 = vpop.f32.mrf.mxu0
        %v713 = vadd.f32 %v391, %v712
        %714 = vmatmul.f32.gmra.mxu0 %v503
        %v715 = vpop.f32.mrf.mxu0
        %v716 = vadd.f32 %v391, %v715
        %717 = vmatmul.f32.gmra.mxu0 %v506
        %v718 = vpop.f32.mrf.mxu0
        %v719 = vadd.f32 %v391, %v718
        %720 = vmatmul.f32.gmra.mxu0 %v509
        %v721 = vpop.f32.mrf.mxu0
        %v722 = vadd.f32 %v391, %v721
        %723 = vmatmul.f32.gmra.mxu0 %v512
        %v724 = vpop.f32.mrf.mxu0
        %v725 = vadd.f32 %v391, %v724
        %726 = vmatmul.f32.gmra.mxu0 %v515
        %v727 = vpop.f32.mrf.mxu0
        %v728 = vadd.f32 %v391, %v727
        %729 = vmatmul.f32.gmra.mxu0 %v518
        %v730 = vpop.f32.mrf.mxu0
        %v731 = vadd.f32 %v391, %v730
        %732 = vmatmul.f32.gmra.mxu0 %v521
        %v733 = vpop.f32.mrf.mxu0
        %v734 = vadd.f32 %v391, %v733
        %735 = vmatmul.f32.gmra.mxu0 %v524
        %v736 = vpop.f32.mrf.mxu0
        %v737 = vadd.f32 %v391, %v736
        %738 = vmatmul.f32.gmra.mxu0 %v527
        %v739 = vpop.f32.mrf.mxu0
        %v740 = vadd.f32 %v391, %v739
        %741 = vmatmul.f32.gmra.mxu0 %v530
        %v742 = vpop.f32.mrf.mxu0
        %v743 = vadd.f32 %v391, %v742
        %744 = vmatmul.f32.gmra.mxu0 %v533
        %v745 = vpop.f32.mrf.mxu0
        %v746 = vadd.f32 %v391, %v745
        %747 = vmatmul.f32.gmra.mxu0 %v536
        %v748 = vpop.f32.mrf.mxu0
        %v749 = vadd.f32 %v391, %v748
        %750 = vmatmul.f32.gmra.mxu0 %v539
        %v751 = vpop.f32.mrf.mxu0
        %v752 = vadd.f32 %v391, %v751
        %753 = vmatmul.f32.gmra.mxu0 %v542
        %v754 = vpop.f32.mrf.mxu0
        %v755 = vadd.f32 %v391, %v754
        %756 = vmatmul.f32.gmra.mxu0 %v545
        %v757 = vpop.f32.mrf.mxu0
        %v758 = vadd.f32 %v391, %v757
        %759 = vmatmul.f32.gmra.mxu0 %v548
        %v760 = vpop.f32.mrf.mxu0
        %v761 = vadd.f32 %v391, %v760
        %762 = vmatmul.f32.gmra.mxu0 %v551
        %v763 = vpop.f32.mrf.mxu0
        %v764 = vadd.f32 %v391, %v763
        %765 = vmatmul.f32.gmra.mxu0 %v554
        %v766 = vpop.f32.mrf.mxu0
        %v767 = vadd.f32 %v391, %v766
        %768 = vmatmul.f32.gmra.mxu0 %v557
        %v769 = vpop.f32.mrf.mxu0
        %v770 = vadd.f32 %v391, %v769
        %771 = vmatmul.f32.gmra.mxu0 %v560
        %v772 = vpop.f32.mrf.mxu0
        %v773 = vadd.f32 %v391, %v772
        %774 = vmatmul.f32.gmra.mxu0 %v563
        %v775 = vpop.f32.mrf.mxu0
        %v776 = vadd.f32 %v391, %v775
        %777 = vmatmul.f32.gmra.mxu0 %v566
        %v778 = vpop.f32.mrf.mxu0
        %v779 = vadd.f32 %v391, %v778
        %780 = vmatmul.f32.gmra.mxu0 %v569
        %v781 = vpop.f32.mrf.mxu0
        %v782 = vadd.f32 %v391, %v781
        %783 = vmatmul.f32.gmra.mxu0 %v572
        %v784 = vpop.f32.mrf.mxu0
        %v785 = vadd.f32 %v391, %v784
        %786 = vmatmul.f32.gmra.mxu0 %v575
        %v787 = vpop.f32.mrf.mxu0
        %v788 = vadd.f32 %v391, %v787
        %789 = vmatmul.f32.gmra.mxu0 %v578
        %v790 = vpop.f32.mrf.mxu0
        %v791 = vadd.f32 %v391, %v790
        %792 = vmatmul.f32.gmra.mxu0 %v581
        %v793 = vpop.f32.mrf.mxu0
        %v794 = vadd.f32 %v391, %v793
        %795 = vmatmul.f32.gmra.mxu0 %v584
        %v796 = vpop.f32.mrf.mxu0
        %v797 = vadd.f32 %v391, %v796
        %798 = vdwg.mxu0
        %v799 = vmax.f32 %v608, 0.0
        %v800 = vmax.f32 %v611, 0.0
        %v801 = vmax.f32 %v614, 0.0
        %v802 = vmax.f32 %v617, 0.0
        %v803 = vmax.f32 %v620, 0.0
        %v804 = vmax.f32 %v623, 0.0
        %v805 = vmax.f32 %v626, 0.0
        %v806 = vmax.f32 %v629, 0.0
        %v807 = vmax.f32 %v632, 0.0
        %v808 = vmax.f32 %v635, 0.0
        %v809 = vmax.f32 %v638, 0.0
        %v810 = vmax.f32 %v641, 0.0
        %v811 = vmax.f32 %v644, 0.0
        %v812 = vmax.f32 %v647, 0.0
        %v813 = vmax.f32 %v650, 0.0
        %v814 = vmax.f32 %v653, 0.0
        %v815 = vmax.f32 %v656, 0.0
        %v816 = vmax.f32 %v659, 0.0
        %v817 = vmax.f32 %v662, 0.0
        %v818 = vmax.f32 %v665, 0.0
        %v819 = vmax.f32 %v668, 0.0
        %v820 = vmax.f32 %v671, 0.0
        %v821 = vmax.f32 %v674, 0.0
        %v822 = vmax.f32 %v677, 0.0
        %v823 = vmax.f32 %v680, 0.0
        %v824 = vmax.f32 %v683, 0.0
        %v825 = vmax.f32 %v686, 0.0
        %v826 = vmax.f32 %v689, 0.0
        %v827 = vmax.f32 %v692, 0.0
        %v828 = vmax.f32 %v695, 0.0
        %v829 = vmax.f32 %v698, 0.0
        %v830 = vmax.f32 %v701, 0.0
        %v831 = vmax.f32 %v704, 0.0
        %v832 = vmax.f32 %v707, 0.0
        %v833 = vmax.f32 %v710, 0.0
        %v834 = vmax.f32 %v713, 0.0
        %v835 = vmax.f32 %v716, 0.0
        %v836 = vmax.f32 %v719, 0.0
        %v837 = vmax.f32 %v722, 0.0
        %v838 = vmax.f32 %v725, 0.0
        %v839 = vmax.f32 %v728, 0.0
        %v840 = vmax.f32 %v731, 0.0
        %v841 = vmax.f32 %v734, 0.0
        %v842 = vmax.f32 %v737, 0.0
        %v843 = vmax.f32 %v740, 0.0
        %v844 = vmax.f32 %v743, 0.0
        %v845 = vmax.f32 %v746, 0.0
        %v846 = vmax.f32 %v749, 0.0
        %v847 = vmax.f32 %v752, 0.0
        %v848 = vmax.f32 %v755, 0.0
        %v849 = vmax.f32 %v758, 0.0
        %v850 = vmax.f32 %v761, 0.0
        %v851 = vmax.f32 %v764, 0.0
        %v852 = vmax.f32 %v767, 0.0
        %v853 = vmax.f32 %v770, 0.0
        %v854 = vmax.f32 %v773, 0.0
        %v855 = vmax.f32 %v776, 0.0
        %v856 = vmax.f32 %v779, 0.0
        %v857 = vmax.f32 %v782, 0.0
        %v858 = vmax.f32 %v785, 0.0
        %v859 = vmax.f32 %v788, 0.0
        %v860 = vmax.f32 %v791, 0.0
        %v861 = vmax.f32 %v794, 0.0
        %v862 = vmax.f32 %v797, 0.0
        %927 = vrot.lane.b32.xlu0 %v799, 112
        %v928 = vpop.permute.xlu0 %927
        %929 = vrot.lane.b32.xlu0 %v800, 112
        %v930 = vpop.permute.xlu0 %929
        %931 = vrot.lane.b32.xlu0 %v801, 112
        %v932 = vpop.permute.xlu0 %931
        %933 = vrot.lane.b32.xlu0 %v802, 112
        %v934 = vpop.permute.xlu0 %933
        %935 = vrot.lane.b32.xlu0 %v803, 112
        %v936 = vpop.permute.xlu0 %935
        %937 = vrot.lane.b32.xlu0 %v804, 112
        %v938 = vpop.permute.xlu0 %937
        %939 = vrot.lane.b32.xlu0 %v805, 112
        %v940 = vpop.permute.xlu0 %939
        %941 = vrot.lane.b32.xlu0 %v806, 112
        %v942 = vpop.permute.xlu0 %941
        %943 = vrot.lane.b32.xlu0 %v807, 112
        %v944 = vpop.permute.xlu0 %943
        %945 = vrot.lane.b32.xlu0 %v808, 112
        %v946 = vpop.permute.xlu0 %945
        %947 = vrot.lane.b32.xlu0 %v809, 112
        %v948 = vpop.permute.xlu0 %947
        %949 = vrot.lane.b32.xlu0 %v810, 112
        %v950 = vpop.permute.xlu0 %949
        %951 = vrot.lane.b32.xlu0 %v811, 112
        %v952 = vpop.permute.xlu0 %951
        %953 = vrot.lane.b32.xlu0 %v812, 112
        %v954 = vpop.permute.xlu0 %953
        %955 = vrot.lane.b32.xlu0 %v813, 112
        %v956 = vpop.permute.xlu0 %955
        %957 = vrot.lane.b32.xlu0 %v814, 112
        %v958 = vpop.permute.xlu0 %957
        %959 = vrot.lane.b32.xlu0 %v815, 112
        %v960 = vpop.permute.xlu0 %959
        %961 = vrot.lane.b32.xlu0 %v816, 112
        %v962 = vpop.permute.xlu0 %961
        %963 = vrot.lane.b32.xlu0 %v817, 112
        %v964 = vpop.permute.xlu0 %963
        %965 = vrot.lane.b32.xlu0 %v818, 112
        %v966 = vpop.permute.xlu0 %965
        %967 = vrot.lane.b32.xlu0 %v819, 112
        %v968 = vpop.permute.xlu0 %967
        %969 = vrot.lane.b32.xlu0 %v820, 112
        %v970 = vpop.permute.xlu0 %969
        %971 = vrot.lane.b32.xlu0 %v821, 112
        %v972 = vpop.permute.xlu0 %971
        %973 = vrot.lane.b32.xlu0 %v822, 112
        %v974 = vpop.permute.xlu0 %973
        %975 = vrot.lane.b32.xlu0 %v823, 112
        %v976 = vpop.permute.xlu0 %975
        %977 = vrot.lane.b32.xlu0 %v824, 112
        %v978 = vpop.permute.xlu0 %977
        %979 = vrot.lane.b32.xlu0 %v825, 112
        %v980 = vpop.permute.xlu0 %979
        %981 = vrot.lane.b32.xlu0 %v826, 112
        %v982 = vpop.permute.xlu0 %981
        %983 = vrot.lane.b32.xlu0 %v827, 112
        %v984 = vpop.permute.xlu0 %983
        %985 = vrot.lane.b32.xlu0 %v828, 112
        %v986 = vpop.permute.xlu0 %985
        %987 = vrot.lane.b32.xlu0 %v829, 112
        %v988 = vpop.permute.xlu0 %987
        %989 = vrot.lane.b32.xlu0 %v830, 112
        %v990 = vpop.permute.xlu0 %989
        %991 = vrot.lane.b32.xlu0 %v831, 112
        %v992 = vpop.permute.xlu0 %991
        %993 = vrot.lane.b32.xlu0 %v832, 112
        %v994 = vpop.permute.xlu0 %993
        %995 = vrot.lane.b32.xlu0 %v833, 112
        %v996 = vpop.permute.xlu0 %995
        %997 = vrot.lane.b32.xlu0 %v834, 112
        %v998 = vpop.permute.xlu0 %997
        %999 = vrot.lane.b32.xlu0 %v835, 112
        %v1000 = vpop.permute.xlu0 %999
        %1001 = vrot.lane.b32.xlu0 %v836, 112
        %v1002 = vpop.permute.xlu0 %1001
        %1003 = vrot.lane.b32.xlu0 %v837, 112
        %v1004 = vpop.permute.xlu0 %1003
        %1005 = vrot.lane.b32.xlu0 %v838, 112
        %v1006 = vpop.permute.xlu0 %1005
        %1007 = vrot.lane.b32.xlu0 %v839, 112
        %v1008 = vpop.permute.xlu0 %1007
        %1009 = vrot.lane.b32.xlu0 %v840, 112
        %v1010 = vpop.permute.xlu0 %1009
        %1011 = vrot.lane.b32.xlu0 %v841, 112
        %v1012 = vpop.permute.xlu0 %1011
        %1013 = vrot.lane.b32.xlu0 %v842, 112
        %v1014 = vpop.permute.xlu0 %1013
        %1015 = vrot.lane.b32.xlu0 %v843, 112
        %v1016 = vpop.permute.xlu0 %1015
        %1017 = vrot.lane.b32.xlu0 %v844, 112
        %v1018 = vpop.permute.xlu0 %1017
        %1019 = vrot.lane.b32.xlu0 %v845, 112
        %v1020 = vpop.permute.xlu0 %1019
        %1021 = vrot.lane.b32.xlu0 %v846, 112
        %v1022 = vpop.permute.xlu0 %1021
        %1023 = vrot.lane.b32.xlu0 %v847, 112
        %v1024 = vpop.permute.xlu0 %1023
        %1025 = vrot.lane.b32.xlu0 %v848, 112
        %v1026 = vpop.permute.xlu0 %1025
        %1027 = vrot.lane.b32.xlu0 %v849, 112
        %v1028 = vpop.permute.xlu0 %1027
        %1029 = vrot.lane.b32.xlu0 %v850, 112
        %v1030 = vpop.permute.xlu0 %1029
        %1031 = vrot.lane.b32.xlu0 %v851, 112
        %v1032 = vpop.permute.xlu0 %1031
        %1033 = vrot.lane.b32.xlu0 %v852, 112
        %v1034 = vpop.permute.xlu0 %1033
        %1035 = vrot.lane.b32.xlu0 %v853, 112
        %v1036 = vpop.permute.xlu0 %1035
        %1037 = vrot.lane.b32.xlu0 %v854, 112
        %v1038 = vpop.permute.xlu0 %1037
        %1039 = vrot.lane.b32.xlu0 %v855, 112
        %v1040 = vpop.permute.xlu0 %1039
        %1041 = vrot.lane.b32.xlu0 %v856, 112
        %v1042 = vpop.permute.xlu0 %1041
        %1043 = vrot.lane.b32.xlu0 %v857, 112
        %v1044 = vpop.permute.xlu0 %1043
        %1045 = vrot.lane.b32.xlu0 %v858, 112
        %v1046 = vpop.permute.xlu0 %1045
        %1047 = vrot.lane.b32.xlu0 %v859, 112
        %v1048 = vpop.permute.xlu0 %1047
        %1049 = vrot.lane.b32.xlu0 %v860, 112
        %v1050 = vpop.permute.xlu0 %1049
        %1051 = vrot.lane.b32.xlu0 %v861, 112
        %v1052 = vpop.permute.xlu0 %1051
        %1053 = vrot.lane.b32.xlu0 %v862, 112
        %v1054 = vpop.permute.xlu0 %1053
        %v1119 = vmax.f32 %v799, %v928
        %v1120 = vmax.f32 %v800, %v930
        %v1121 = vmax.f32 %v801, %v932
        %v1122 = vmax.f32 %v802, %v934
        %v1123 = vmax.f32 %v803, %v936
        %v1124 = vmax.f32 %v804, %v938
        %v1125 = vmax.f32 %v805, %v940
        %v1126 = vmax.f32 %v806, %v942
        %v1127 = vmax.f32 %v807, %v944
        %v1128 = vmax.f32 %v808, %v946
        %v1129 = vmax.f32 %v809, %v948
        %v1130 = vmax.f32 %v810, %v950
        %v1131 = vmax.f32 %v811, %v952
        %v1132 = vmax.f32 %v812, %v954
        %v1133 = vmax.f32 %v813, %v956
        %v1134 = vmax.f32 %v814, %v958
        %v1135 = vmax.f32 %v815, %v960
        %v1136 = vmax.f32 %v816, %v962
        %v1137 = vmax.f32 %v817, %v964
        %v1138 = vmax.f32 %v818, %v966
        %v1139 = vmax.f32 %v819, %v968
        %v1140 = vmax.f32 %v820, %v970
        %v1141 = vmax.f32 %v821, %v972
        %v1142 = vmax.f32 %v822, %v974
        %v1143 = vmax.f32 %v823, %v976
        %v1144 = vmax.f32 %v824, %v978
        %v1145 = vmax.f32 %v825, %v980
        %v1146 = vmax.f32 %v826, %v982
        %v1147 = vmax.f32 %v827, %v984
        %v1148 = vmax.f32 %v828, %v986
        %v1149 = vmax.f32 %v829, %v988
        %v1150 = vmax.f32 %v830, %v990
        %v1151 = vmax.f32 %v831, %v992
        %v1152 = vmax.f32 %v832, %v994
        %v1153 = vmax.f32 %v833, %v996
        %v1154 = vmax.f32 %v834, %v998
        %v1155 = vmax.f32 %v835, %v1000
        %v1156 = vmax.f32 %v836, %v1002
        %v1157 = vmax.f32 %v837, %v1004
        %v1158 = vmax.f32 %v838, %v1006
        %v1159 = vmax.f32 %v839, %v1008
        %v1160 = vmax.f32 %v840, %v1010
        %v1161 = vmax.f32 %v841, %v1012
        %v1162 = vmax.f32 %v842, %v1014
        %v1163 = vmax.f32 %v843, %v1016
        %v1164 = vmax.f32 %v844, %v1018
        %v1165 = vmax.f32 %v845, %v1020
        %v1166 = vmax.f32 %v846, %v1022
        %v1167 = vmax.f32 %v847, %v1024
        %v1168 = vmax.f32 %v848, %v1026
        %v1169 = vmax.f32 %v849, %v1028
        %v1170 = vmax.f32 %v850, %v1030
        %v1171 = vmax.f32 %v851, %v1032
        %v1172 = vmax.f32 %v852, %v1034
        %v1173 = vmax.f32 %v853, %v1036
        %v1174 = vmax.f32 %v854, %v1038
        %v1175 = vmax.f32 %v855, %v1040
        %v1176 = vmax.f32 %v856, %v1042
        %v1177 = vmax.f32 %v857, %v1044
        %v1178 = vmax.f32 %v858, %v1046
        %v1179 = vmax.f32 %v859, %v1048
        %v1180 = vmax.f32 %v860, %v1050
        %v1181 = vmax.f32 %v861, %v1052
        %v1182 = vmax.f32 %v862, %v1054
        %vm1183 = vcmask 130048
        %1184 = vst.msk [vmem:[#allocation2] sm:$0xff] %vm1183, 0.0
        %1185 = vst.msk [vmem:[#allocation2 + $0x8] sm:$0xff] %vm1183, 0.0
        %s1186 = scalar_lea.vmem [#allocation2], 528
        %1187 = vst.msk [vmem:[%s1186] sm:$0xff] %vm1183, 0.0
        %1188 = vst.msk [vmem:[%s1186 + $0x8] sm:$0xff] %vm1183, 0.0
        %s1189 = scalar_lea.vmem [#allocation2], 16
        %1190 = vst.msk [vmem:[%s1189] sm:$0xff] %vm1183, %v1119
        %1191 = vst.msk [vmem:[%s1189 + $0x8] sm:$0xff] %vm1183, %v1120
        %1192 = vst.msk [vmem:[%s1189 + $0x10] sm:$0xff] %vm1183, %v1121
        %1193 = vst.msk [vmem:[%s1189 + $0x18] sm:$0xff] %vm1183, %v1122
        %1194 = vst.msk [vmem:[%s1189 + $0x20] sm:$0xff] %vm1183, %v1123
        %1195 = vst.msk [vmem:[%s1189 + $0x28] sm:$0xff] %vm1183, %v1124
        %1196 = vst.msk [vmem:[%s1189 + $0x30] sm:$0xff] %vm1183, %v1125
        %1197 = vst.msk [vmem:[%s1189 + $0x38] sm:$0xff] %vm1183, %v1126
        %1198 = vst.msk [vmem:[%s1189 + $0x40] sm:$0xff] %vm1183, %v1127
        %1199 = vst.msk [vmem:[%s1189 + $0x48] sm:$0xff] %vm1183, %v1128
        %1200 = vst.msk [vmem:[%s1189 + $0x50] sm:$0xff] %vm1183, %v1129
        %1201 = vst.msk [vmem:[%s1189 + $0x58] sm:$0xff] %vm1183, %v1130
        %1202 = vst.msk [vmem:[%s1189 + $0x60] sm:$0xff] %vm1183, %v1131
        %1203 = vst.msk [vmem:[%s1189 + $0x68] sm:$0xff] %vm1183, %v1132
        %1204 = vst.msk [vmem:[%s1189 + $0x70] sm:$0xff] %vm1183, %v1133
        %1205 = vst.msk [vmem:[%s1189 + $0x78] sm:$0xff] %vm1183, %v1134
        %1206 = vst.msk [vmem:[%s1189 + $0x80] sm:$0xff] %vm1183, %v1135
        %1207 = vst.msk [vmem:[%s1189 + $0x88] sm:$0xff] %vm1183, %v1136
        %1208 = vst.msk [vmem:[%s1189 + $0x90] sm:$0xff] %vm1183, %v1137
        %1209 = vst.msk [vmem:[%s1189 + $0x98] sm:$0xff] %vm1183, %v1138
        %1210 = vst.msk [vmem:[%s1189 + $0xa0] sm:$0xff] %vm1183, %v1139
        %1211 = vst.msk [vmem:[%s1189 + $0xa8] sm:$0xff] %vm1183, %v1140
        %1212 = vst.msk [vmem:[%s1189 + $0xb0] sm:$0xff] %vm1183, %v1141
        %1213 = vst.msk [vmem:[%s1189 + $0xb8] sm:$0xff] %vm1183, %v1142
        %1214 = vst.msk [vmem:[%s1189 + $0xc0] sm:$0xff] %vm1183, %v1143
        %1215 = vst.msk [vmem:[%s1189 + $0xc8] sm:$0xff] %vm1183, %v1144
        %1216 = vst.msk [vmem:[%s1189 + $0xd0] sm:$0xff] %vm1183, %v1145
        %1217 = vst.msk [vmem:[%s1189 + $0xd8] sm:$0xff] %vm1183, %v1146
        %1218 = vst.msk [vmem:[%s1189 + $0xe0] sm:$0xff] %vm1183, %v1147
        %1219 = vst.msk [vmem:[%s1189 + $0xe8] sm:$0xff] %vm1183, %v1148
        %1220 = vst.msk [vmem:[%s1189 + $0xf0] sm:$0xff] %vm1183, %v1149
        %1221 = vst.msk [vmem:[%s1189 + $0xf8] sm:$0xff] %vm1183, %v1150
        %1222 = vst.msk [vmem:[%s1189 + $0x100] sm:$0xff] %vm1183, %v1151
        %1223 = vst.msk [vmem:[%s1189 + $0x108] sm:$0xff] %vm1183, %v1152
        %1224 = vst.msk [vmem:[%s1189 + $0x110] sm:$0xff] %vm1183, %v1153
        %1225 = vst.msk [vmem:[%s1189 + $0x118] sm:$0xff] %vm1183, %v1154
        %1226 = vst.msk [vmem:[%s1189 + $0x120] sm:$0xff] %vm1183, %v1155
        %1227 = vst.msk [vmem:[%s1189 + $0x128] sm:$0xff] %vm1183, %v1156
        %1228 = vst.msk [vmem:[%s1189 + $0x130] sm:$0xff] %vm1183, %v1157
        %1229 = vst.msk [vmem:[%s1189 + $0x138] sm:$0xff] %vm1183, %v1158
        %1230 = vst.msk [vmem:[%s1189 + $0x140] sm:$0xff] %vm1183, %v1159
        %1231 = vst.msk [vmem:[%s1189 + $0x148] sm:$0xff] %vm1183, %v1160
        %1232 = vst.msk [vmem:[%s1189 + $0x150] sm:$0xff] %vm1183, %v1161
        %1233 = vst.msk [vmem:[%s1189 + $0x158] sm:$0xff] %vm1183, %v1162
        %1234 = vst.msk [vmem:[%s1189 + $0x160] sm:$0xff] %vm1183, %v1163
        %1235 = vst.msk [vmem:[%s1189 + $0x168] sm:$0xff] %vm1183, %v1164
        %1236 = vst.msk [vmem:[%s1189 + $0x170] sm:$0xff] %vm1183, %v1165
        %1237 = vst.msk [vmem:[%s1189 + $0x178] sm:$0xff] %vm1183, %v1166
        %1238 = vst.msk [vmem:[%s1189 + $0x180] sm:$0xff] %vm1183, %v1167
        %1239 = vst.msk [vmem:[%s1189 + $0x188] sm:$0xff] %vm1183, %v1168
        %1240 = vst.msk [vmem:[%s1189 + $0x190] sm:$0xff] %vm1183, %v1169
        %1241 = vst.msk [vmem:[%s1189 + $0x198] sm:$0xff] %vm1183, %v1170
        %1242 = vst.msk [vmem:[%s1189 + $0x1a0] sm:$0xff] %vm1183, %v1171
        %1243 = vst.msk [vmem:[%s1189 + $0x1a8] sm:$0xff] %vm1183, %v1172
        %1244 = vst.msk [vmem:[%s1189 + $0x1b0] sm:$0xff] %vm1183, %v1173
        %1245 = vst.msk [vmem:[%s1189 + $0x1b8] sm:$0xff] %vm1183, %v1174
        %1246 = vst.msk [vmem:[%s1189 + $0x1c0] sm:$0xff] %vm1183, %v1175
        %1247 = vst.msk [vmem:[%s1189 + $0x1c8] sm:$0xff] %vm1183, %v1176
        %1248 = vst.msk [vmem:[%s1189 + $0x1d0] sm:$0xff] %vm1183, %v1177
        %1249 = vst.msk [vmem:[%s1189 + $0x1d8] sm:$0xff] %vm1183, %v1178
        %1250 = vst.msk [vmem:[%s1189 + $0x1e0] sm:$0xff] %vm1183, %v1179
        %1251 = vst.msk [vmem:[%s1189 + $0x1e8] sm:$0xff] %vm1183, %v1180
        %1252 = vst.msk [vmem:[%s1189 + $0x1f0] sm:$0xff] %vm1183, %v1181
        %1253 = vst.msk [vmem:[%s1189 + $0x1f8] sm:$0xff] %vm1183, %v1182
        %v1254 = vld [vmem:[#allocation2] sm:$0xff]
        %v1255 = vld [vmem:[#allocation2 + $0x8] sm:$0xff]
        %v1256 = vld [vmem:[#allocation2 + $0x10] sm:$0xff]
        %v1257 = vld [vmem:[#allocation2 + $0x18] sm:$0xff]
        %v1258 = vld [vmem:[#allocation2 + $0x20] sm:$0xff]
        %v1259 = vld [vmem:[#allocation2 + $0x28] sm:$0xff]
        %v1260 = vld [vmem:[#allocation2 + $0x30] sm:$0xff]
        %v1261 = vld [vmem:[#allocation2 + $0x38] sm:$0xff]
        %v1262 = vld [vmem:[#allocation2 + $0x40] sm:$0xff]
        %v1263 = vld [vmem:[#allocation2 + $0x48] sm:$0xff]
        %v1264 = vld [vmem:[#allocation2 + $0x50] sm:$0xff]
        %v1265 = vld [vmem:[#allocation2 + $0x58] sm:$0xff]
        %v1266 = vld [vmem:[#allocation2 + $0x60] sm:$0xff]
        %v1267 = vld [vmem:[#allocation2 + $0x68] sm:$0xff]
        %v1268 = vld [vmem:[#allocation2 + $0x70] sm:$0xff]
        %v1269 = vld [vmem:[#allocation2 + $0x78] sm:$0xff]
        %v1270 = vld [vmem:[#allocation2 + $0x80] sm:$0xff]
        %v1271 = vld [vmem:[#allocation2 + $0x88] sm:$0xff]
        %v1272 = vld [vmem:[#allocation2 + $0x90] sm:$0xff]
        %v1273 = vld [vmem:[#allocation2 + $0x98] sm:$0xff]
        %v1274 = vld [vmem:[#allocation2 + $0xa0] sm:$0xff]
        %v1275 = vld [vmem:[#allocation2 + $0xa8] sm:$0xff]
        %v1276 = vld [vmem:[#allocation2 + $0xb0] sm:$0xff]
        %v1277 = vld [vmem:[#allocation2 + $0xb8] sm:$0xff]
        %v1278 = vld [vmem:[#allocation2 + $0xc0] sm:$0xff]
        %v1279 = vld [vmem:[#allocation2 + $0xc8] sm:$0xff]
        %v1280 = vld [vmem:[#allocation2 + $0xd0] sm:$0xff]
        %v1281 = vld [vmem:[#allocation2 + $0xd8] sm:$0xff]
        %v1282 = vld [vmem:[#allocation2 + $0xe0] sm:$0xff]
        %v1283 = vld [vmem:[#allocation2 + $0xe8] sm:$0xff]
        %v1284 = vld [vmem:[#allocation2 + $0xf0] sm:$0xff]
        %v1285 = vld [vmem:[#allocation2 + $0xf8] sm:$0xff]
        %v1286 = vld [vmem:[#allocation2 + $0x100] sm:$0xff]
        %v1287 = vld [vmem:[#allocation2 + $0x108] sm:$0xff]
        %v1288 = vld [vmem:[#allocation2 + $0x110] sm:$0xff]
        %v1289 = vld [vmem:[#allocation2 + $0x118] sm:$0xff]
        %v1290 = vld [vmem:[#allocation2 + $0x120] sm:$0xff]
        %v1291 = vld [vmem:[#allocation2 + $0x128] sm:$0xff]
        %v1292 = vld [vmem:[#allocation2 + $0x130] sm:$0xff]
        %v1293 = vld [vmem:[#allocation2 + $0x138] sm:$0xff]
        %v1294 = vld [vmem:[#allocation2 + $0x140] sm:$0xff]
        %v1295 = vld [vmem:[#allocation2 + $0x148] sm:$0xff]
        %v1296 = vld [vmem:[#allocation2 + $0x150] sm:$0xff]
        %v1297 = vld [vmem:[#allocation2 + $0x158] sm:$0xff]
        %v1298 = vld [vmem:[#allocation2 + $0x160] sm:$0xff]
        %v1299 = vld [vmem:[#allocation2 + $0x168] sm:$0xff]
        %v1300 = vld [vmem:[#allocation2 + $0x170] sm:$0xff]
        %v1301 = vld [vmem:[#allocation2 + $0x178] sm:$0xff]
        %v1302 = vld [vmem:[#allocation2 + $0x180] sm:$0xff]
        %v1303 = vld [vmem:[#allocation2 + $0x188] sm:$0xff]
        %v1304 = vld [vmem:[#allocation2 + $0x190] sm:$0xff]
        %v1305 = vld [vmem:[#allocation2 + $0x198] sm:$0xff]
        %v1306 = vld [vmem:[#allocation2 + $0x1a0] sm:$0xff]
        %v1307 = vld [vmem:[#allocation2 + $0x1a8] sm:$0xff]
        %v1308 = vld [vmem:[#allocation2 + $0x1b0] sm:$0xff]
        %v1309 = vld [vmem:[#allocation2 + $0x1b8] sm:$0xff]
        %v1310 = vld [vmem:[#allocation2 + $0x1c0] sm:$0xff]
        %v1311 = vld [vmem:[#allocation2 + $0x1c8] sm:$0xff]
        %v1312 = vld [vmem:[#allocation2 + $0x1d0] sm:$0xff]
        %v1313 = vld [vmem:[#allocation2 + $0x1d8] sm:$0xff]
        %v1314 = vld [vmem:[#allocation2 + $0x1e0] sm:$0xff]
        %v1315 = vld [vmem:[#allocation2 + $0x1e8] sm:$0xff]
        %v1316 = vld [vmem:[#allocation2 + $0x1f0] sm:$0xff]
        %v1317 = vld [vmem:[#allocation2 + $0x1f8] sm:$0xff]
        %s1318 = scalar_lea.vmem [#allocation2], 8
        %v1319 = vld [vmem:[%s1318] sm:$0xff]
        %v1320 = vld [vmem:[%s1318 + $0x8] sm:$0xff]
        %v1321 = vld [vmem:[%s1318 + $0x10] sm:$0xff]
        %v1322 = vld [vmem:[%s1318 + $0x18] sm:$0xff]
        %v1323 = vld [vmem:[%s1318 + $0x20] sm:$0xff]
        %v1324 = vld [vmem:[%s1318 + $0x28] sm:$0xff]
        %v1325 = vld [vmem:[%s1318 + $0x30] sm:$0xff]
        %v1326 = vld [vmem:[%s1318 + $0x38] sm:$0xff]
        %v1327 = vld [vmem:[%s1318 + $0x40] sm:$0xff]
        %v1328 = vld [vmem:[%s1318 + $0x48] sm:$0xff]
        %v1329 = vld [vmem:[%s1318 + $0x50] sm:$0xff]
        %v1330 = vld [vmem:[%s1318 + $0x58] sm:$0xff]
        %v1331 = vld [vmem:[%s1318 + $0x60] sm:$0xff]
        %v1332 = vld [vmem:[%s1318 + $0x68] sm:$0xff]
        %v1333 = vld [vmem:[%s1318 + $0x70] sm:$0xff]
        %v1334 = vld [vmem:[%s1318 + $0x78] sm:$0xff]
        %v1335 = vld [vmem:[%s1318 + $0x80] sm:$0xff]
        %v1336 = vld [vmem:[%s1318 + $0x88] sm:$0xff]
        %v1337 = vld [vmem:[%s1318 + $0x90] sm:$0xff]
        %v1338 = vld [vmem:[%s1318 + $0x98] sm:$0xff]
        %v1339 = vld [vmem:[%s1318 + $0xa0] sm:$0xff]
        %v1340 = vld [vmem:[%s1318 + $0xa8] sm:$0xff]
        %v1341 = vld [vmem:[%s1318 + $0xb0] sm:$0xff]
        %v1342 = vld [vmem:[%s1318 + $0xb8] sm:$0xff]
        %v1343 = vld [vmem:[%s1318 + $0xc0] sm:$0xff]
        %v1344 = vld [vmem:[%s1318 + $0xc8] sm:$0xff]
        %v1345 = vld [vmem:[%s1318 + $0xd0] sm:$0xff]
        %v1346 = vld [vmem:[%s1318 + $0xd8] sm:$0xff]
        %v1347 = vld [vmem:[%s1318 + $0xe0] sm:$0xff]
        %v1348 = vld [vmem:[%s1318 + $0xe8] sm:$0xff]
        %v1349 = vld [vmem:[%s1318 + $0xf0] sm:$0xff]
        %v1350 = vld [vmem:[%s1318 + $0xf8] sm:$0xff]
        %v1351 = vld [vmem:[%s1318 + $0x100] sm:$0xff]
        %v1352 = vld [vmem:[%s1318 + $0x108] sm:$0xff]
        %v1353 = vld [vmem:[%s1318 + $0x110] sm:$0xff]
        %v1354 = vld [vmem:[%s1318 + $0x118] sm:$0xff]
        %v1355 = vld [vmem:[%s1318 + $0x120] sm:$0xff]
        %v1356 = vld [vmem:[%s1318 + $0x128] sm:$0xff]
        %v1357 = vld [vmem:[%s1318 + $0x130] sm:$0xff]
        %v1358 = vld [vmem:[%s1318 + $0x138] sm:$0xff]
        %v1359 = vld [vmem:[%s1318 + $0x140] sm:$0xff]
        %v1360 = vld [vmem:[%s1318 + $0x148] sm:$0xff]
        %v1361 = vld [vmem:[%s1318 + $0x150] sm:$0xff]
        %v1362 = vld [vmem:[%s1318 + $0x158] sm:$0xff]
        %v1363 = vld [vmem:[%s1318 + $0x160] sm:$0xff]
        %v1364 = vld [vmem:[%s1318 + $0x168] sm:$0xff]
        %v1365 = vld [vmem:[%s1318 + $0x170] sm:$0xff]
        %v1366 = vld [vmem:[%s1318 + $0x178] sm:$0xff]
        %v1367 = vld [vmem:[%s1318 + $0x180] sm:$0xff]
        %v1368 = vld [vmem:[%s1318 + $0x188] sm:$0xff]
        %v1369 = vld [vmem:[%s1318 + $0x190] sm:$0xff]
        %v1370 = vld [vmem:[%s1318 + $0x198] sm:$0xff]
        %v1371 = vld [vmem:[%s1318 + $0x1a0] sm:$0xff]
        %v1372 = vld [vmem:[%s1318 + $0x1a8] sm:$0xff]
        %v1373 = vld [vmem:[%s1318 + $0x1b0] sm:$0xff]
        %v1374 = vld [vmem:[%s1318 + $0x1b8] sm:$0xff]
        %v1375 = vld [vmem:[%s1318 + $0x1c0] sm:$0xff]
        %v1376 = vld [vmem:[%s1318 + $0x1c8] sm:$0xff]
        %v1377 = vld [vmem:[%s1318 + $0x1d0] sm:$0xff]
        %v1378 = vld [vmem:[%s1318 + $0x1d8] sm:$0xff]
        %v1379 = vld [vmem:[%s1318 + $0x1e0] sm:$0xff]
        %v1380 = vld [vmem:[%s1318 + $0x1e8] sm:$0xff]
        %v1381 = vld [vmem:[%s1318 + $0x1f0] sm:$0xff]
        %v1382 = vld [vmem:[%s1318 + $0x1f8] sm:$0xff]
        %v1383 = vld [vmem:[%s1189] sm:$0xff]
        %v1384 = vld [vmem:[%s1189 + $0x8] sm:$0xff]
        %v1385 = vld [vmem:[%s1189 + $0x10] sm:$0xff]
        %v1386 = vld [vmem:[%s1189 + $0x18] sm:$0xff]
        %v1387 = vld [vmem:[%s1189 + $0x20] sm:$0xff]
        %v1388 = vld [vmem:[%s1189 + $0x28] sm:$0xff]
        %v1389 = vld [vmem:[%s1189 + $0x30] sm:$0xff]
        %v1390 = vld [vmem:[%s1189 + $0x38] sm:$0xff]
        %v1391 = vld [vmem:[%s1189 + $0x40] sm:$0xff]
        %v1392 = vld [vmem:[%s1189 + $0x48] sm:$0xff]
        %v1393 = vld [vmem:[%s1189 + $0x50] sm:$0xff]
        %v1394 = vld [vmem:[%s1189 + $0x58] sm:$0xff]
        %v1395 = vld [vmem:[%s1189 + $0x60] sm:$0xff]
        %v1396 = vld [vmem:[%s1189 + $0x68] sm:$0xff]
        %v1397 = vld [vmem:[%s1189 + $0x70] sm:$0xff]
        %v1398 = vld [vmem:[%s1189 + $0x78] sm:$0xff]
        %v1399 = vld [vmem:[%s1189 + $0x80] sm:$0xff]
        %v1400 = vld [vmem:[%s1189 + $0x88] sm:$0xff]
        %v1401 = vld [vmem:[%s1189 + $0x90] sm:$0xff]
        %v1402 = vld [vmem:[%s1189 + $0x98] sm:$0xff]
        %v1403 = vld [vmem:[%s1189 + $0xa0] sm:$0xff]
        %v1404 = vld [vmem:[%s1189 + $0xa8] sm:$0xff]
        %v1405 = vld [vmem:[%s1189 + $0xb0] sm:$0xff]
        %v1406 = vld [vmem:[%s1189 + $0xb8] sm:$0xff]
        %v1407 = vld [vmem:[%s1189 + $0xc0] sm:$0xff]
        %v1408 = vld [vmem:[%s1189 + $0xc8] sm:$0xff]
        %v1409 = vld [vmem:[%s1189 + $0xd0] sm:$0xff]
        %v1410 = vld [vmem:[%s1189 + $0xd8] sm:$0xff]
        %v1411 = vld [vmem:[%s1189 + $0xe0] sm:$0xff]
        %v1412 = vld [vmem:[%s1189 + $0xe8] sm:$0xff]
        %v1413 = vld [vmem:[%s1189 + $0xf0] sm:$0xff]
        %v1414 = vld [vmem:[%s1189 + $0xf8] sm:$0xff]
        %v1415 = vld [vmem:[%s1189 + $0x100] sm:$0xff]
        %v1416 = vld [vmem:[%s1189 + $0x108] sm:$0xff]
        %v1417 = vld [vmem:[%s1189 + $0x110] sm:$0xff]
        %v1418 = vld [vmem:[%s1189 + $0x118] sm:$0xff]
        %v1419 = vld [vmem:[%s1189 + $0x120] sm:$0xff]
        %v1420 = vld [vmem:[%s1189 + $0x128] sm:$0xff]
        %v1421 = vld [vmem:[%s1189 + $0x130] sm:$0xff]
        %v1422 = vld [vmem:[%s1189 + $0x138] sm:$0xff]
        %v1423 = vld [vmem:[%s1189 + $0x140] sm:$0xff]
        %v1424 = vld [vmem:[%s1189 + $0x148] sm:$0xff]
        %v1425 = vld [vmem:[%s1189 + $0x150] sm:$0xff]
        %v1426 = vld [vmem:[%s1189 + $0x158] sm:$0xff]
        %v1427 = vld [vmem:[%s1189 + $0x160] sm:$0xff]
        %v1428 = vld [vmem:[%s1189 + $0x168] sm:$0xff]
        %v1429 = vld [vmem:[%s1189 + $0x170] sm:$0xff]
        %v1430 = vld [vmem:[%s1189 + $0x178] sm:$0xff]
        %v1431 = vld [vmem:[%s1189 + $0x180] sm:$0xff]
        %v1432 = vld [vmem:[%s1189 + $0x188] sm:$0xff]
        %v1433 = vld [vmem:[%s1189 + $0x190] sm:$0xff]
        %v1434 = vld [vmem:[%s1189 + $0x198] sm:$0xff]
        %v1435 = vld [vmem:[%s1189 + $0x1a0] sm:$0xff]
        %v1436 = vld [vmem:[%s1189 + $0x1a8] sm:$0xff]
        %v1437 = vld [vmem:[%s1189 + $0x1b0] sm:$0xff]
        %v1438 = vld [vmem:[%s1189 + $0x1b8] sm:$0xff]
        %v1439 = vld [vmem:[%s1189 + $0x1c0] sm:$0xff]
        %v1440 = vld [vmem:[%s1189 + $0x1c8] sm:$0xff]
        %v1441 = vld [vmem:[%s1189 + $0x1d0] sm:$0xff]
        %v1442 = vld [vmem:[%s1189 + $0x1d8] sm:$0xff]
        %v1443 = vld [vmem:[%s1189 + $0x1e0] sm:$0xff]
        %v1444 = vld [vmem:[%s1189 + $0x1e8] sm:$0xff]
        %v1445 = vld [vmem:[%s1189 + $0x1f0] sm:$0xff]
        %v1446 = vld [vmem:[%s1189 + $0x1f8] sm:$0xff]
        %s1447 = scalar_lea.vmem [#allocation2], 24
        %v1448 = vld [vmem:[%s1447] sm:$0xff]
        %v1449 = vld [vmem:[%s1447 + $0x8] sm:$0xff]
        %v1450 = vld [vmem:[%s1447 + $0x10] sm:$0xff]
        %v1451 = vld [vmem:[%s1447 + $0x18] sm:$0xff]
        %v1452 = vld [vmem:[%s1447 + $0x20] sm:$0xff]
        %v1453 = vld [vmem:[%s1447 + $0x28] sm:$0xff]
        %v1454 = vld [vmem:[%s1447 + $0x30] sm:$0xff]
        %v1455 = vld [vmem:[%s1447 + $0x38] sm:$0xff]
        %v1456 = vld [vmem:[%s1447 + $0x40] sm:$0xff]
        %v1457 = vld [vmem:[%s1447 + $0x48] sm:$0xff]
        %v1458 = vld [vmem:[%s1447 + $0x50] sm:$0xff]
        %v1459 = vld [vmem:[%s1447 + $0x58] sm:$0xff]
        %v1460 = vld [vmem:[%s1447 + $0x60] sm:$0xff]
        %v1461 = vld [vmem:[%s1447 + $0x68] sm:$0xff]
        %v1462 = vld [vmem:[%s1447 + $0x70] sm:$0xff]
        %v1463 = vld [vmem:[%s1447 + $0x78] sm:$0xff]
        %v1464 = vld [vmem:[%s1447 + $0x80] sm:$0xff]
        %v1465 = vld [vmem:[%s1447 + $0x88] sm:$0xff]
        %v1466 = vld [vmem:[%s1447 + $0x90] sm:$0xff]
        %v1467 = vld [vmem:[%s1447 + $0x98] sm:$0xff]
        %v1468 = vld [vmem:[%s1447 + $0xa0] sm:$0xff]
        %v1469 = vld [vmem:[%s1447 + $0xa8] sm:$0xff]
        %v1470 = vld [vmem:[%s1447 + $0xb0] sm:$0xff]
        %v1471 = vld [vmem:[%s1447 + $0xb8] sm:$0xff]
        %v1472 = vld [vmem:[%s1447 + $0xc0] sm:$0xff]
        %v1473 = vld [vmem:[%s1447 + $0xc8] sm:$0xff]
        %v1474 = vld [vmem:[%s1447 + $0xd0] sm:$0xff]
        %v1475 = vld [vmem:[%s1447 + $0xd8] sm:$0xff]
        %v1476 = vld [vmem:[%s1447 + $0xe0] sm:$0xff]
        %v1477 = vld [vmem:[%s1447 + $0xe8] sm:$0xff]
        %v1478 = vld [vmem:[%s1447 + $0xf0] sm:$0xff]
        %v1479 = vld [vmem:[%s1447 + $0xf8] sm:$0xff]
        %v1480 = vld [vmem:[%s1447 + $0x100] sm:$0xff]
        %v1481 = vld [vmem:[%s1447 + $0x108] sm:$0xff]
        %v1482 = vld [vmem:[%s1447 + $0x110] sm:$0xff]
        %v1483 = vld [vmem:[%s1447 + $0x118] sm:$0xff]
        %v1484 = vld [vmem:[%s1447 + $0x120] sm:$0xff]
        %v1485 = vld [vmem:[%s1447 + $0x128] sm:$0xff]
        %v1486 = vld [vmem:[%s1447 + $0x130] sm:$0xff]
        %v1487 = vld [vmem:[%s1447 + $0x138] sm:$0xff]
        %v1488 = vld [vmem:[%s1447 + $0x140] sm:$0xff]
        %v1489 = vld [vmem:[%s1447 + $0x148] sm:$0xff]
        %v1490 = vld [vmem:[%s1447 + $0x150] sm:$0xff]
        %v1491 = vld [vmem:[%s1447 + $0x158] sm:$0xff]
        %v1492 = vld [vmem:[%s1447 + $0x160] sm:$0xff]
        %v1493 = vld [vmem:[%s1447 + $0x168] sm:$0xff]
        %v1494 = vld [vmem:[%s1447 + $0x170] sm:$0xff]
        %v1495 = vld [vmem:[%s1447 + $0x178] sm:$0xff]
        %v1496 = vld [vmem:[%s1447 + $0x180] sm:$0xff]
        %v1497 = vld [vmem:[%s1447 + $0x188] sm:$0xff]
        %v1498 = vld [vmem:[%s1447 + $0x190] sm:$0xff]
        %v1499 = vld [vmem:[%s1447 + $0x198] sm:$0xff]
        %v1500 = vld [vmem:[%s1447 + $0x1a0] sm:$0xff]
        %v1501 = vld [vmem:[%s1447 + $0x1a8] sm:$0xff]
        %v1502 = vld [vmem:[%s1447 + $0x1b0] sm:$0xff]
        %v1503 = vld [vmem:[%s1447 + $0x1b8] sm:$0xff]
        %v1504 = vld [vmem:[%s1447 + $0x1c0] sm:$0xff]
        %v1505 = vld [vmem:[%s1447 + $0x1c8] sm:$0xff]
        %v1506 = vld [vmem:[%s1447 + $0x1d0] sm:$0xff]
        %v1507 = vld [vmem:[%s1447 + $0x1d8] sm:$0xff]
        %v1508 = vld [vmem:[%s1447 + $0x1e0] sm:$0xff]
        %v1509 = vld [vmem:[%s1447 + $0x1e8] sm:$0xff]
        %v1510 = vld [vmem:[%s1447 + $0x1f0] sm:$0xff]
        %v1511 = vld [vmem:[%s1447 + $0x1f8] sm:$0xff]
        %s1512 = scalar_lea.vmem [#allocation2], 32
        %v1513 = vld [vmem:[%s1512] sm:$0xff]
        %v1514 = vld [vmem:[%s1512 + $0x8] sm:$0xff]
        %v1515 = vld [vmem:[%s1512 + $0x10] sm:$0xff]
        %v1516 = vld [vmem:[%s1512 + $0x18] sm:$0xff]
        %v1517 = vld [vmem:[%s1512 + $0x20] sm:$0xff]
        %v1518 = vld [vmem:[%s1512 + $0x28] sm:$0xff]
        %v1519 = vld [vmem:[%s1512 + $0x30] sm:$0xff]
        %v1520 = vld [vmem:[%s1512 + $0x38] sm:$0xff]
        %v1521 = vld [vmem:[%s1512 + $0x40] sm:$0xff]
        %v1522 = vld [vmem:[%s1512 + $0x48] sm:$0xff]
        %v1523 = vld [vmem:[%s1512 + $0x50] sm:$0xff]
        %v1524 = vld [vmem:[%s1512 + $0x58] sm:$0xff]
        %v1525 = vld [vmem:[%s1512 + $0x60] sm:$0xff]
        %v1526 = vld [vmem:[%s1512 + $0x68] sm:$0xff]
        %v1527 = vld [vmem:[%s1512 + $0x70] sm:$0xff]
        %v1528 = vld [vmem:[%s1512 + $0x78] sm:$0xff]
        %v1529 = vld [vmem:[%s1512 + $0x80] sm:$0xff]
        %v1530 = vld [vmem:[%s1512 + $0x88] sm:$0xff]
        %v1531 = vld [vmem:[%s1512 + $0x90] sm:$0xff]
        %v1532 = vld [vmem:[%s1512 + $0x98] sm:$0xff]
        %v1533 = vld [vmem:[%s1512 + $0xa0] sm:$0xff]
        %v1534 = vld [vmem:[%s1512 + $0xa8] sm:$0xff]
        %v1535 = vld [vmem:[%s1512 + $0xb0] sm:$0xff]
        %v1536 = vld [vmem:[%s1512 + $0xb8] sm:$0xff]
        %v1537 = vld [vmem:[%s1512 + $0xc0] sm:$0xff]
        %v1538 = vld [vmem:[%s1512 + $0xc8] sm:$0xff]
        %v1539 = vld [vmem:[%s1512 + $0xd0] sm:$0xff]
        %v1540 = vld [vmem:[%s1512 + $0xd8] sm:$0xff]
        %v1541 = vld [vmem:[%s1512 + $0xe0] sm:$0xff]
        %v1542 = vld [vmem:[%s1512 + $0xe8] sm:$0xff]
        %v1543 = vld [vmem:[%s1512 + $0xf0] sm:$0xff]
        %v1544 = vld [vmem:[%s1512 + $0xf8] sm:$0xff]
        %v1545 = vld [vmem:[%s1512 + $0x100] sm:$0xff]
        %v1546 = vld [vmem:[%s1512 + $0x108] sm:$0xff]
        %v1547 = vld [vmem:[%s1512 + $0x110] sm:$0xff]
        %v1548 = vld [vmem:[%s1512 + $0x118] sm:$0xff]
        %v1549 = vld [vmem:[%s1512 + $0x120] sm:$0xff]
        %v1550 = vld [vmem:[%s1512 + $0x128] sm:$0xff]
        %v1551 = vld [vmem:[%s1512 + $0x130] sm:$0xff]
        %v1552 = vld [vmem:[%s1512 + $0x138] sm:$0xff]
        %v1553 = vld [vmem:[%s1512 + $0x140] sm:$0xff]
        %v1554 = vld [vmem:[%s1512 + $0x148] sm:$0xff]
        %v1555 = vld [vmem:[%s1512 + $0x150] sm:$0xff]
        %v1556 = vld [vmem:[%s1512 + $0x158] sm:$0xff]
        %v1557 = vld [vmem:[%s1512 + $0x160] sm:$0xff]
        %v1558 = vld [vmem:[%s1512 + $0x168] sm:$0xff]
        %v1559 = vld [vmem:[%s1512 + $0x170] sm:$0xff]
        %v1560 = vld [vmem:[%s1512 + $0x178] sm:$0xff]
        %v1561 = vld [vmem:[%s1512 + $0x180] sm:$0xff]
        %v1562 = vld [vmem:[%s1512 + $0x188] sm:$0xff]
        %v1563 = vld [vmem:[%s1512 + $0x190] sm:$0xff]
        %v1564 = vld [vmem:[%s1512 + $0x198] sm:$0xff]
        %v1565 = vld [vmem:[%s1512 + $0x1a0] sm:$0xff]
        %v1566 = vld [vmem:[%s1512 + $0x1a8] sm:$0xff]
        %v1567 = vld [vmem:[%s1512 + $0x1b0] sm:$0xff]
        %v1568 = vld [vmem:[%s1512 + $0x1b8] sm:$0xff]
        %v1569 = vld [vmem:[%s1512 + $0x1c0] sm:$0xff]
        %v1570 = vld [vmem:[%s1512 + $0x1c8] sm:$0xff]
        %v1571 = vld [vmem:[%s1512 + $0x1d0] sm:$0xff]
        %v1572 = vld [vmem:[%s1512 + $0x1d8] sm:$0xff]
        %v1573 = vld [vmem:[%s1512 + $0x1e0] sm:$0xff]
        %v1574 = vld [vmem:[%s1512 + $0x1e8] sm:$0xff]
        %v1575 = vld [vmem:[%s1512 + $0x1f0] sm:$0xff]
        %v1576 = vld [vmem:[%s1512 + $0x1f8] sm:$0xff]
        %1641 = vrot.lane.b32.xlu0 %v1319, 16
        %v1642 = vpop.permute.xlu0 %1641
        %1643 = vrot.lane.b32.xlu0 %v1320, 16
        %v1644 = vpop.permute.xlu0 %1643
        %1645 = vrot.lane.b32.xlu0 %v1321, 16
        %v1646 = vpop.permute.xlu0 %1645
        %1647 = vrot.lane.b32.xlu0 %v1322, 16
        %v1648 = vpop.permute.xlu0 %1647
        %1649 = vrot.lane.b32.xlu0 %v1323, 16
        %v1650 = vpop.permute.xlu0 %1649
        %1651 = vrot.lane.b32.xlu0 %v1324, 16
        %v1652 = vpop.permute.xlu0 %1651
        %1653 = vrot.lane.b32.xlu0 %v1325, 16
        %v1654 = vpop.permute.xlu0 %1653
        %1655 = vrot.lane.b32.xlu0 %v1326, 16
        %v1656 = vpop.permute.xlu0 %1655
        %1657 = vrot.lane.b32.xlu0 %v1327, 16
        %v1658 = vpop.permute.xlu0 %1657
        %1659 = vrot.lane.b32.xlu0 %v1328, 16
        %v1660 = vpop.permute.xlu0 %1659
        %1661 = vrot.lane.b32.xlu0 %v1329, 16
        %v1662 = vpop.permute.xlu0 %1661
        %1663 = vrot.lane.b32.xlu0 %v1330, 16
        %v1664 = vpop.permute.xlu0 %1663
        %1665 = vrot.lane.b32.xlu0 %v1331, 16
        %v1666 = vpop.permute.xlu0 %1665
        %1667 = vrot.lane.b32.xlu0 %v1332, 16
        %v1668 = vpop.permute.xlu0 %1667
        %1669 = vrot.lane.b32.xlu0 %v1333, 16
        %v1670 = vpop.permute.xlu0 %1669
        %1671 = vrot.lane.b32.xlu0 %v1334, 16
        %v1672 = vpop.permute.xlu0 %1671
        %1673 = vrot.lane.b32.xlu0 %v1335, 16
        %v1674 = vpop.permute.xlu0 %1673
        %1675 = vrot.lane.b32.xlu0 %v1336, 16
        %v1676 = vpop.permute.xlu0 %1675
        %1677 = vrot.lane.b32.xlu0 %v1337, 16
        %v1678 = vpop.permute.xlu0 %1677
        %1679 = vrot.lane.b32.xlu0 %v1338, 16
        %v1680 = vpop.permute.xlu0 %1679
        %1681 = vrot.lane.b32.xlu0 %v1339, 16
        %v1682 = vpop.permute.xlu0 %1681
        %1683 = vrot.lane.b32.xlu0 %v1340, 16
        %v1684 = vpop.permute.xlu0 %1683
        %1685 = vrot.lane.b32.xlu0 %v1341, 16
        %v1686 = vpop.permute.xlu0 %1685
        %1687 = vrot.lane.b32.xlu0 %v1342, 16
        %v1688 = vpop.permute.xlu0 %1687
        %1689 = vrot.lane.b32.xlu0 %v1343, 16
        %v1690 = vpop.permute.xlu0 %1689
        %1691 = vrot.lane.b32.xlu0 %v1344, 16
        %v1692 = vpop.permute.xlu0 %1691
        %1693 = vrot.lane.b32.xlu0 %v1345, 16
        %v1694 = vpop.permute.xlu0 %1693
        %1695 = vrot.lane.b32.xlu0 %v1346, 16
        %v1696 = vpop.permute.xlu0 %1695
        %1697 = vrot.lane.b32.xlu0 %v1347, 16
        %v1698 = vpop.permute.xlu0 %1697
        %1699 = vrot.lane.b32.xlu0 %v1348, 16
        %v1700 = vpop.permute.xlu0 %1699
        %1701 = vrot.lane.b32.xlu0 %v1349, 16
        %v1702 = vpop.permute.xlu0 %1701
        %1703 = vrot.lane.b32.xlu0 %v1350, 16
        %v1704 = vpop.permute.xlu0 %1703
        %1705 = vrot.lane.b32.xlu0 %v1351, 16
        %v1706 = vpop.permute.xlu0 %1705
        %1707 = vrot.lane.b32.xlu0 %v1352, 16
        %v1708 = vpop.permute.xlu0 %1707
        %1709 = vrot.lane.b32.xlu0 %v1353, 16
        %v1710 = vpop.permute.xlu0 %1709
        %1711 = vrot.lane.b32.xlu0 %v1354, 16
        %v1712 = vpop.permute.xlu0 %1711
        %1713 = vrot.lane.b32.xlu0 %v1355, 16
        %v1714 = vpop.permute.xlu0 %1713
        %1715 = vrot.lane.b32.xlu0 %v1356, 16
        %v1716 = vpop.permute.xlu0 %1715
        %1717 = vrot.lane.b32.xlu0 %v1357, 16
        %v1718 = vpop.permute.xlu0 %1717
        %1719 = vrot.lane.b32.xlu0 %v1358, 16
        %v1720 = vpop.permute.xlu0 %1719
        %1721 = vrot.lane.b32.xlu0 %v1359, 16
        %v1722 = vpop.permute.xlu0 %1721
        %1723 = vrot.lane.b32.xlu0 %v1360, 16
        %v1724 = vpop.permute.xlu0 %1723
        %1725 = vrot.lane.b32.xlu0 %v1361, 16
        %v1726 = vpop.permute.xlu0 %1725
        %1727 = vrot.lane.b32.xlu0 %v1362, 16
        %v1728 = vpop.permute.xlu0 %1727
        %1729 = vrot.lane.b32.xlu0 %v1363, 16
        %v1730 = vpop.permute.xlu0 %1729
        %1731 = vrot.lane.b32.xlu0 %v1364, 16
        %v1732 = vpop.permute.xlu0 %1731
        %1733 = vrot.lane.b32.xlu0 %v1365, 16
        %v1734 = vpop.permute.xlu0 %1733
        %1735 = vrot.lane.b32.xlu0 %v1366, 16
        %v1736 = vpop.permute.xlu0 %1735
        %1737 = vrot.lane.b32.xlu0 %v1367, 16
        %v1738 = vpop.permute.xlu0 %1737
        %1739 = vrot.lane.b32.xlu0 %v1368, 16
        %v1740 = vpop.permute.xlu0 %1739
        %1741 = vrot.lane.b32.xlu0 %v1369, 16
        %v1742 = vpop.permute.xlu0 %1741
        %1743 = vrot.lane.b32.xlu0 %v1370, 16
        %v1744 = vpop.permute.xlu0 %1743
        %1745 = vrot.lane.b32.xlu0 %v1371, 16
        %v1746 = vpop.permute.xlu0 %1745
        %1747 = vrot.lane.b32.xlu0 %v1372, 16
        %v1748 = vpop.permute.xlu0 %1747
        %1749 = vrot.lane.b32.xlu0 %v1373, 16
        %v1750 = vpop.permute.xlu0 %1749
        %1751 = vrot.lane.b32.xlu0 %v1374, 16
        %v1752 = vpop.permute.xlu0 %1751
        %1753 = vrot.lane.b32.xlu0 %v1375, 16
        %v1754 = vpop.permute.xlu0 %1753
        %1755 = vrot.lane.b32.xlu0 %v1376, 16
        %v1756 = vpop.permute.xlu0 %1755
        %1757 = vrot.lane.b32.xlu0 %v1377, 16
        %v1758 = vpop.permute.xlu0 %1757
        %1759 = vrot.lane.b32.xlu0 %v1378, 16
        %v1760 = vpop.permute.xlu0 %1759
        %1761 = vrot.lane.b32.xlu0 %v1379, 16
        %v1762 = vpop.permute.xlu0 %1761
        %1763 = vrot.lane.b32.xlu0 %v1380, 16
        %v1764 = vpop.permute.xlu0 %1763
        %1765 = vrot.lane.b32.xlu0 %v1381, 16
        %v1766 = vpop.permute.xlu0 %1765
        %1767 = vrot.lane.b32.xlu0 %v1382, 16
        %v1768 = vpop.permute.xlu0 %1767
        %1897 = vrot.lane.b32.xlu0 %v1383, 32
        %v1898 = vpop.permute.xlu0 %1897
        %1899 = vrot.lane.b32.xlu0 %v1384, 32
        %v1900 = vpop.permute.xlu0 %1899
        %1901 = vrot.lane.b32.xlu0 %v1385, 32
        %v1902 = vpop.permute.xlu0 %1901
        %1903 = vrot.lane.b32.xlu0 %v1386, 32
        %v1904 = vpop.permute.xlu0 %1903
        %1905 = vrot.lane.b32.xlu0 %v1387, 32
        %v1906 = vpop.permute.xlu0 %1905
        %1907 = vrot.lane.b32.xlu0 %v1388, 32
        %v1908 = vpop.permute.xlu0 %1907
        %1909 = vrot.lane.b32.xlu0 %v1389, 32
        %v1910 = vpop.permute.xlu0 %1909
        %1911 = vrot.lane.b32.xlu0 %v1390, 32
        %v1912 = vpop.permute.xlu0 %1911
        %1913 = vrot.lane.b32.xlu0 %v1391, 32
        %v1914 = vpop.permute.xlu0 %1913
        %1915 = vrot.lane.b32.xlu0 %v1392, 32
        %v1916 = vpop.permute.xlu0 %1915
        %1917 = vrot.lane.b32.xlu0 %v1393, 32
        %v1918 = vpop.permute.xlu0 %1917
        %1919 = vrot.lane.b32.xlu0 %v1394, 32
        %v1920 = vpop.permute.xlu0 %1919
        %1921 = vrot.lane.b32.xlu0 %v1395, 32
        %v1922 = vpop.permute.xlu0 %1921
        %1923 = vrot.lane.b32.xlu0 %v1396, 32
        %v1924 = vpop.permute.xlu0 %1923
        %1925 = vrot.lane.b32.xlu0 %v1397, 32
        %v1926 = vpop.permute.xlu0 %1925
        %1927 = vrot.lane.b32.xlu0 %v1398, 32
        %v1928 = vpop.permute.xlu0 %1927
        %1929 = vrot.lane.b32.xlu0 %v1399, 32
        %v1930 = vpop.permute.xlu0 %1929
        %1931 = vrot.lane.b32.xlu0 %v1400, 32
        %v1932 = vpop.permute.xlu0 %1931
        %1933 = vrot.lane.b32.xlu0 %v1401, 32
        %v1934 = vpop.permute.xlu0 %1933
        %1935 = vrot.lane.b32.xlu0 %v1402, 32
        %v1936 = vpop.permute.xlu0 %1935
        %1937 = vrot.lane.b32.xlu0 %v1403, 32
        %v1938 = vpop.permute.xlu0 %1937
        %1939 = vrot.lane.b32.xlu0 %v1404, 32
        %v1940 = vpop.permute.xlu0 %1939
        %1941 = vrot.lane.b32.xlu0 %v1405, 32
        %v1942 = vpop.permute.xlu0 %1941
        %1943 = vrot.lane.b32.xlu0 %v1406, 32
        %v1944 = vpop.permute.xlu0 %1943
        %1945 = vrot.lane.b32.xlu0 %v1407, 32
        %v1946 = vpop.permute.xlu0 %1945
        %1947 = vrot.lane.b32.xlu0 %v1408, 32
        %v1948 = vpop.permute.xlu0 %1947
        %1949 = vrot.lane.b32.xlu0 %v1409, 32
        %v1950 = vpop.permute.xlu0 %1949
        %1951 = vrot.lane.b32.xlu0 %v1410, 32
        %v1952 = vpop.permute.xlu0 %1951
        %1953 = vrot.lane.b32.xlu0 %v1411, 32
        %v1954 = vpop.permute.xlu0 %1953
        %1955 = vrot.lane.b32.xlu0 %v1412, 32
        %v1956 = vpop.permute.xlu0 %1955
        %1957 = vrot.lane.b32.xlu0 %v1413, 32
        %v1958 = vpop.permute.xlu0 %1957
        %1959 = vrot.lane.b32.xlu0 %v1414, 32
        %v1960 = vpop.permute.xlu0 %1959
        %1961 = vrot.lane.b32.xlu0 %v1415, 32
        %v1962 = vpop.permute.xlu0 %1961
        %1963 = vrot.lane.b32.xlu0 %v1416, 32
        %v1964 = vpop.permute.xlu0 %1963
        %1965 = vrot.lane.b32.xlu0 %v1417, 32
        %v1966 = vpop.permute.xlu0 %1965
        %1967 = vrot.lane.b32.xlu0 %v1418, 32
        %v1968 = vpop.permute.xlu0 %1967
        %1969 = vrot.lane.b32.xlu0 %v1419, 32
        %v1970 = vpop.permute.xlu0 %1969
        %1971 = vrot.lane.b32.xlu0 %v1420, 32
        %v1972 = vpop.permute.xlu0 %1971
        %1973 = vrot.lane.b32.xlu0 %v1421, 32
        %v1974 = vpop.permute.xlu0 %1973
        %1975 = vrot.lane.b32.xlu0 %v1422, 32
        %v1976 = vpop.permute.xlu0 %1975
        %1977 = vrot.lane.b32.xlu0 %v1423, 32
        %v1978 = vpop.permute.xlu0 %1977
        %1979 = vrot.lane.b32.xlu0 %v1424, 32
        %v1980 = vpop.permute.xlu0 %1979
        %1981 = vrot.lane.b32.xlu0 %v1425, 32
        %v1982 = vpop.permute.xlu0 %1981
        %1983 = vrot.lane.b32.xlu0 %v1426, 32
        %v1984 = vpop.permute.xlu0 %1983
        %1985 = vrot.lane.b32.xlu0 %v1427, 32
        %v1986 = vpop.permute.xlu0 %1985
        %1987 = vrot.lane.b32.xlu0 %v1428, 32
        %v1988 = vpop.permute.xlu0 %1987
        %1989 = vrot.lane.b32.xlu0 %v1429, 32
        %v1990 = vpop.permute.xlu0 %1989
        %1991 = vrot.lane.b32.xlu0 %v1430, 32
        %v1992 = vpop.permute.xlu0 %1991
        %1993 = vrot.lane.b32.xlu0 %v1431, 32
        %v1994 = vpop.permute.xlu0 %1993
        %1995 = vrot.lane.b32.xlu0 %v1432, 32
        %v1996 = vpop.permute.xlu0 %1995
        %1997 = vrot.lane.b32.xlu0 %v1433, 32
        %v1998 = vpop.permute.xlu0 %1997
        %1999 = vrot.lane.b32.xlu0 %v1434, 32
        %v2000 = vpop.permute.xlu0 %1999
        %2001 = vrot.lane.b32.xlu0 %v1435, 32
        %v2002 = vpop.permute.xlu0 %2001
        %2003 = vrot.lane.b32.xlu0 %v1436, 32
        %v2004 = vpop.permute.xlu0 %2003
        %2005 = vrot.lane.b32.xlu0 %v1437, 32
        %v2006 = vpop.permute.xlu0 %2005
        %2007 = vrot.lane.b32.xlu0 %v1438, 32
        %v2008 = vpop.permute.xlu0 %2007
        %2009 = vrot.lane.b32.xlu0 %v1439, 32
        %v2010 = vpop.permute.xlu0 %2009
        %2011 = vrot.lane.b32.xlu0 %v1440, 32
        %v2012 = vpop.permute.xlu0 %2011
        %2013 = vrot.lane.b32.xlu0 %v1441, 32
        %v2014 = vpop.permute.xlu0 %2013
        %2015 = vrot.lane.b32.xlu0 %v1442, 32
        %v2016 = vpop.permute.xlu0 %2015
        %2017 = vrot.lane.b32.xlu0 %v1443, 32
        %v2018 = vpop.permute.xlu0 %2017
        %2019 = vrot.lane.b32.xlu0 %v1444, 32
        %v2020 = vpop.permute.xlu0 %2019
        %2021 = vrot.lane.b32.xlu0 %v1445, 32
        %v2022 = vpop.permute.xlu0 %2021
        %2023 = vrot.lane.b32.xlu0 %v1446, 32
        %v2024 = vpop.permute.xlu0 %2023
        %2153 = vrot.lane.b32.xlu0 %v1448, 48
        %v2154 = vpop.permute.xlu0 %2153
        %2155 = vrot.lane.b32.xlu0 %v1449, 48
        %v2156 = vpop.permute.xlu0 %2155
        %2157 = vrot.lane.b32.xlu0 %v1450, 48
        %v2158 = vpop.permute.xlu0 %2157
        %2159 = vrot.lane.b32.xlu0 %v1451, 48
        %v2160 = vpop.permute.xlu0 %2159
        %2161 = vrot.lane.b32.xlu0 %v1452, 48
        %v2162 = vpop.permute.xlu0 %2161
        %2163 = vrot.lane.b32.xlu0 %v1453, 48
        %v2164 = vpop.permute.xlu0 %2163
        %2165 = vrot.lane.b32.xlu0 %v1454, 48
        %v2166 = vpop.permute.xlu0 %2165
        %2167 = vrot.lane.b32.xlu0 %v1455, 48
        %v2168 = vpop.permute.xlu0 %2167
        %2169 = vrot.lane.b32.xlu0 %v1456, 48
        %v2170 = vpop.permute.xlu0 %2169
        %2171 = vrot.lane.b32.xlu0 %v1457, 48
        %v2172 = vpop.permute.xlu0 %2171
        %2173 = vrot.lane.b32.xlu0 %v1458, 48
        %v2174 = vpop.permute.xlu0 %2173
        %2175 = vrot.lane.b32.xlu0 %v1459, 48
        %v2176 = vpop.permute.xlu0 %2175
        %2177 = vrot.lane.b32.xlu0 %v1460, 48
        %v2178 = vpop.permute.xlu0 %2177
        %2179 = vrot.lane.b32.xlu0 %v1461, 48
        %v2180 = vpop.permute.xlu0 %2179
        %2181 = vrot.lane.b32.xlu0 %v1462, 48
        %v2182 = vpop.permute.xlu0 %2181
        %2183 = vrot.lane.b32.xlu0 %v1463, 48
        %v2184 = vpop.permute.xlu0 %2183
        %2185 = vrot.lane.b32.xlu0 %v1464, 48
        %v2186 = vpop.permute.xlu0 %2185
        %2187 = vrot.lane.b32.xlu0 %v1465, 48
        %v2188 = vpop.permute.xlu0 %2187
        %2189 = vrot.lane.b32.xlu0 %v1466, 48
        %v2190 = vpop.permute.xlu0 %2189
        %2191 = vrot.lane.b32.xlu0 %v1467, 48
        %v2192 = vpop.permute.xlu0 %2191
        %2193 = vrot.lane.b32.xlu0 %v1468, 48
        %v2194 = vpop.permute.xlu0 %2193
        %2195 = vrot.lane.b32.xlu0 %v1469, 48
        %v2196 = vpop.permute.xlu0 %2195
        %2197 = vrot.lane.b32.xlu0 %v1470, 48
        %v2198 = vpop.permute.xlu0 %2197
        %2199 = vrot.lane.b32.xlu0 %v1471, 48
        %v2200 = vpop.permute.xlu0 %2199
        %2201 = vrot.lane.b32.xlu0 %v1472, 48
        %v2202 = vpop.permute.xlu0 %2201
        %2203 = vrot.lane.b32.xlu0 %v1473, 48
        %v2204 = vpop.permute.xlu0 %2203
        %2205 = vrot.lane.b32.xlu0 %v1474, 48
        %v2206 = vpop.permute.xlu0 %2205
        %2207 = vrot.lane.b32.xlu0 %v1475, 48
        %v2208 = vpop.permute.xlu0 %2207
        %2209 = vrot.lane.b32.xlu0 %v1476, 48
        %v2210 = vpop.permute.xlu0 %2209
        %2211 = vrot.lane.b32.xlu0 %v1477, 48
        %v2212 = vpop.permute.xlu0 %2211
        %2213 = vrot.lane.b32.xlu0 %v1478, 48
        %v2214 = vpop.permute.xlu0 %2213
        %2215 = vrot.lane.b32.xlu0 %v1479, 48
        %v2216 = vpop.permute.xlu0 %2215
        %2217 = vrot.lane.b32.xlu0 %v1480, 48
        %v2218 = vpop.permute.xlu0 %2217
        %2219 = vrot.lane.b32.xlu0 %v1481, 48
        %v2220 = vpop.permute.xlu0 %2219
        %2221 = vrot.lane.b32.xlu0 %v1482, 48
        %v2222 = vpop.permute.xlu0 %2221
        %2223 = vrot.lane.b32.xlu0 %v1483, 48
        %v2224 = vpop.permute.xlu0 %2223
        %2225 = vrot.lane.b32.xlu0 %v1484, 48
        %v2226 = vpop.permute.xlu0 %2225
        %2227 = vrot.lane.b32.xlu0 %v1485, 48
        %v2228 = vpop.permute.xlu0 %2227
        %2229 = vrot.lane.b32.xlu0 %v1486, 48
        %v2230 = vpop.permute.xlu0 %2229
        %2231 = vrot.lane.b32.xlu0 %v1487, 48
        %v2232 = vpop.permute.xlu0 %2231
        %2233 = vrot.lane.b32.xlu0 %v1488, 48
        %v2234 = vpop.permute.xlu0 %2233
        %2235 = vrot.lane.b32.xlu0 %v1489, 48
        %v2236 = vpop.permute.xlu0 %2235
        %2237 = vrot.lane.b32.xlu0 %v1490, 48
        %v2238 = vpop.permute.xlu0 %2237
        %2239 = vrot.lane.b32.xlu0 %v1491, 48
        %v2240 = vpop.permute.xlu0 %2239
        %2241 = vrot.lane.b32.xlu0 %v1492, 48
        %v2242 = vpop.permute.xlu0 %2241
        %2243 = vrot.lane.b32.xlu0 %v1493, 48
        %v2244 = vpop.permute.xlu0 %2243
        %2245 = vrot.lane.b32.xlu0 %v1494, 48
        %v2246 = vpop.permute.xlu0 %2245
        %2247 = vrot.lane.b32.xlu0 %v1495, 48
        %v2248 = vpop.permute.xlu0 %2247
        %2249 = vrot.lane.b32.xlu0 %v1496, 48
        %v2250 = vpop.permute.xlu0 %2249
        %2251 = vrot.lane.b32.xlu0 %v1497, 48
        %v2252 = vpop.permute.xlu0 %2251
        %2253 = vrot.lane.b32.xlu0 %v1498, 48
        %v2254 = vpop.permute.xlu0 %2253
        %2255 = vrot.lane.b32.xlu0 %v1499, 48
        %v2256 = vpop.permute.xlu0 %2255
        %2257 = vrot.lane.b32.xlu0 %v1500, 48
        %v2258 = vpop.permute.xlu0 %2257
        %2259 = vrot.lane.b32.xlu0 %v1501, 48
        %v2260 = vpop.permute.xlu0 %2259
        %2261 = vrot.lane.b32.xlu0 %v1502, 48
        %v2262 = vpop.permute.xlu0 %2261
        %2263 = vrot.lane.b32.xlu0 %v1503, 48
        %v2264 = vpop.permute.xlu0 %2263
        %2265 = vrot.lane.b32.xlu0 %v1504, 48
        %v2266 = vpop.permute.xlu0 %2265
        %2267 = vrot.lane.b32.xlu0 %v1505, 48
        %v2268 = vpop.permute.xlu0 %2267
        %2269 = vrot.lane.b32.xlu0 %v1506, 48
        %v2270 = vpop.permute.xlu0 %2269
        %2271 = vrot.lane.b32.xlu0 %v1507, 48
        %v2272 = vpop.permute.xlu0 %2271
        %2273 = vrot.lane.b32.xlu0 %v1508, 48
        %v2274 = vpop.permute.xlu0 %2273
        %2275 = vrot.lane.b32.xlu0 %v1509, 48
        %v2276 = vpop.permute.xlu0 %2275
        %2277 = vrot.lane.b32.xlu0 %v1510, 48
        %v2278 = vpop.permute.xlu0 %2277
        %2279 = vrot.lane.b32.xlu0 %v1511, 48
        %v2280 = vpop.permute.xlu0 %2279
        %2409 = vrot.lane.b32.xlu0 %v1513, 64
        %v2410 = vpop.permute.xlu0 %2409
        %2411 = vrot.lane.b32.xlu0 %v1514, 64
        %v2412 = vpop.permute.xlu0 %2411
        %2413 = vrot.lane.b32.xlu0 %v1515, 64
        %v2414 = vpop.permute.xlu0 %2413
        %2415 = vrot.lane.b32.xlu0 %v1516, 64
        %v2416 = vpop.permute.xlu0 %2415
        %2417 = vrot.lane.b32.xlu0 %v1517, 64
        %v2418 = vpop.permute.xlu0 %2417
        %2419 = vrot.lane.b32.xlu0 %v1518, 64
        %v2420 = vpop.permute.xlu0 %2419
        %2421 = vrot.lane.b32.xlu0 %v1519, 64
        %v2422 = vpop.permute.xlu0 %2421
        %2423 = vrot.lane.b32.xlu0 %v1520, 64
        %v2424 = vpop.permute.xlu0 %2423
        %2425 = vrot.lane.b32.xlu0 %v1521, 64
        %v2426 = vpop.permute.xlu0 %2425
        %2427 = vrot.lane.b32.xlu0 %v1522, 64
        %v2428 = vpop.permute.xlu0 %2427
        %2429 = vrot.lane.b32.xlu0 %v1523, 64
        %v2430 = vpop.permute.xlu0 %2429
        %2431 = vrot.lane.b32.xlu0 %v1524, 64
        %v2432 = vpop.permute.xlu0 %2431
        %2433 = vrot.lane.b32.xlu0 %v1525, 64
        %v2434 = vpop.permute.xlu0 %2433
        %2435 = vrot.lane.b32.xlu0 %v1526, 64
        %v2436 = vpop.permute.xlu0 %2435
        %2437 = vrot.lane.b32.xlu0 %v1527, 64
        %v2438 = vpop.permute.xlu0 %2437
        %2439 = vrot.lane.b32.xlu0 %v1528, 64
        %v2440 = vpop.permute.xlu0 %2439
        %2441 = vrot.lane.b32.xlu0 %v1529, 64
        %v2442 = vpop.permute.xlu0 %2441
        %2443 = vrot.lane.b32.xlu0 %v1530, 64
        %v2444 = vpop.permute.xlu0 %2443
        %2445 = vrot.lane.b32.xlu0 %v1531, 64
        %v2446 = vpop.permute.xlu0 %2445
        %2447 = vrot.lane.b32.xlu0 %v1532, 64
        %v2448 = vpop.permute.xlu0 %2447
        %2449 = vrot.lane.b32.xlu0 %v1533, 64
        %v2450 = vpop.permute.xlu0 %2449
        %2451 = vrot.lane.b32.xlu0 %v1534, 64
        %v2452 = vpop.permute.xlu0 %2451
        %2453 = vrot.lane.b32.xlu0 %v1535, 64
        %v2454 = vpop.permute.xlu0 %2453
        %2455 = vrot.lane.b32.xlu0 %v1536, 64
        %v2456 = vpop.permute.xlu0 %2455
        %2457 = vrot.lane.b32.xlu0 %v1537, 64
        %v2458 = vpop.permute.xlu0 %2457
        %2459 = vrot.lane.b32.xlu0 %v1538, 64
        %v2460 = vpop.permute.xlu0 %2459
        %2461 = vrot.lane.b32.xlu0 %v1539, 64
        %v2462 = vpop.permute.xlu0 %2461
        %2463 = vrot.lane.b32.xlu0 %v1540, 64
        %v2464 = vpop.permute.xlu0 %2463
        %2465 = vrot.lane.b32.xlu0 %v1541, 64
        %v2466 = vpop.permute.xlu0 %2465
        %2467 = vrot.lane.b32.xlu0 %v1542, 64
        %v2468 = vpop.permute.xlu0 %2467
        %2469 = vrot.lane.b32.xlu0 %v1543, 64
        %v2470 = vpop.permute.xlu0 %2469
        %2471 = vrot.lane.b32.xlu0 %v1544, 64
        %v2472 = vpop.permute.xlu0 %2471
        %2473 = vrot.lane.b32.xlu0 %v1545, 64
        %v2474 = vpop.permute.xlu0 %2473
        %2475 = vrot.lane.b32.xlu0 %v1546, 64
        %v2476 = vpop.permute.xlu0 %2475
        %2477 = vrot.lane.b32.xlu0 %v1547, 64
        %v2478 = vpop.permute.xlu0 %2477
        %2479 = vrot.lane.b32.xlu0 %v1548, 64
        %v2480 = vpop.permute.xlu0 %2479
        %2481 = vrot.lane.b32.xlu0 %v1549, 64
        %v2482 = vpop.permute.xlu0 %2481
        %2483 = vrot.lane.b32.xlu0 %v1550, 64
        %v2484 = vpop.permute.xlu0 %2483
        %2485 = vrot.lane.b32.xlu0 %v1551, 64
        %v2486 = vpop.permute.xlu0 %2485
        %2487 = vrot.lane.b32.xlu0 %v1552, 64
        %v2488 = vpop.permute.xlu0 %2487
        %2489 = vrot.lane.b32.xlu0 %v1553, 64
        %v2490 = vpop.permute.xlu0 %2489
        %2491 = vrot.lane.b32.xlu0 %v1554, 64
        %v2492 = vpop.permute.xlu0 %2491
        %2493 = vrot.lane.b32.xlu0 %v1555, 64
        %v2494 = vpop.permute.xlu0 %2493
        %2495 = vrot.lane.b32.xlu0 %v1556, 64
        %v2496 = vpop.permute.xlu0 %2495
        %2497 = vrot.lane.b32.xlu0 %v1557, 64
        %v2498 = vpop.permute.xlu0 %2497
        %2499 = vrot.lane.b32.xlu0 %v1558, 64
        %v2500 = vpop.permute.xlu0 %2499
        %2501 = vrot.lane.b32.xlu0 %v1559, 64
        %v2502 = vpop.permute.xlu0 %2501
        %2503 = vrot.lane.b32.xlu0 %v1560, 64
        %v2504 = vpop.permute.xlu0 %2503
        %2505 = vrot.lane.b32.xlu0 %v1561, 64
        %v2506 = vpop.permute.xlu0 %2505
        %2507 = vrot.lane.b32.xlu0 %v1562, 64
        %v2508 = vpop.permute.xlu0 %2507
        %2509 = vrot.lane.b32.xlu0 %v1563, 64
        %v2510 = vpop.permute.xlu0 %2509
        %2511 = vrot.lane.b32.xlu0 %v1564, 64
        %v2512 = vpop.permute.xlu0 %2511
        %2513 = vrot.lane.b32.xlu0 %v1565, 64
        %v2514 = vpop.permute.xlu0 %2513
        %2515 = vrot.lane.b32.xlu0 %v1566, 64
        %v2516 = vpop.permute.xlu0 %2515
        %2517 = vrot.lane.b32.xlu0 %v1567, 64
        %v2518 = vpop.permute.xlu0 %2517
        %2519 = vrot.lane.b32.xlu0 %v1568, 64
        %v2520 = vpop.permute.xlu0 %2519
        %2521 = vrot.lane.b32.xlu0 %v1569, 64
        %v2522 = vpop.permute.xlu0 %2521
        %2523 = vrot.lane.b32.xlu0 %v1570, 64
        %v2524 = vpop.permute.xlu0 %2523
        %2525 = vrot.lane.b32.xlu0 %v1571, 64
        %v2526 = vpop.permute.xlu0 %2525
        %2527 = vrot.lane.b32.xlu0 %v1572, 64
        %v2528 = vpop.permute.xlu0 %2527
        %2529 = vrot.lane.b32.xlu0 %v1573, 64
        %v2530 = vpop.permute.xlu0 %2529
        %2531 = vrot.lane.b32.xlu0 %v1574, 64
        %v2532 = vpop.permute.xlu0 %2531
        %2533 = vrot.lane.b32.xlu0 %v1575, 64
        %v2534 = vpop.permute.xlu0 %2533
        %2535 = vrot.lane.b32.xlu0 %v1576, 64
        %v2536 = vpop.permute.xlu0 %2535
        %v2601 = vsel %vm1183, %v1254, %v1642
        %v2602 = vsel %vm1183, %v1255, %v1644
        %v2603 = vsel %vm1183, %v1256, %v1646
        %v2604 = vsel %vm1183, %v1257, %v1648
        %v2605 = vsel %vm1183, %v1258, %v1650
        %v2606 = vsel %vm1183, %v1259, %v1652
        %v2607 = vsel %vm1183, %v1260, %v1654
        %v2608 = vsel %vm1183, %v1261, %v1656
        %v2609 = vsel %vm1183, %v1262, %v1658
        %v2610 = vsel %vm1183, %v1263, %v1660
        %v2611 = vsel %vm1183, %v1264, %v1662
        %v2612 = vsel %vm1183, %v1265, %v1664
        %v2613 = vsel %vm1183, %v1266, %v1666
        %v2614 = vsel %vm1183, %v1267, %v1668
        %v2615 = vsel %vm1183, %v1268, %v1670
        %v2616 = vsel %vm1183, %v1269, %v1672
        %v2617 = vsel %vm1183, %v1270, %v1674
        %v2618 = vsel %vm1183, %v1271, %v1676
        %v2619 = vsel %vm1183, %v1272, %v1678
        %v2620 = vsel %vm1183, %v1273, %v1680
        %v2621 = vsel %vm1183, %v1274, %v1682
        %v2622 = vsel %vm1183, %v1275, %v1684
        %v2623 = vsel %vm1183, %v1276, %v1686
        %v2624 = vsel %vm1183, %v1277, %v1688
        %v2625 = vsel %vm1183, %v1278, %v1690
        %v2626 = vsel %vm1183, %v1279, %v1692
        %v2627 = vsel %vm1183, %v1280, %v1694
        %v2628 = vsel %vm1183, %v1281, %v1696
        %v2629 = vsel %vm1183, %v1282, %v1698
        %v2630 = vsel %vm1183, %v1283, %v1700
        %v2631 = vsel %vm1183, %v1284, %v1702
        %v2632 = vsel %vm1183, %v1285, %v1704
        %v2633 = vsel %vm1183, %v1286, %v1706
        %v2634 = vsel %vm1183, %v1287, %v1708
        %v2635 = vsel %vm1183, %v1288, %v1710
        %v2636 = vsel %vm1183, %v1289, %v1712
        %v2637 = vsel %vm1183, %v1290, %v1714
        %v2638 = vsel %vm1183, %v1291, %v1716
        %v2639 = vsel %vm1183, %v1292, %v1718
        %v2640 = vsel %vm1183, %v1293, %v1720
        %v2641 = vsel %vm1183, %v1294, %v1722
        %v2642 = vsel %vm1183, %v1295, %v1724
        %v2643 = vsel %vm1183, %v1296, %v1726
        %v2644 = vsel %vm1183, %v1297, %v1728
        %v2645 = vsel %vm1183, %v1298, %v1730
        %v2646 = vsel %vm1183, %v1299, %v1732
        %v2647 = vsel %vm1183, %v1300, %v1734
        %v2648 = vsel %vm1183, %v1301, %v1736
        %v2649 = vsel %vm1183, %v1302, %v1738
        %v2650 = vsel %vm1183, %v1303, %v1740
        %v2651 = vsel %vm1183, %v1304, %v1742
        %v2652 = vsel %vm1183, %v1305, %v1744
        %v2653 = vsel %vm1183, %v1306, %v1746
        %v2654 = vsel %vm1183, %v1307, %v1748
        %v2655 = vsel %vm1183, %v1308, %v1750
        %v2656 = vsel %vm1183, %v1309, %v1752
        %v2657 = vsel %vm1183, %v1310, %v1754
        %v2658 = vsel %vm1183, %v1311, %v1756
        %v2659 = vsel %vm1183, %v1312, %v1758
        %v2660 = vsel %vm1183, %v1313, %v1760
        %v2661 = vsel %vm1183, %v1314, %v1762
        %v2662 = vsel %vm1183, %v1315, %v1764
        %v2663 = vsel %vm1183, %v1316, %v1766
        %v2664 = vsel %vm1183, %v1317, %v1768
        %vm2665 = vcmask 261120
        %v2666 = vsel %vm2665, %v2601, %v1898
        %v2667 = vsel %vm2665, %v2602, %v1900
        %v2668 = vsel %vm2665, %v2603, %v1902
        %v2669 = vsel %vm2665, %v2604, %v1904
        %v2670 = vsel %vm2665, %v2605, %v1906
        %v2671 = vsel %vm2665, %v2606, %v1908
        %v2672 = vsel %vm2665, %v2607, %v1910
        %v2673 = vsel %vm2665, %v2608, %v1912
        %v2674 = vsel %vm2665, %v2609, %v1914
        %v2675 = vsel %vm2665, %v2610, %v1916
        %v2676 = vsel %vm2665, %v2611, %v1918
        %v2677 = vsel %vm2665, %v2612, %v1920
        %v2678 = vsel %vm2665, %v2613, %v1922
        %v2679 = vsel %vm2665, %v2614, %v1924
        %v2680 = vsel %vm2665, %v2615, %v1926
        %v2681 = vsel %vm2665, %v2616, %v1928
        %v2682 = vsel %vm2665, %v2617, %v1930
        %v2683 = vsel %vm2665, %v2618, %v1932
        %v2684 = vsel %vm2665, %v2619, %v1934
        %v2685 = vsel %vm2665, %v2620, %v1936
        %v2686 = vsel %vm2665, %v2621, %v1938
        %v2687 = vsel %vm2665, %v2622, %v1940
        %v2688 = vsel %vm2665, %v2623, %v1942
        %v2689 = vsel %vm2665, %v2624, %v1944
        %v2690 = vsel %vm2665, %v2625, %v1946
        %v2691 = vsel %vm2665, %v2626, %v1948
        %v2692 = vsel %vm2665, %v2627, %v1950
        %v2693 = vsel %vm2665, %v2628, %v1952
        %v2694 = vsel %vm2665, %v2629, %v1954
        %v2695 = vsel %vm2665, %v2630, %v1956
        %v2696 = vsel %vm2665, %v2631, %v1958
        %v2697 = vsel %vm2665, %v2632, %v1960
        %v2698 = vsel %vm2665, %v2633, %v1962
        %v2699 = vsel %vm2665, %v2634, %v1964
        %v2700 = vsel %vm2665, %v2635, %v1966
        %v2701 = vsel %vm2665, %v2636, %v1968
        %v2702 = vsel %vm2665, %v2637, %v1970
        %v2703 = vsel %vm2665, %v2638, %v1972
        %v2704 = vsel %vm2665, %v2639, %v1974
        %v2705 = vsel %vm2665, %v2640, %v1976
        %v2706 = vsel %vm2665, %v2641, %v1978
        %v2707 = vsel %vm2665, %v2642, %v1980
        %v2708 = vsel %vm2665, %v2643, %v1982
        %v2709 = vsel %vm2665, %v2644, %v1984
        %v2710 = vsel %vm2665, %v2645, %v1986
        %v2711 = vsel %vm2665, %v2646, %v1988
        %v2712 = vsel %vm2665, %v2647, %v1990
        %v2713 = vsel %vm2665, %v2648, %v1992
        %v2714 = vsel %vm2665, %v2649, %v1994
        %v2715 = vsel %vm2665, %v2650, %v1996
        %v2716 = vsel %vm2665, %v2651, %v1998
        %v2717 = vsel %vm2665, %v2652, %v2000
        %v2718 = vsel %vm2665, %v2653, %v2002
        %v2719 = vsel %vm2665, %v2654, %v2004
        %v2720 = vsel %vm2665, %v2655, %v2006
        %v2721 = vsel %vm2665, %v2656, %v2008
        %v2722 = vsel %vm2665, %v2657, %v2010
        %v2723 = vsel %vm2665, %v2658, %v2012
        %v2724 = vsel %vm2665, %v2659, %v2014
        %v2725 = vsel %vm2665, %v2660, %v2016
        %v2726 = vsel %vm2665, %v2661, %v2018
        %v2727 = vsel %vm2665, %v2662, %v2020
        %v2728 = vsel %vm2665, %v2663, %v2022
        %v2729 = vsel %vm2665, %v2664, %v2024
        %vm2730 = vcmask 392192
        %v2731 = vsel %vm2730, %v2666, %v2154
        %v2732 = vsel %vm2730, %v2667, %v2156
        %v2733 = vsel %vm2730, %v2668, %v2158
        %v2734 = vsel %vm2730, %v2669, %v2160
        %v2735 = vsel %vm2730, %v2670, %v2162
        %v2736 = vsel %vm2730, %v2671, %v2164
        %v2737 = vsel %vm2730, %v2672, %v2166
        %v2738 = vsel %vm2730, %v2673, %v2168
        %v2739 = vsel %vm2730, %v2674, %v2170
        %v2740 = vsel %vm2730, %v2675, %v2172
        %v2741 = vsel %vm2730, %v2676, %v2174
        %v2742 = vsel %vm2730, %v2677, %v2176
        %v2743 = vsel %vm2730, %v2678, %v2178
        %v2744 = vsel %vm2730, %v2679, %v2180
        %v2745 = vsel %vm2730, %v2680, %v2182
        %v2746 = vsel %vm2730, %v2681, %v2184
        %v2747 = vsel %vm2730, %v2682, %v2186
        %v2748 = vsel %vm2730, %v2683, %v2188
        %v2749 = vsel %vm2730, %v2684, %v2190
        %v2750 = vsel %vm2730, %v2685, %v2192
        %v2751 = vsel %vm2730, %v2686, %v2194
        %v2752 = vsel %vm2730, %v2687, %v2196
        %v2753 = vsel %vm2730, %v2688, %v2198
        %v2754 = vsel %vm2730, %v2689, %v2200
        %v2755 = vsel %vm2730, %v2690, %v2202
        %v2756 = vsel %vm2730, %v2691, %v2204
        %v2757 = vsel %vm2730, %v2692, %v2206
        %v2758 = vsel %vm2730, %v2693, %v2208
        %v2759 = vsel %vm2730, %v2694, %v2210
        %v2760 = vsel %vm2730, %v2695, %v2212
        %v2761 = vsel %vm2730, %v2696, %v2214
        %v2762 = vsel %vm2730, %v2697, %v2216
        %v2763 = vsel %vm2730, %v2698, %v2218
        %v2764 = vsel %vm2730, %v2699, %v2220
        %v2765 = vsel %vm2730, %v2700, %v2222
        %v2766 = vsel %vm2730, %v2701, %v2224
        %v2767 = vsel %vm2730, %v2702, %v2226
        %v2768 = vsel %vm2730, %v2703, %v2228
        %v2769 = vsel %vm2730, %v2704, %v2230
        %v2770 = vsel %vm2730, %v2705, %v2232
        %v2771 = vsel %vm2730, %v2706, %v2234
        %v2772 = vsel %vm2730, %v2707, %v2236
        %v2773 = vsel %vm2730, %v2708, %v2238
        %v2774 = vsel %vm2730, %v2709, %v2240
        %v2775 = vsel %vm2730, %v2710, %v2242
        %v2776 = vsel %vm2730, %v2711, %v2244
        %v2777 = vsel %vm2730, %v2712, %v2246
        %v2778 = vsel %vm2730, %v2713, %v2248
        %v2779 = vsel %vm2730, %v2714, %v2250
        %v2780 = vsel %vm2730, %v2715, %v2252
        %v2781 = vsel %vm2730, %v2716, %v2254
        %v2782 = vsel %vm2730, %v2717, %v2256
        %v2783 = vsel %vm2730, %v2718, %v2258
        %v2784 = vsel %vm2730, %v2719, %v2260
        %v2785 = vsel %vm2730, %v2720, %v2262
        %v2786 = vsel %vm2730, %v2721, %v2264
        %v2787 = vsel %vm2730, %v2722, %v2266
        %v2788 = vsel %vm2730, %v2723, %v2268
        %v2789 = vsel %vm2730, %v2724, %v2270
        %v2790 = vsel %vm2730, %v2725, %v2272
        %v2791 = vsel %vm2730, %v2726, %v2274
        %v2792 = vsel %vm2730, %v2727, %v2276
        %v2793 = vsel %vm2730, %v2728, %v2278
        %v2794 = vsel %vm2730, %v2729, %v2280
        %vm2795 = vcmask 523264
        %v2796 = vsel %vm2795, %v2731, %v2410
        %v2797 = vsel %vm2795, %v2732, %v2412
        %v2798 = vsel %vm2795, %v2733, %v2414
        %v2799 = vsel %vm2795, %v2734, %v2416
        %v2800 = vsel %vm2795, %v2735, %v2418
        %v2801 = vsel %vm2795, %v2736, %v2420
        %v2802 = vsel %vm2795, %v2737, %v2422
        %v2803 = vsel %vm2795, %v2738, %v2424
        %v2804 = vsel %vm2795, %v2739, %v2426
        %v2805 = vsel %vm2795, %v2740, %v2428
        %v2806 = vsel %vm2795, %v2741, %v2430
        %v2807 = vsel %vm2795, %v2742, %v2432
        %v2808 = vsel %vm2795, %v2743, %v2434
        %v2809 = vsel %vm2795, %v2744, %v2436
        %v2810 = vsel %vm2795, %v2745, %v2438
        %v2811 = vsel %vm2795, %v2746, %v2440
        %v2812 = vsel %vm2795, %v2747, %v2442
        %v2813 = vsel %vm2795, %v2748, %v2444
        %v2814 = vsel %vm2795, %v2749, %v2446
        %v2815 = vsel %vm2795, %v2750, %v2448
        %v2816 = vsel %vm2795, %v2751, %v2450
        %v2817 = vsel %vm2795, %v2752, %v2452
        %v2818 = vsel %vm2795, %v2753, %v2454
        %v2819 = vsel %vm2795, %v2754, %v2456
        %v2820 = vsel %vm2795, %v2755, %v2458
        %v2821 = vsel %vm2795, %v2756, %v2460
        %v2822 = vsel %vm2795, %v2757, %v2462
        %v2823 = vsel %vm2795, %v2758, %v2464
        %v2824 = vsel %vm2795, %v2759, %v2466
        %v2825 = vsel %vm2795, %v2760, %v2468
        %v2826 = vsel %vm2795, %v2761, %v2470
        %v2827 = vsel %vm2795, %v2762, %v2472
        %v2828 = vsel %vm2795, %v2763, %v2474
        %v2829 = vsel %vm2795, %v2764, %v2476
        %v2830 = vsel %vm2795, %v2765, %v2478
        %v2831 = vsel %vm2795, %v2766, %v2480
        %v2832 = vsel %vm2795, %v2767, %v2482
        %v2833 = vsel %vm2795, %v2768, %v2484
        %v2834 = vsel %vm2795, %v2769, %v2486
        %v2835 = vsel %vm2795, %v2770, %v2488
        %v2836 = vsel %vm2795, %v2771, %v2490
        %v2837 = vsel %vm2795, %v2772, %v2492
        %v2838 = vsel %vm2795, %v2773, %v2494
        %v2839 = vsel %vm2795, %v2774, %v2496
        %v2840 = vsel %vm2795, %v2775, %v2498
        %v2841 = vsel %vm2795, %v2776, %v2500
        %v2842 = vsel %vm2795, %v2777, %v2502
        %v2843 = vsel %vm2795, %v2778, %v2504
        %v2844 = vsel %vm2795, %v2779, %v2506
        %v2845 = vsel %vm2795, %v2780, %v2508
        %v2846 = vsel %vm2795, %v2781, %v2510
        %v2847 = vsel %vm2795, %v2782, %v2512
        %v2848 = vsel %vm2795, %v2783, %v2514
        %v2849 = vsel %vm2795, %v2784, %v2516
        %v2850 = vsel %vm2795, %v2785, %v2518
        %v2851 = vsel %vm2795, %v2786, %v2520
        %v2852 = vsel %vm2795, %v2787, %v2522
        %v2853 = vsel %vm2795, %v2788, %v2524
        %v2854 = vsel %vm2795, %v2789, %v2526
        %v2855 = vsel %vm2795, %v2790, %v2528
        %v2856 = vsel %vm2795, %v2791, %v2530
        %v2857 = vsel %vm2795, %v2792, %v2532
        %v2858 = vsel %vm2795, %v2793, %v2534
        %v2859 = vsel %vm2795, %v2794, %v2536
        %v2860 = vld [vmem:[%s3] sm:$0xff]
        %v2861 = vld [vmem:[%s3 + $0x8] sm:$0xff]
        %v2862 = vld [vmem:[%s3 + $0x10] sm:$0xff]
        %v2863 = vld [vmem:[%s3 + $0x18] sm:$0xff]
        %v2864 = vld [vmem:[%s3 + $0x20] sm:$0xff]
        %v2865 = vld [vmem:[%s3 + $0x28] sm:$0xff]
        %v2866 = vld [vmem:[%s3 + $0x30] sm:$0xff]
        %v2867 = vld [vmem:[%s3 + $0x38] sm:$0xff]
        %v2868 = vld [vmem:[%s3 + $0x40] sm:$0xff]
        %v2869 = vld [vmem:[%s3 + $0x48] sm:$0xff]
        %v2870 = vld [vmem:[%s4] sm:$0x1]
        %v2872 = vperm.slane %v2870, 0
        %vm2874 = vcmask 654336
        %v2876 = vsel %vm2874, %v2796, 0
        %v2879 = vsel %vm2874, %v2797, 0
        %v2882 = vsel %vm2874, %v2798, 0
        %v2885 = vsel %vm2874, %v2799, 0
        %v2888 = vsel %vm2874, %v2800, 0
        %v2891 = vsel %vm2874, %v2801, 0
        %v2894 = vsel %vm2874, %v2802, 0
        %v2897 = vsel %vm2874, %v2803, 0
        %v2900 = vsel %vm2874, %v2804, 0
        %v2903 = vsel %vm2874, %v2805, 0
        %v2906 = vsel %vm2874, %v2806, 0
        %v2909 = vsel %vm2874, %v2807, 0
        %v2912 = vsel %vm2874, %v2808, 0
        %v2915 = vsel %vm2874, %v2809, 0
        %v2918 = vsel %vm2874, %v2810, 0
        %v2921 = vsel %vm2874, %v2811, 0
        %v2924 = vsel %vm2874, %v2812, 0
        %v2927 = vsel %vm2874, %v2813, 0
        %v2930 = vsel %vm2874, %v2814, 0
        %v2933 = vsel %vm2874, %v2815, 0
        %v2936 = vsel %vm2874, %v2816, 0
        %v2939 = vsel %vm2874, %v2817, 0
        %v2942 = vsel %vm2874, %v2818, 0
        %v2945 = vsel %vm2874, %v2819, 0
        %v2948 = vsel %vm2874, %v2820, 0
        %v2951 = vsel %vm2874, %v2821, 0
        %v2954 = vsel %vm2874, %v2822, 0
        %v2957 = vsel %vm2874, %v2823, 0
        %v2960 = vsel %vm2874, %v2824, 0
        %v2963 = vsel %vm2874, %v2825, 0
        %v2966 = vsel %vm2874, %v2826, 0
        %v2969 = vsel %vm2874, %v2827, 0
        %v2972 = vsel %vm2874, %v2828, 0
        %v2975 = vsel %vm2874, %v2829, 0
        %v2978 = vsel %vm2874, %v2830, 0
        %v2981 = vsel %vm2874, %v2831, 0
        %v2984 = vsel %vm2874, %v2832, 0
        %v2987 = vsel %vm2874, %v2833, 0
        %v2990 = vsel %vm2874, %v2834, 0
        %v2993 = vsel %vm2874, %v2835, 0
        %v2996 = vsel %vm2874, %v2836, 0
        %v2999 = vsel %vm2874, %v2837, 0
        %v3002 = vsel %vm2874, %v2838, 0
        %v3005 = vsel %vm2874, %v2839, 0
        %v3008 = vsel %vm2874, %v2840, 0
        %v3011 = vsel %vm2874, %v2841, 0
        %v3014 = vsel %vm2874, %v2842, 0
        %v3017 = vsel %vm2874, %v2843, 0
        %v3020 = vsel %vm2874, %v2844, 0
        %v3023 = vsel %vm2874, %v2845, 0
        %v3026 = vsel %vm2874, %v2846, 0
        %v3029 = vsel %vm2874, %v2847, 0
        %v3032 = vsel %vm2874, %v2848, 0
        %v3035 = vsel %vm2874, %v2849, 0
        %v3038 = vsel %vm2874, %v2850, 0
        %v3041 = vsel %vm2874, %v2851, 0
        %v3044 = vsel %vm2874, %v2852, 0
        %v3047 = vsel %vm2874, %v2853, 0
        %v3050 = vsel %vm2874, %v2854, 0
        %v3053 = vsel %vm2874, %v2855, 0
        %v3056 = vsel %vm2874, %v2856, 0
        %v3059 = vsel %vm2874, %v2857, 0
        %v3062 = vsel %vm2874, %v2858, 0
        %v3065 = vsel %vm2874, %v2859, 0
        %3067 = vmatpush.msra.mxu0 0.0
        %3068 = vmatpush.msra.mxu0 0.0
        %3069 = vmatpush.msra.mxu0 0.0
        %3070 = vmatpush.msra.mxu0 0.0
        %3071 = vmatpush.msra.mxu0 0.0
        %3072 = vmatpush.msra.mxu0 0.0
        %3073 = vmatpush.msra.mxu0 %v2869
        %3074 = vmatpush.msra.mxu0 %v2868
        %3075 = vmatpush.msra.mxu0 %v2867
        %3076 = vmatpush.msra.mxu0 %v2866
        %3077 = vmatpush.msra.mxu0 %v2865
        %3078 = vmatpush.msra.mxu0 %v2864
        %3079 = vmatpush.msra.mxu0 %v2863
        %3080 = vmatpush.msra.mxu0 %v2862
        %3081 = vmatpush.msra.mxu0 %v2861
        %3082 = vmatpush.msra.mxu0 %v2860
        %3083 = vmatmul.f32.gmra.mxu0 %v2876
        %v3084 = vpop.f32.mrf.mxu0
        %v3085 = vadd.f32 %v2872, %v3084
        %3086 = vmatmul.f32.gmra.mxu0 %v2879
        %v3087 = vpop.f32.mrf.mxu0
        %v3088 = vadd.f32 %v2872, %v3087
        %3089 = vmatmul.f32.gmra.mxu0 %v2882
        %v3090 = vpop.f32.mrf.mxu0
        %v3091 = vadd.f32 %v2872, %v3090
        %3092 = vmatmul.f32.gmra.mxu0 %v2885
        %v3093 = vpop.f32.mrf.mxu0
        %v3094 = vadd.f32 %v2872, %v3093
        %3095 = vmatmul.f32.gmra.mxu0 %v2888
        %v3096 = vpop.f32.mrf.mxu0
        %v3097 = vadd.f32 %v2872, %v3096
        %3098 = vmatmul.f32.gmra.mxu0 %v2891
        %v3099 = vpop.f32.mrf.mxu0
        %v3100 = vadd.f32 %v2872, %v3099
        %3101 = vmatmul.f32.gmra.mxu0 %v2894
        %v3102 = vpop.f32.mrf.mxu0
        %v3103 = vadd.f32 %v2872, %v3102
        %3104 = vmatmul.f32.gmra.mxu0 %v2897
        %v3105 = vpop.f32.mrf.mxu0
        %v3106 = vadd.f32 %v2872, %v3105
        %3107 = vmatmul.f32.gmra.mxu0 %v2900
        %v3108 = vpop.f32.mrf.mxu0
        %v3109 = vadd.f32 %v2872, %v3108
        %3110 = vmatmul.f32.gmra.mxu0 %v2903
        %v3111 = vpop.f32.mrf.mxu0
        %v3112 = vadd.f32 %v2872, %v3111
        %3113 = vmatmul.f32.gmra.mxu0 %v2906
        %v3114 = vpop.f32.mrf.mxu0
        %v3115 = vadd.f32 %v2872, %v3114
        %3116 = vmatmul.f32.gmra.mxu0 %v2909
        %v3117 = vpop.f32.mrf.mxu0
        %v3118 = vadd.f32 %v2872, %v3117
        %3119 = vmatmul.f32.gmra.mxu0 %v2912
        %v3120 = vpop.f32.mrf.mxu0
        %v3121 = vadd.f32 %v2872, %v3120
        %3122 = vmatmul.f32.gmra.mxu0 %v2915
        %v3123 = vpop.f32.mrf.mxu0
        %v3124 = vadd.f32 %v2872, %v3123
        %3125 = vmatmul.f32.gmra.mxu0 %v2918
        %v3126 = vpop.f32.mrf.mxu0
        %v3127 = vadd.f32 %v2872, %v3126
        %3128 = vmatmul.f32.gmra.mxu0 %v2921
        %v3129 = vpop.f32.mrf.mxu0
        %v3130 = vadd.f32 %v2872, %v3129
        %3131 = vmatmul.f32.gmra.mxu0 %v2924
        %v3132 = vpop.f32.mrf.mxu0
        %v3133 = vadd.f32 %v2872, %v3132
        %3134 = vmatmul.f32.gmra.mxu0 %v2927
        %v3135 = vpop.f32.mrf.mxu0
        %v3136 = vadd.f32 %v2872, %v3135
        %3137 = vmatmul.f32.gmra.mxu0 %v2930
        %v3138 = vpop.f32.mrf.mxu0
        %v3139 = vadd.f32 %v2872, %v3138
        %3140 = vmatmul.f32.gmra.mxu0 %v2933
        %v3141 = vpop.f32.mrf.mxu0
        %v3142 = vadd.f32 %v2872, %v3141
        %3143 = vmatmul.f32.gmra.mxu0 %v2936
        %v3144 = vpop.f32.mrf.mxu0
        %v3145 = vadd.f32 %v2872, %v3144
        %3146 = vmatmul.f32.gmra.mxu0 %v2939
        %v3147 = vpop.f32.mrf.mxu0
        %v3148 = vadd.f32 %v2872, %v3147
        %3149 = vmatmul.f32.gmra.mxu0 %v2942
        %v3150 = vpop.f32.mrf.mxu0
        %v3151 = vadd.f32 %v2872, %v3150
        %3152 = vmatmul.f32.gmra.mxu0 %v2945
        %v3153 = vpop.f32.mrf.mxu0
        %v3154 = vadd.f32 %v2872, %v3153
        %3155 = vmatmul.f32.gmra.mxu0 %v2948
        %v3156 = vpop.f32.mrf.mxu0
        %v3157 = vadd.f32 %v2872, %v3156
        %3158 = vmatmul.f32.gmra.mxu0 %v2951
        %v3159 = vpop.f32.mrf.mxu0
        %v3160 = vadd.f32 %v2872, %v3159
        %3161 = vmatmul.f32.gmra.mxu0 %v2954
        %v3162 = vpop.f32.mrf.mxu0
        %v3163 = vadd.f32 %v2872, %v3162
        %3164 = vmatmul.f32.gmra.mxu0 %v2957
        %v3165 = vpop.f32.mrf.mxu0
        %v3166 = vadd.f32 %v2872, %v3165
        %3167 = vmatmul.f32.gmra.mxu0 %v2960
        %v3168 = vpop.f32.mrf.mxu0
        %v3169 = vadd.f32 %v2872, %v3168
        %3170 = vmatmul.f32.gmra.mxu0 %v2963
        %v3171 = vpop.f32.mrf.mxu0
        %v3172 = vadd.f32 %v2872, %v3171
        %3173 = vmatmul.f32.gmra.mxu0 %v2966
        %v3174 = vpop.f32.mrf.mxu0
        %v3175 = vadd.f32 %v2872, %v3174
        %3176 = vmatmul.f32.gmra.mxu0 %v2969
        %v3177 = vpop.f32.mrf.mxu0
        %v3178 = vadd.f32 %v2872, %v3177
        %3179 = vmatmul.f32.gmra.mxu0 %v2972
        %v3180 = vpop.f32.mrf.mxu0
        %v3181 = vadd.f32 %v2872, %v3180
        %3182 = vmatmul.f32.gmra.mxu0 %v2975
        %v3183 = vpop.f32.mrf.mxu0
        %v3184 = vadd.f32 %v2872, %v3183
        %3185 = vmatmul.f32.gmra.mxu0 %v2978
        %v3186 = vpop.f32.mrf.mxu0
        %v3187 = vadd.f32 %v2872, %v3186
        %3188 = vmatmul.f32.gmra.mxu0 %v2981
        %v3189 = vpop.f32.mrf.mxu0
        %v3190 = vadd.f32 %v2872, %v3189
        %3191 = vmatmul.f32.gmra.mxu0 %v2984
        %v3192 = vpop.f32.mrf.mxu0
        %v3193 = vadd.f32 %v2872, %v3192
        %3194 = vmatmul.f32.gmra.mxu0 %v2987
        %v3195 = vpop.f32.mrf.mxu0
        %v3196 = vadd.f32 %v2872, %v3195
        %3197 = vmatmul.f32.gmra.mxu0 %v2990
        %v3198 = vpop.f32.mrf.mxu0
        %v3199 = vadd.f32 %v2872, %v3198
        %3200 = vmatmul.f32.gmra.mxu0 %v2993
        %v3201 = vpop.f32.mrf.mxu0
        %v3202 = vadd.f32 %v2872, %v3201
        %3203 = vmatmul.f32.gmra.mxu0 %v2996
        %v3204 = vpop.f32.mrf.mxu0
        %v3205 = vadd.f32 %v2872, %v3204
        %3206 = vmatmul.f32.gmra.mxu0 %v2999
        %v3207 = vpop.f32.mrf.mxu0
        %v3208 = vadd.f32 %v2872, %v3207
        %3209 = vmatmul.f32.gmra.mxu0 %v3002
        %v3210 = vpop.f32.mrf.mxu0
        %v3211 = vadd.f32 %v2872, %v3210
        %3212 = vmatmul.f32.gmra.mxu0 %v3005
        %v3213 = vpop.f32.mrf.mxu0
        %v3214 = vadd.f32 %v2872, %v3213
        %3215 = vmatmul.f32.gmra.mxu0 %v3008
        %v3216 = vpop.f32.mrf.mxu0
        %v3217 = vadd.f32 %v2872, %v3216
        %3218 = vmatmul.f32.gmra.mxu0 %v3011
        %v3219 = vpop.f32.mrf.mxu0
        %v3220 = vadd.f32 %v2872, %v3219
        %3221 = vmatmul.f32.gmra.mxu0 %v3014
        %v3222 = vpop.f32.mrf.mxu0
        %v3223 = vadd.f32 %v2872, %v3222
        %3224 = vmatmul.f32.gmra.mxu0 %v3017
        %v3225 = vpop.f32.mrf.mxu0
        %v3226 = vadd.f32 %v2872, %v3225
        %3227 = vmatmul.f32.gmra.mxu0 %v3020
        %v3228 = vpop.f32.mrf.mxu0
        %v3229 = vadd.f32 %v2872, %v3228
        %3230 = vmatmul.f32.gmra.mxu0 %v3023
        %v3231 = vpop.f32.mrf.mxu0
        %v3232 = vadd.f32 %v2872, %v3231
        %3233 = vmatmul.f32.gmra.mxu0 %v3026
        %v3234 = vpop.f32.mrf.mxu0
        %v3235 = vadd.f32 %v2872, %v3234
        %3236 = vmatmul.f32.gmra.mxu0 %v3029
        %v3237 = vpop.f32.mrf.mxu0
        %v3238 = vadd.f32 %v2872, %v3237
        %3239 = vmatmul.f32.gmra.mxu0 %v3032
        %v3240 = vpop.f32.mrf.mxu0
        %v3241 = vadd.f32 %v2872, %v3240
        %3242 = vmatmul.f32.gmra.mxu0 %v3035
        %v3243 = vpop.f32.mrf.mxu0
        %v3244 = vadd.f32 %v2872, %v3243
        %3245 = vmatmul.f32.gmra.mxu0 %v3038
        %v3246 = vpop.f32.mrf.mxu0
        %v3247 = vadd.f32 %v2872, %v3246
        %3248 = vmatmul.f32.gmra.mxu0 %v3041
        %v3249 = vpop.f32.mrf.mxu0
        %v3250 = vadd.f32 %v2872, %v3249
        %3251 = vmatmul.f32.gmra.mxu0 %v3044
        %v3252 = vpop.f32.mrf.mxu0
        %v3253 = vadd.f32 %v2872, %v3252
        %3254 = vmatmul.f32.gmra.mxu0 %v3047
        %v3255 = vpop.f32.mrf.mxu0
        %v3256 = vadd.f32 %v2872, %v3255
        %3257 = vmatmul.f32.gmra.mxu0 %v3050
        %v3258 = vpop.f32.mrf.mxu0
        %v3259 = vadd.f32 %v2872, %v3258
        %3260 = vmatmul.f32.gmra.mxu0 %v3053
        %v3261 = vpop.f32.mrf.mxu0
        %v3262 = vadd.f32 %v2872, %v3261
        %3263 = vmatmul.f32.gmra.mxu0 %v3056
        %v3264 = vpop.f32.mrf.mxu0
        %v3265 = vadd.f32 %v2872, %v3264
        %3266 = vmatmul.f32.gmra.mxu0 %v3059
        %v3267 = vpop.f32.mrf.mxu0
        %v3268 = vadd.f32 %v2872, %v3267
        %3269 = vmatmul.f32.gmra.mxu0 %v3062
        %v3270 = vpop.f32.mrf.mxu0
        %v3271 = vadd.f32 %v2872, %v3270
        %3272 = vmatmul.f32.gmra.mxu0 %v3065
        %v3273 = vpop.f32.mrf.mxu0
        %v3274 = vadd.f32 %v2872, %v3273
        %3275 = vdwg.mxu0
        %v3276 = vmax.f32 %v3085, 0.0
        %v3277 = vmax.f32 %v3088, 0.0
        %v3278 = vmax.f32 %v3091, 0.0
        %v3279 = vmax.f32 %v3094, 0.0
        %v3280 = vmax.f32 %v3097, 0.0
        %v3281 = vmax.f32 %v3100, 0.0
        %v3282 = vmax.f32 %v3103, 0.0
        %v3283 = vmax.f32 %v3106, 0.0
        %v3284 = vmax.f32 %v3109, 0.0
        %v3285 = vmax.f32 %v3112, 0.0
        %v3286 = vmax.f32 %v3115, 0.0
        %v3287 = vmax.f32 %v3118, 0.0
        %v3288 = vmax.f32 %v3121, 0.0
        %v3289 = vmax.f32 %v3124, 0.0
        %v3290 = vmax.f32 %v3127, 0.0
        %v3291 = vmax.f32 %v3130, 0.0
        %v3292 = vmax.f32 %v3133, 0.0
        %v3293 = vmax.f32 %v3136, 0.0
        %v3294 = vmax.f32 %v3139, 0.0
        %v3295 = vmax.f32 %v3142, 0.0
        %v3296 = vmax.f32 %v3145, 0.0
        %v3297 = vmax.f32 %v3148, 0.0
        %v3298 = vmax.f32 %v3151, 0.0
        %v3299 = vmax.f32 %v3154, 0.0
        %v3300 = vmax.f32 %v3157, 0.0
        %v3301 = vmax.f32 %v3160, 0.0
        %v3302 = vmax.f32 %v3163, 0.0
        %v3303 = vmax.f32 %v3166, 0.0
        %v3304 = vmax.f32 %v3169, 0.0
        %v3305 = vmax.f32 %v3172, 0.0
        %v3306 = vmax.f32 %v3175, 0.0
        %v3307 = vmax.f32 %v3178, 0.0
        %v3308 = vmax.f32 %v3181, 0.0
        %v3309 = vmax.f32 %v3184, 0.0
        %v3310 = vmax.f32 %v3187, 0.0
        %v3311 = vmax.f32 %v3190, 0.0
        %v3312 = vmax.f32 %v3193, 0.0
        %v3313 = vmax.f32 %v3196, 0.0
        %v3314 = vmax.f32 %v3199, 0.0
        %v3315 = vmax.f32 %v3202, 0.0
        %v3316 = vmax.f32 %v3205, 0.0
        %v3317 = vmax.f32 %v3208, 0.0
        %v3318 = vmax.f32 %v3211, 0.0
        %v3319 = vmax.f32 %v3214, 0.0
        %v3320 = vmax.f32 %v3217, 0.0
        %v3321 = vmax.f32 %v3220, 0.0
        %v3322 = vmax.f32 %v3223, 0.0
        %v3323 = vmax.f32 %v3226, 0.0
        %v3324 = vmax.f32 %v3229, 0.0
        %v3325 = vmax.f32 %v3232, 0.0
        %v3326 = vmax.f32 %v3235, 0.0
        %v3327 = vmax.f32 %v3238, 0.0
        %v3328 = vmax.f32 %v3241, 0.0
        %v3329 = vmax.f32 %v3244, 0.0
        %v3330 = vmax.f32 %v3247, 0.0
        %v3331 = vmax.f32 %v3250, 0.0
        %v3332 = vmax.f32 %v3253, 0.0
        %v3333 = vmax.f32 %v3256, 0.0
        %v3334 = vmax.f32 %v3259, 0.0
        %v3335 = vmax.f32 %v3262, 0.0
        %v3336 = vmax.f32 %v3265, 0.0
        %v3337 = vmax.f32 %v3268, 0.0
        %v3338 = vmax.f32 %v3271, 0.0
        %v3339 = vmax.f32 %v3274, 0.0
        %3341 = vrot.lane.b32.xlu0 %v3277, 32
        %v3342 = vpop.permute.xlu0 %3341
        %3345 = vrot.lane.b32.xlu0 %v3278, 64
        %v3346 = vpop.permute.xlu0 %3345
        %3349 = vrot.lane.b32.xlu0 %v3279, 96
        %v3350 = vpop.permute.xlu0 %3349
        %3353 = vrot.lane.b32.xlu0 %v3281, 32
        %v3354 = vpop.permute.xlu0 %3353
        %3357 = vrot.lane.b32.xlu0 %v3282, 64
        %v3358 = vpop.permute.xlu0 %3357
        %3361 = vrot.lane.b32.xlu0 %v3283, 96
        %v3362 = vpop.permute.xlu0 %3361
        %3365 = vrot.lane.b32.xlu0 %v3285, 32
        %v3366 = vpop.permute.xlu0 %3365
        %3369 = vrot.lane.b32.xlu0 %v3286, 64
        %v3370 = vpop.permute.xlu0 %3369
        %3373 = vrot.lane.b32.xlu0 %v3287, 96
        %v3374 = vpop.permute.xlu0 %3373
        %3377 = vrot.lane.b32.xlu0 %v3289, 32
        %v3378 = vpop.permute.xlu0 %3377
        %3381 = vrot.lane.b32.xlu0 %v3290, 64
        %v3382 = vpop.permute.xlu0 %3381
        %3385 = vrot.lane.b32.xlu0 %v3291, 96
        %v3386 = vpop.permute.xlu0 %3385
        %v3388 = vsel %vm2665, %v3276, %v3342
        %v3389 = vsel %vm2795, %v3388, %v3346
        %vm3390 = vcmask 785408
        %v3391 = vsel %vm3390, %v3389, %v3350
        %v3392 = vsel %vm2665, %v3280, %v3354
        %v3393 = vsel %vm2795, %v3392, %v3358
        %v3394 = vsel %vm3390, %v3393, %v3362
        %v3395 = vsel %vm2665, %v3284, %v3366
        %v3396 = vsel %vm2795, %v3395, %v3370
        %v3397 = vsel %vm3390, %v3396, %v3374
        %v3398 = vsel %vm2665, %v3288, %v3378
        %v3399 = vsel %vm2795, %v3398, %v3382
        %v3400 = vsel %vm3390, %v3399, %v3386
        %3401 = vst [vmem:[#allocation3] sm:$0xff] %v3391
        %3402 = vst [vmem:[#allocation3 + $0x8] sm:$0xff] %v3394
        %3403 = vst [vmem:[#allocation3 + $0x10] sm:$0xff] %v3397
        %3404 = vst [vmem:[#allocation3 + $0x18] sm:$0xff] %v3400
        %3406 = vrot.lane.b32.xlu0 %v3293, 32
        %v3407 = vpop.permute.xlu0 %3406
        %3410 = vrot.lane.b32.xlu0 %v3294, 64
        %v3411 = vpop.permute.xlu0 %3410
        %3414 = vrot.lane.b32.xlu0 %v3295, 96
        %v3415 = vpop.permute.xlu0 %3414
        %3418 = vrot.lane.b32.xlu0 %v3297, 32
        %v3419 = vpop.permute.xlu0 %3418
        %3422 = vrot.lane.b32.xlu0 %v3298, 64
        %v3423 = vpop.permute.xlu0 %3422
        %3426 = vrot.lane.b32.xlu0 %v3299, 96
        %v3427 = vpop.permute.xlu0 %3426
        %3430 = vrot.lane.b32.xlu0 %v3301, 32
        %v3431 = vpop.permute.xlu0 %3430
        %3434 = vrot.lane.b32.xlu0 %v3302, 64
        %v3435 = vpop.permute.xlu0 %3434
        %3438 = vrot.lane.b32.xlu0 %v3303, 96
        %v3439 = vpop.permute.xlu0 %3438
        %3442 = vrot.lane.b32.xlu0 %v3305, 32
        %v3443 = vpop.permute.xlu0 %3442
        %3446 = vrot.lane.b32.xlu0 %v3306, 64
        %v3447 = vpop.permute.xlu0 %3446
        %3450 = vrot.lane.b32.xlu0 %v3307, 96
        %v3451 = vpop.permute.xlu0 %3450
        %v3453 = vsel %vm2665, %v3292, %v3407
        %v3454 = vsel %vm2795, %v3453, %v3411
        %v3455 = vsel %vm3390, %v3454, %v3415
        %v3456 = vsel %vm2665, %v3296, %v3419
        %v3457 = vsel %vm2795, %v3456, %v3423
        %v3458 = vsel %vm3390, %v3457, %v3427
        %v3459 = vsel %vm2665, %v3300, %v3431
        %v3460 = vsel %vm2795, %v3459, %v3435
        %v3461 = vsel %vm3390, %v3460, %v3439
        %v3462 = vsel %vm2665, %v3304, %v3443
        %v3463 = vsel %vm2795, %v3462, %v3447
        %v3464 = vsel %vm3390, %v3463, %v3451
        %s3465 = scalar_lea.vmem [#allocation3], 32
        %3466 = vst [vmem:[%s3465] sm:$0xff] %v3455
        %3467 = vst [vmem:[%s3465 + $0x8] sm:$0xff] %v3458
        %3468 = vst [vmem:[%s3465 + $0x10] sm:$0xff] %v3461
        %3469 = vst [vmem:[%s3465 + $0x18] sm:$0xff] %v3464
        %3471 = vrot.lane.b32.xlu0 %v3309, 32
        %v3472 = vpop.permute.xlu0 %3471
        %3475 = vrot.lane.b32.xlu0 %v3310, 64
        %v3476 = vpop.permute.xlu0 %3475
        %3479 = vrot.lane.b32.xlu0 %v3311, 96
        %v3480 = vpop.permute.xlu0 %3479
        %3483 = vrot.lane.b32.xlu0 %v3313, 32
        %v3484 = vpop.permute.xlu0 %3483
        %3487 = vrot.lane.b32.xlu0 %v3314, 64
        %v3488 = vpop.permute.xlu0 %3487
        %3491 = vrot.lane.b32.xlu0 %v3315, 96
        %v3492 = vpop.permute.xlu0 %3491
        %3495 = vrot.lane.b32.xlu0 %v3317, 32
        %v3496 = vpop.permute.xlu0 %3495
        %3499 = vrot.lane.b32.xlu0 %v3318, 64
        %v3500 = vpop.permute.xlu0 %3499
        %3503 = vrot.lane.b32.xlu0 %v3319, 96
        %v3504 = vpop.permute.xlu0 %3503
        %3507 = vrot.lane.b32.xlu0 %v3321, 32
        %v3508 = vpop.permute.xlu0 %3507
        %3511 = vrot.lane.b32.xlu0 %v3322, 64
        %v3512 = vpop.permute.xlu0 %3511
        %3515 = vrot.lane.b32.xlu0 %v3323, 96
        %v3516 = vpop.permute.xlu0 %3515
        %v3518 = vsel %vm2665, %v3308, %v3472
        %v3519 = vsel %vm2795, %v3518, %v3476
        %v3520 = vsel %vm3390, %v3519, %v3480
        %v3521 = vsel %vm2665, %v3312, %v3484
        %v3522 = vsel %vm2795, %v3521, %v3488
        %v3523 = vsel %vm3390, %v3522, %v3492
        %v3524 = vsel %vm2665, %v3316, %v3496
        %v3525 = vsel %vm2795, %v3524, %v3500
        %v3526 = vsel %vm3390, %v3525, %v3504
        %v3527 = vsel %vm2665, %v3320, %v3508
        %v3528 = vsel %vm2795, %v3527, %v3512
        %v3529 = vsel %vm3390, %v3528, %v3516
        %s3530 = scalar_lea.vmem [#allocation3], 64
        %3531 = vst [vmem:[%s3530] sm:$0xff] %v3520
        %3532 = vst [vmem:[%s3530 + $0x8] sm:$0xff] %v3523
        %3533 = vst [vmem:[%s3530 + $0x10] sm:$0xff] %v3526
        %3534 = vst [vmem:[%s3530 + $0x18] sm:$0xff] %v3529
        %3536 = vrot.lane.b32.xlu0 %v3325, 32
        %v3537 = vpop.permute.xlu0 %3536
        %3540 = vrot.lane.b32.xlu0 %v3326, 64
        %v3541 = vpop.permute.xlu0 %3540
        %3544 = vrot.lane.b32.xlu0 %v3327, 96
        %v3545 = vpop.permute.xlu0 %3544
        %3548 = vrot.lane.b32.xlu0 %v3329, 32
        %v3549 = vpop.permute.xlu0 %3548
        %3552 = vrot.lane.b32.xlu0 %v3330, 64
        %v3553 = vpop.permute.xlu0 %3552
        %3556 = vrot.lane.b32.xlu0 %v3331, 96
        %v3557 = vpop.permute.xlu0 %3556
        %3560 = vrot.lane.b32.xlu0 %v3333, 32
        %v3561 = vpop.permute.xlu0 %3560
        %3564 = vrot.lane.b32.xlu0 %v3334, 64
        %v3565 = vpop.permute.xlu0 %3564
        %3568 = vrot.lane.b32.xlu0 %v3335, 96
        %v3569 = vpop.permute.xlu0 %3568
        %3572 = vrot.lane.b32.xlu0 %v3337, 32
        %v3573 = vpop.permute.xlu0 %3572
        %3576 = vrot.lane.b32.xlu0 %v3338, 64
        %v3577 = vpop.permute.xlu0 %3576
        %3580 = vrot.lane.b32.xlu0 %v3339, 96
        %v3581 = vpop.permute.xlu0 %3580
        %v3583 = vsel %vm2665, %v3324, %v3537
        %v3584 = vsel %vm2795, %v3583, %v3541
        %v3585 = vsel %vm3390, %v3584, %v3545
        %v3586 = vsel %vm2665, %v3328, %v3549
        %v3587 = vsel %vm2795, %v3586, %v3553
        %v3588 = vsel %vm3390, %v3587, %v3557
        %v3589 = vsel %vm2665, %v3332, %v3561
        %v3590 = vsel %vm2795, %v3589, %v3565
        %v3591 = vsel %vm3390, %v3590, %v3569
        %v3592 = vsel %vm2665, %v3336, %v3573
        %v3593 = vsel %vm2795, %v3592, %v3577
        %v3594 = vsel %vm3390, %v3593, %v3581
        %s3595 = scalar_lea.vmem [#allocation3], 96
        %3596 = vst [vmem:[%s3595] sm:$0xff] %v3585
        %3597 = vst [vmem:[%s3595 + $0x8] sm:$0xff] %v3588
        %3598 = vst [vmem:[%s3595 + $0x10] sm:$0xff] %v3591
        %3599 = vst [vmem:[%s3595 + $0x18] sm:$0xff] %v3594
        %3600 = vst.msk [vmem:[#allocation4] sm:$0xff] %vm2795, 0.0
      $region60: #{sinkhole_forward.1} parent=55 // pred_fallthru
        _
      %v3601 = vld [vmem:[#allocation4] sm:$0xff]
      %s3602 = smul.u32 %s22, 4
      %s3603 = smul.addr %s3602, 8
      %s3604 = scalar_lea.vmem [#allocation3], %s3603
      %v3605 = vld [vmem:[%s3604] sm:$0xff]
      %v3606 = vld [vmem:[%s3604 + $0x8] sm:$0xff]
      %v3607 = vld [vmem:[%s3604 + $0x10] sm:$0xff]
      %v3608 = vld [vmem:[%s3604 + $0x18] sm:$0xff]
      %v3609 = vpack.c.bf16 %v3605, %v3605
      %v3610 = vpack.c.bf16 %v3606, %v3606
      %v3611 = vpack.c.bf16 %v3607, %v3607
      %v3612 = vpack.c.bf16 %v3608, %v3608
      %v3613 = vld [vmem:[%s319] sm:$0xf]
      %v3614 = vld [vmem:[%s319 + $0x4] sm:$0xf]
      %v3615 = vld [vmem:[%s319 + $0x8] sm:$0xf]
      %v3616 = vld [vmem:[%s319 + $0xc] sm:$0xf]
      %v3617 = vld [vmem:[%s319 + $0x10] sm:$0xf]
      %v3618 = vld [vmem:[%s319 + $0x14] sm:$0xf]
      %v3619 = vld [vmem:[%s319 + $0x18] sm:$0xf]
      %v3620 = vld [vmem:[%s319 + $0x1c] sm:$0xf]
      %v3621 = vld [vmem:[%s319 + $0x20] sm:$0xf]
      %v3622 = vld [vmem:[%s319 + $0x24] sm:$0xf]
      %v3623 = vld [vmem:[%s319 + $0x28] sm:$0xf]
      %v3624 = vld [vmem:[%s319 + $0x2c] sm:$0xf]
      %v3625 = vld [vmem:[%s319 + $0x30] sm:$0xf]
      %v3626 = vld [vmem:[%s319 + $0x34] sm:$0xf]
      %v3627 = vld [vmem:[%s319 + $0x38] sm:$0xf]
      %v3628 = vld [vmem:[%s319 + $0x3c] sm:$0xf]
      %v3629 = vld [vmem:[%s319 + $0x40] sm:$0xf]
      %v3630 = vld [vmem:[%s319 + $0x44] sm:$0xf]
      %v3631 = vld [vmem:[%s319 + $0x48] sm:$0xf]
      %v3632 = vld [vmem:[%s319 + $0x4c] sm:$0xf]
      %v3633 = vld [vmem:[%s319 + $0x50] sm:$0xf]
      %v3634 = vld [vmem:[%s319 + $0x54] sm:$0xf]
      %v3635 = vld [vmem:[%s319 + $0x58] sm:$0xf]
      %v3636 = vld [vmem:[%s319 + $0x5c] sm:$0xf]
      %v3637 = vld [vmem:[%s319 + $0x60] sm:$0xf]
      %v3638 = vld [vmem:[%s319 + $0x64] sm:$0xf]
      %v3639 = vld [vmem:[%s319 + $0x68] sm:$0xf]
      %v3640 = vld [vmem:[%s319 + $0x6c] sm:$0xf]
      %v3641 = vld [vmem:[%s319 + $0x70] sm:$0xf]
      %v3642 = vld [vmem:[%s319 + $0x74] sm:$0xf]
      %v3643 = vld [vmem:[%s319 + $0x78] sm:$0xf]
      %v3644 = vld [vmem:[%s319 + $0x7c] sm:$0xf]
      %v3645 = vld [vmem:[%s319 + $0x80] sm:$0xf]
      %v3646 = vld [vmem:[%s319 + $0x84] sm:$0xf]
      %v3647 = vld [vmem:[%s319 + $0x88] sm:$0xf]
      %v3648 = vld [vmem:[%s319 + $0x8c] sm:$0xf]
      %v3649 = vld [vmem:[%s319 + $0x90] sm:$0xf]
      %v3650 = vld [vmem:[%s319 + $0x94] sm:$0xf]
      %v3651 = vld [vmem:[%s319 + $0x98] sm:$0xf]
      %v3652 = vld [vmem:[%s319 + $0x9c] sm:$0xf]
      %v3653 = vld [vmem:[%s319 + $0xa0] sm:$0xf]
      %v3654 = vld [vmem:[%s319 + $0xa4] sm:$0xf]
      %v3655 = vld [vmem:[%s319 + $0xa8] sm:$0xf]
      %v3656 = vld [vmem:[%s319 + $0xac] sm:$0xf]
      %v3657 = vld [vmem:[%s319 + $0xb0] sm:$0xf]
      %v3658 = vld [vmem:[%s319 + $0xb4] sm:$0xf]
      %v3659 = vld [vmem:[%s319 + $0xb8] sm:$0xf]
      %v3660 = vld [vmem:[%s319 + $0xbc] sm:$0xf]
      %v3661 = vld [vmem:[%s319 + $0xc0] sm:$0xf]
      %v3662 = vld [vmem:[%s319 + $0xc4] sm:$0xf]
      %v3663 = vld [vmem:[%s319 + $0xc8] sm:$0xf]
      %v3664 = vld [vmem:[%s319 + $0xcc] sm:$0xf]
      %v3665 = vld [vmem:[%s319 + $0xd0] sm:$0xf]
      %v3666 = vld [vmem:[%s319 + $0xd4] sm:$0xf]
      %v3667 = vld [vmem:[%s319 + $0xd8] sm:$0xf]
      %v3668 = vld [vmem:[%s319 + $0xdc] sm:$0xf]
      %v3669 = vld [vmem:[%s319 + $0xe0] sm:$0xf]
      %v3670 = vld [vmem:[%s319 + $0xe4] sm:$0xf]
      %v3671 = vld [vmem:[%s319 + $0xe8] sm:$0xf]
      %v3672 = vld [vmem:[%s319 + $0xec] sm:$0xf]
      %v3673 = vld [vmem:[%s319 + $0xf0] sm:$0xf]
      %v3674 = vld [vmem:[%s319 + $0xf4] sm:$0xf]
      %v3675 = vld [vmem:[%s319 + $0xf8] sm:$0xf]
      %v3676 = vld [vmem:[%s319 + $0xfc] sm:$0xf]
      %v3741 = vunpack.c.l.b16 %v3613
      %v3742 = vunpack.c.l.b16 %v3614
      %v3743 = vunpack.c.l.b16 %v3615
      %v3744 = vunpack.c.l.b16 %v3616
      %v3745 = vunpack.c.l.b16 %v3617
      %v3746 = vunpack.c.l.b16 %v3618
      %v3747 = vunpack.c.l.b16 %v3619
      %v3748 = vunpack.c.l.b16 %v3620
      %v3749 = vunpack.c.l.b16 %v3621
      %v3750 = vunpack.c.l.b16 %v3622
      %v3751 = vunpack.c.l.b16 %v3623
      %v3752 = vunpack.c.l.b16 %v3624
      %v3753 = vunpack.c.l.b16 %v3625
      %v3754 = vunpack.c.l.b16 %v3626
      %v3755 = vunpack.c.l.b16 %v3627
      %v3756 = vunpack.c.l.b16 %v3628
      %v3757 = vunpack.c.l.b16 %v3629
      %v3758 = vunpack.c.l.b16 %v3630
      %v3759 = vunpack.c.l.b16 %v3631
      %v3760 = vunpack.c.l.b16 %v3632
      %v3761 = vunpack.c.l.b16 %v3633
      %v3762 = vunpack.c.l.b16 %v3634
      %v3763 = vunpack.c.l.b16 %v3635
      %v3764 = vunpack.c.l.b16 %v3636
      %v3765 = vunpack.c.l.b16 %v3637
      %v3766 = vunpack.c.l.b16 %v3638
      %v3767 = vunpack.c.l.b16 %v3639
      %v3768 = vunpack.c.l.b16 %v3640
      %v3769 = vunpack.c.l.b16 %v3641
      %v3770 = vunpack.c.l.b16 %v3642
      %v3771 = vunpack.c.l.b16 %v3643
      %v3772 = vunpack.c.l.b16 %v3644
      %v3773 = vunpack.c.l.b16 %v3645
      %v3774 = vunpack.c.l.b16 %v3646
      %v3775 = vunpack.c.l.b16 %v3647
      %v3776 = vunpack.c.l.b16 %v3648
      %v3777 = vunpack.c.l.b16 %v3649
      %v3778 = vunpack.c.l.b16 %v3650
      %v3779 = vunpack.c.l.b16 %v3651
      %v3780 = vunpack.c.l.b16 %v3652
      %v3781 = vunpack.c.l.b16 %v3653
      %v3782 = vunpack.c.l.b16 %v3654
      %v3783 = vunpack.c.l.b16 %v3655
      %v3784 = vunpack.c.l.b16 %v3656
      %v3785 = vunpack.c.l.b16 %v3657
      %v3786 = vunpack.c.l.b16 %v3658
      %v3787 = vunpack.c.l.b16 %v3659
      %v3788 = vunpack.c.l.b16 %v3660
      %v3789 = vunpack.c.l.b16 %v3661
      %v3790 = vunpack.c.l.b16 %v3662
      %v3791 = vunpack.c.l.b16 %v3663
      %v3792 = vunpack.c.l.b16 %v3664
      %v3793 = vunpack.c.l.b16 %v3665
      %v3794 = vunpack.c.l.b16 %v3666
      %v3795 = vunpack.c.l.b16 %v3667
      %v3796 = vunpack.c.l.b16 %v3668
      %v3797 = vunpack.c.l.b16 %v3669
      %v3798 = vunpack.c.l.b16 %v3670
      %v3799 = vunpack.c.l.b16 %v3671
      %v3800 = vunpack.c.l.b16 %v3672
      %v3801 = vunpack.c.l.b16 %v3673
      %v3802 = vunpack.c.l.b16 %v3674
      %v3803 = vunpack.c.l.b16 %v3675
      %v3804 = vunpack.c.l.b16 %v3676
      %v3805 = vpack.c.b16 %v3742, %v3741
      %v3806 = vpack.c.b16 %v3744, %v3743
      %v3807 = vpack.c.b16 %v3746, %v3745
      %v3808 = vpack.c.b16 %v3748, %v3747
      %v3809 = vpack.c.b16 %v3750, %v3749
      %v3810 = vpack.c.b16 %v3752, %v3751
      %v3811 = vpack.c.b16 %v3754, %v3753
      %v3812 = vpack.c.b16 %v3756, %v3755
      %v3813 = vpack.c.b16 %v3758, %v3757
      %v3814 = vpack.c.b16 %v3760, %v3759
      %v3815 = vpack.c.b16 %v3762, %v3761
      %v3816 = vpack.c.b16 %v3764, %v3763
      %v3817 = vpack.c.b16 %v3766, %v3765
      %v3818 = vpack.c.b16 %v3768, %v3767
      %v3819 = vpack.c.b16 %v3770, %v3769
      %v3820 = vpack.c.b16 %v3772, %v3771
      %v3821 = vpack.c.b16 %v3774, %v3773
      %v3822 = vpack.c.b16 %v3776, %v3775
      %v3823 = vpack.c.b16 %v3778, %v3777
      %v3824 = vpack.c.b16 %v3780, %v3779
      %v3825 = vpack.c.b16 %v3782, %v3781
      %v3826 = vpack.c.b16 %v3784, %v3783
      %v3827 = vpack.c.b16 %v3786, %v3785
      %v3828 = vpack.c.b16 %v3788, %v3787
      %v3829 = vpack.c.b16 %v3790, %v3789
      %v3830 = vpack.c.b16 %v3792, %v3791
      %v3831 = vpack.c.b16 %v3794, %v3793
      %v3832 = vpack.c.b16 %v3796, %v3795
      %v3833 = vpack.c.b16 %v3798, %v3797
      %v3834 = vpack.c.b16 %v3800, %v3799
      %v3835 = vpack.c.b16 %v3802, %v3801
      %v3836 = vpack.c.b16 %v3804, %v3803
      %3869 = vmatpush.bf16.msra.mxu0 %v3812
      %3870 = vmatpush.bf16.msra.mxu0 %v3811
      %3871 = vmatpush.bf16.msra.mxu0 %v3810
      %3872 = vmatpush.bf16.msra.mxu0 %v3809
      %3873 = vmatpush.bf16.msra.mxu0 %v3808
      %3874 = vmatpush.bf16.msra.mxu0 %v3807
      %3875 = vmatpush.bf16.msra.mxu0 %v3806
      %3876 = vmatpush.bf16.msra.mxu0 %v3805
      %3877 = vmatmul.bf16.gmra.mxu0 %v3609
      %v3878 = vpop.f32.mrf.mxu0
      %v3879 = vadd.f32 0.0, %v3878
      %v3880 = vpop.f32.mrf.mxu0
      %3881 = vdwg.mxu0
      %3882 = vmatpush.bf16.msra.mxu0 %v3820
      %3883 = vmatpush.bf16.msra.mxu0 %v3819
      %3884 = vmatpush.bf16.msra.mxu0 %v3818
      %3885 = vmatpush.bf16.msra.mxu0 %v3817
      %3886 = vmatpush.bf16.msra.mxu0 %v3816
      %3887 = vmatpush.bf16.msra.mxu0 %v3815
      %3888 = vmatpush.bf16.msra.mxu0 %v3814
      %3889 = vmatpush.bf16.msra.mxu0 %v3813
      %3890 = vmatmul.bf16.gmra.mxu0 %v3610
      %v3891 = vpop.f32.mrf.mxu0
      %v3892 = vadd.f32 %v3879, %v3891
      %v3893 = vpop.f32.mrf.mxu0
      %3894 = vdwg.mxu0
      %3895 = vmatpush.bf16.msra.mxu0 %v3828
      %3896 = vmatpush.bf16.msra.mxu0 %v3827
      %3897 = vmatpush.bf16.msra.mxu0 %v3826
      %3898 = vmatpush.bf16.msra.mxu0 %v3825
      %3899 = vmatpush.bf16.msra.mxu0 %v3824
      %3900 = vmatpush.bf16.msra.mxu0 %v3823
      %3901 = vmatpush.bf16.msra.mxu0 %v3822
      %3902 = vmatpush.bf16.msra.mxu0 %v3821
      %3903 = vmatmul.bf16.gmra.mxu0 %v3611
      %v3904 = vpop.f32.mrf.mxu0
      %v3905 = vadd.f32 %v3892, %v3904
      %v3906 = vpop.f32.mrf.mxu0
      %3907 = vdwg.mxu0
      %3908 = vmatpush.bf16.msra.mxu0 %v3836
      %3909 = vmatpush.bf16.msra.mxu0 %v3835
      %3910 = vmatpush.bf16.msra.mxu0 %v3834
      %3911 = vmatpush.bf16.msra.mxu0 %v3833
      %3912 = vmatpush.bf16.msra.mxu0 %v3832
      %3913 = vmatpush.bf16.msra.mxu0 %v3831
      %3914 = vmatpush.bf16.msra.mxu0 %v3830
      %3915 = vmatpush.bf16.msra.mxu0 %v3829
      %3916 = vmatmul.bf16.gmra.mxu0 %v3612
      %v3917 = vpop.f32.mrf.mxu0
      %v3918 = vadd.f32 %v3905, %v3917
      %v3919 = vpop.f32.mrf.mxu0
      %3920 = vdwg.mxu0
      %v3921 = vadd.f32 %v3601, %v3918
      %vm3922 = vcmask 523264
      %3923 = vst.msk [vmem:[#allocation4] sm:$0xff] %vm3922, %v3921
      %p3924 = scmp.eq.s32.totalorder %s22, 3
      // Predicated region
      $region61: #{sinkhole_forward.1} parent=55 // pred_check
        %p3925 = pneg %p3924
      $region62: #{sinkhole_forward.1} parent=55 // pred_check_branch
        %3927 = sbr.rel (%p3925) target = $region64
      $region63: #{sinkhole_forward.1} parent=55 // pred_region
        %v3928 = vld [vmem:[#allocation4] sm:$0xff]
        %v3929 = vld [vmem:[%s6] sm:$0x1]
        %v3931 = vperm.slane %v3929, 0
        %v3933 = vadd.f32 %v3928, %v3931
        %v3934 = vmax.f32 %v3933, 0.0
        %v3935 = vld [vmem:[%s7] sm:$0xff]
        %v3936 = vld [vmem:[%s7 + $0x8] sm:$0xff]
        %v3937 = vld [vmem:[%s7 + $0x10] sm:$0xff]
        %v3938 = vld [vmem:[%s7 + $0x18] sm:$0xff]
        %v3939 = vld [vmem:[%s7 + $0x20] sm:$0xff]
        %v3940 = vld [vmem:[%s7 + $0x28] sm:$0xff]
        %v3941 = vld [vmem:[%s7 + $0x30] sm:$0xff]
        %v3942 = vld [vmem:[%s7 + $0x38] sm:$0xff]
        %v3943 = vld [vmem:[#allocation5] sm:$0x1]
        %v3945 = vperm.slane %v3943, 0
        %v3948 = vsel %vm3922, %v3934, 0
        %3950 = vmatpush.msra.mxu0 0.0
        %3951 = vmatpush.msra.mxu0 0.0
        %3952 = vmatpush.msra.mxu0 0.0
        %3953 = vmatpush.msra.mxu0 0.0
        %3954 = vmatpush.msra.mxu0 0.0
        %3955 = vmatpush.msra.mxu0 0.0
        %3956 = vmatpush.msra.mxu0 0.0
        %3957 = vmatpush.msra.mxu0 0.0
        %3958 = vmatpush.msra.mxu0 %v3942
        %3959 = vmatpush.msra.mxu0 %v3941
        %3960 = vmatpush.msra.mxu0 %v3940
        %3961 = vmatpush.msra.mxu0 %v3939
        %3962 = vmatpush.msra.mxu0 %v3938
        %3963 = vmatpush.msra.mxu0 %v3937
        %3964 = vmatpush.msra.mxu0 %v3936
        %3965 = vmatpush.msra.mxu0 %v3935
        %3966 = vmatmul.f32.gmra.mxu0 %v3948
        %v3967 = vpop.f32.mrf.mxu0
        %v3968 = vadd.f32 %v3945, %v3967
        %3969 = vdwg.mxu0
        %v3970 = vsub.f32 0.0, %v3968
        %v3971 = vmul.f32 %v3970, 1.442695
        %v3972 = vpow.pop %v3971
        %v3973 = vadd.f32 %v3972, 1.0
        %v3974 = vrcp.pop %v3973
        %v3975 = vmul.f32 %v3973, %v3974
        %v3976 = vsub.f32 1.0, %v3975
        %v3977 = vmul.f32 %v3974, %v3976
        %v3978 = vadd.f32 %v3974, %v3977
        %vm3979 = vweird.f32 %v3973
        %vm3980 = vweird.f32 %v3974
        %vm3981 = vmor %vm3979, %vm3980
        %v3982 = vsel %vm3981, %v3974, %v3978
        %v3983 = vand.u32 2147483647, %v3973
        %vm3984 = vcmp.eq.f32.partialorder %v3983, 8.507059e+37
        %v3985 = vand.u32 %v3973, 2147483648
        %v3986 = vor.u32 1.1754944e-38, %v3985
        %v3987 = vsel %vm3984, %v3986, %v3982
        %v3988 = vmul.f32 1.0, %v3987
        %vm3989 = vcmask 7168
        %3990 = vst.msk [vmem:[%s9] sm:$0xff] %vm3989, %v3988
      $region64: #{sinkhole_forward.1} parent=55 // pred_fallthru
        _
      // Predicated region
      $region65: #{sinkhole_forward.1} parent=55 // pred_check
        %p3991 = pneg %p229
      $region66: #{sinkhole_forward.1} parent=55 // pred_check_branch
        %3993 = sbr.rel (%p3991) target = $region68
      $region67: #{sinkhole_forward.1} parent=55 // pred_region
        _
      $region68: #{sinkhole_forward.1} parent=55 // pred_fallthru
        _
      // Predicated region
      $region69: #{sinkhole_forward.1} parent=55 // pred_check
        %p3994 = pneg %p229
      $region70: #{sinkhole_forward.1} parent=55 // pred_check_branch
        %3996 = sbr.rel (%p3994) target = $region72
      $region71: #{sinkhole_forward.1} parent=55 // pred_region
        _
      $region72: #{sinkhole_forward.1} parent=55 // pred_fallthru
        _
    $region56: #{sinkhole_forward.1} parent=5 // pred_fallthru
      _
    %p3997 = scmp.le.s32.totalorder 2, %s17
    // Predicated region
    $region73: #{sinkhole_forward.1} parent=5 // pred_check
      %p3998 = pneg %p3997
    $region74: #{sinkhole_forward.1} parent=5 // pred_check_branch
      %4000 = sbr.rel (%p3998) target = $region76
    $region75: #{sinkhole_forward.1} parent=5 // pred_region
      %s4001 = ssub.s32 %s17, 2
    $region76: #{sinkhole_forward.1} parent=5 // pred_fallthru
      _
  $region6: #{sinkhole_forward.1} parent=0 // loop_footer
    %s21 = sadd.s32 1, %s17
  $region7: #{sinkhole_forward.1} parent=0 // loop_footer_branch
    %16 = sbr.rel target = $region3
  $region8: #{sinkhole_forward.1} parent=0 // loop_exit
    _

</llo_original>
